<compile_context>
chip_gen: v5e
topology: v5e:2x2
jax: 0.10.0
libtpu: 0.0.40
codegen_flags: <defaults>
</compile_context>

<pallas_src>
import functools
import math

import jax
import jax.numpy as jnp
from jax import lax
from jax.experimental import pallas as pl
from jax.experimental.pallas import tpu as pltpu

HIDDEN = 512
OUT_C = 3
OUT_PAD = 128     # lane-dense padded output channel count


def tem_kernel(x_ref, w1_ref, b1_ref, w2_ref, b2_ref, w3_ref, b3_ref,
               out_ref, *, seq_len):
    """One row-block (block_n whole samples, M = block_n * L rows) per step.

    x_ref  : (M, 3*C_in)   bf16  im2col'd input rows (tap0 | tap1 | tap2 chans)
    w1_ref : (3*C_in, 512) bf16  conv1 taps stacked along the contraction axis
    w2_ref : (3, 512, 512) bf16  conv2 taps as matmul weights
    w3_ref : (512, 128)    bf16  1x1 conv weights (0.1-scaled, 128-lane padded)
    b*_ref : (1, C)        f32   biases (b3 0.1-scaled, 128-lane padded)
    out_ref: (M, 128)      bf16  sigmoid(logits); cols >= 3 are dummies
    """
    M = out_ref.shape[0]

    # ---- conv1 (k=3, pad=1): single K=3*C_in MXU matmul (im2col in wrapper) --
    h1 = jnp.dot(x_ref[...], w1_ref[...], preferred_element_type=jnp.float32)
    h1 = jnp.maximum(h1 + b1_ref[...], 0.0)                    # (M, 512) f32

    # ---- conv2 (k=3, pad=1): 3 K=512 matmuls on shifted copies of h1 --------
    # Shifts via XLU roll (no concat/slice VMEM copies).  The rolled wrap rows
    # land exactly on sample boundaries and are zeroed by the masks below, so
    # semantics match zero padding at each sample's ends.
    row = lax.broadcasted_iota(jnp.int32, (M, 1), 0)
    pos = row % seq_len
    h_prev = jnp.where(pos == 0, 0.0,
                       pltpu.roll(h1, 1, 0)).astype(jnp.bfloat16)
    h_next = jnp.where(pos == seq_len - 1, 0.0,
                       pltpu.roll(h1, M - 1, 0)).astype(jnp.bfloat16)
    h1b = h1.astype(jnp.bfloat16)

    acc2 = jnp.dot(h_prev, w2_ref[0], preferred_element_type=jnp.float32)
    acc2 = acc2 + jnp.dot(h1b, w2_ref[1], preferred_element_type=jnp.float32)
    acc2 = acc2 + jnp.dot(h_next, w2_ref[2], preferred_element_type=jnp.float32)
    h2 = jnp.maximum(acc2 + b2_ref[...], 0.0).astype(jnp.bfloat16)

    # ---- conv3 (k=1; 0.1 scale pre-folded into w3/b3) + sigmoid --------------
    logits = jnp.dot(h2, w3_ref[...],
                     preferred_element_type=jnp.float32) + b3_ref[...]
    out_ref[...] = jax.nn.sigmoid(logits).astype(out_ref.dtype)  # lane-dense bf16


def _vmem_limit_bytes():
    """Generation-aware VMEM request: ~100 MiB on 128-MiB chips, <=48 MiB on v7x."""
    cap = None
    try:
        cap = getattr(pltpu.get_tpu_info(), "vmem_capacity_bytes", None)
    except Exception:
        cap = None
    if not cap or cap < (32 << 20):
        return 48 << 20                       # conservative default (fits v7x)
    if cap >= (128 << 20):
        return 100 << 20                      # v5e / v6e: 128 MiB physical
    return min(48 << 20, (cap * 3) // 4)      # v7x: 64 MiB physical


def _block_plan(n, l, c_in, vmem_budget):
    """Pick (block_n, n_pad): whole-sample row blocks of tm = block_n*l rows.

    Blocks target ~2048 rows (MXU-filling) bounded by the VMEM budget; row
    counts are kept multiples of 16 (bf16 sublane packing) by padding the batch
    with dummy zero samples instead of collapsing to a single giant step.
    """
    align = 16 // math.gcd(l, 16)             # samples per block for 16-row alignment
    bytes_per_row = (2 * 2 * 3 * c_in         # x block, bf16, double-buffered
                     + 2 * HIDDEN * 4         # h1 f32 + acc2 f32
                     + 4 * HIDDEN * 2         # h_prev / h1b / h_next / h2 bf16
                     + 2 * OUT_PAD * 2)       # out block, bf16, double-buffered
    headroom = 6 << 20                        # weights + compiler scratch
    rows_cap = max(align * l, (vmem_budget - headroom) // max(bytes_per_row, 1))
    rows_target = max(align * l, min(2048, rows_cap))
    block_n = max(align, (rows_target // l) // align * align)

    n_pad = -(-n // align) * align
    block_n = min(block_n, n_pad)
    # Prefer >= 2 grid steps (v7x megacore) when each half still fills the MXU.
    if (n_pad // block_n < 2 and block_n % (2 * align) == 0
            and (block_n // 2) * l >= 1024):
        block_n //= 2
    n_pad = -(-n // block_n) * block_n
    return block_n, n_pad


def tem_forward(x_ncl, params):
    """x_ncl: (N, C_in, L) in PyTorch NCL layout. Returns (N, 3, L) f32."""
    w1, b1, w2, b2, w3, b3 = params           # torch Conv1d weight shapes
    N, C_in, L = x_ncl.shape

    vmem_limit = _vmem_limit_bytes()
    block_n, n_pad = _block_plan(N, L, C_in, vmem_limit)
    tm = block_n * L
    grid = (n_pad // block_n,)

    # ---- glue: pad batch, channel-last, im2col for conv1, bf16 operands ------
    x_f = x_ncl.astype(jnp.float32)
    if n_pad != N:
        x_f = jnp.pad(x_f, ((0, n_pad - N), (0, 0), (0, 0)))   # dummy zero samples
    x_nlc = jnp.transpose(x_f, (0, 2, 1))                      # (n_pad, L, C)
    x_pad = jnp.pad(x_nlc, ((0, 0), (1, 1), (0, 0)))           # (n_pad, L+2, C)
    x_cat = jnp.concatenate(
        [x_pad[:, 0:L, :], x_pad[:, 1:L + 1, :], x_pad[:, 2:L + 2, :]],
        axis=-1)                                               # (n_pad, L, 3C)
    x2d = x_cat.reshape(n_pad * L, 3 * C_in).astype(jnp.bfloat16)

    # torch (C_out, C_in, K) -> matmul-friendly layouts
    w1_cat = jnp.transpose(w1, (2, 1, 0)).reshape(3 * C_in, HIDDEN)
    w1_cat = w1_cat.astype(jnp.bfloat16)                       # (3C, 512)
    w2k = jnp.transpose(w2, (2, 1, 0)).astype(jnp.bfloat16)    # (3, 512, 512)
    w3s = 0.1 * jnp.transpose(w3[:, :, 0], (1, 0))             # fold 0.1 scale
    w3p = jnp.zeros((HIDDEN, OUT_PAD), jnp.float32).at[:, :OUT_C].set(w3s)
    w3p = w3p.astype(jnp.bfloat16)                             # (512, 128)
    b1r = b1.reshape(1, HIDDEN).astype(jnp.float32)
    b2r = b2.reshape(1, HIDDEN).astype(jnp.float32)
    b3p = jnp.zeros((1, OUT_PAD), jnp.float32).at[0, :OUT_C].set(0.1 * b3)

    out2d = pl.pallas_call(
        functools.partial(tem_kernel, seq_len=L),
        out_shape=jax.ShapeDtypeStruct((n_pad * L, OUT_PAD), jnp.bfloat16),
        grid_spec=pltpu.PrefetchScalarGridSpec(
            num_scalar_prefetch=0,
            grid=grid,
            in_specs=[
                pl.BlockSpec((tm, 3 * C_in), lambda i: (i, 0)),
                pl.BlockSpec((3 * C_in, HIDDEN), lambda i: (0, 0)),
                pl.BlockSpec((1, HIDDEN), lambda i: (0, 0)),
                pl.BlockSpec((3, HIDDEN, HIDDEN), lambda i: (0, 0, 0)),
                pl.BlockSpec((1, HIDDEN), lambda i: (0, 0)),
                pl.BlockSpec((HIDDEN, OUT_PAD), lambda i: (0, 0)),
                pl.BlockSpec((1, OUT_PAD), lambda i: (0, 0)),
            ],
            out_specs=pl.BlockSpec((tm, OUT_PAD), lambda i: (i, 0)),
        ),
        compiler_params=pltpu.CompilerParams(
            dimension_semantics=("parallel",),
            vmem_limit_bytes=vmem_limit),
    )(x2d, w1_cat, b1r, w2k, b2r, w3p, b3p)

    out_nlc = out2d.reshape(n_pad, L, OUT_PAD)[:N, :, :OUT_C]  # drop pads
    return jnp.transpose(out_nlc, (0, 2, 1)).astype(jnp.float32)  # (N, 3, L)


def tem_reference(x_ncl, params):
    """Pure-JAX f32 reference mirroring the PyTorch forward (NCL layout)."""
    w1, b1, w2, b2, w3, b3 = params
    dn = ('NCH', 'OIH', 'NCH')
    h = lax.conv_general_dilated(x_ncl, w1, (1,), [(1, 1)],
                                 dimension_numbers=dn)
    h = jax.nn.relu(h + b1[None, :, None])
    h = lax.conv_general_dilated(h, w2, (1,), [(1, 1)],
                                 dimension_numbers=dn)
    h = jax.nn.relu(h + b2[None, :, None])
    h = lax.conv_general_dilated(h, w3, (1,), [(0, 0)],
                                 dimension_numbers=dn)
    return jax.nn.sigmoid(0.1 * (h + b3[None, :, None]))


if __name__ == "__main__":
    key = jax.random.PRNGKey(0)
    N, C_in, L = 2, 32, 16        # small shapes: batch=2, in_features=32, seq=16
    ks = jax.random.split(key, 7)

    def init(k, shape, fan_in):
        bound = 1.0 / float(fan_in) ** 0.5
        return jax.random.uniform(k, shape, jnp.float32, -bound, bound)

    x = jax.random.normal(ks[0], (N, C_in, L), jnp.float32)
    # deterministic synthetic parameters (PyTorch Conv1d weight shapes)
    w1 = init(ks[1], (HIDDEN, C_in, 3), C_in * 3)
    b1 = init(ks[2], (HIDDEN,), C_in * 3)
    w2 = init(ks[3], (HIDDEN, HIDDEN, 3), HIDDEN * 3)
    b2 = init(ks[4], (HIDDEN,), HIDDEN * 3)
    w3 = init(ks[5], (OUT_C, HIDDEN, 1), HIDDEN)
    b3 = init(ks[6], (OUT_C,), HIDDEN)
    params = (w1, b1, w2, b2, w3, b3)

    out = tem_forward(x, params)
    jax.block_until_ready(out)

    ref = tem_reference(x, params)
    assert out.shape == (N, OUT_C, L), out.shape
    # bf16 MXU operands / bf16 output slab (f32 accumulation) -> loose tolerance.
    assert jnp.allclose(out, ref, atol=2e-2, rtol=2e-2), \
        float(jnp.max(jnp.abs(out - ref)))
    print("KERNEL_OK")
</pallas_src>

<mosaic_0001>
module attributes {stable_mosaic.version = 11 : i64} {
  func.func @tem_kernel(%arg0: i32, %arg1: memref<32x96xbf16, #tpu.memory_space<vmem>>, %arg2: memref<96x512xbf16, #tpu.memory_space<vmem>>, %arg3: memref<1x512xf32, #tpu.memory_space<vmem>>, %arg4: memref<3x512x512xbf16, #tpu.memory_space<vmem>>, %arg5: memref<1x512xf32, #tpu.memory_space<vmem>>, %arg6: memref<512x128xbf16, #tpu.memory_space<vmem>>, %arg7: memref<1x128xf32, #tpu.memory_space<vmem>>, %arg8: memref<32x128xbf16, #tpu.memory_space<vmem>>) attributes {dimension_semantics = [#tpu.dimension_semantics<parallel>], iteration_bounds = array<i64: 1>, scalar_prefetch = 0 : i64, scratch_operands = 0 : i64, tpu.core_type = #tpu.core_type<tc>, window_params = [{transform_indices = @transform_0, window_bounds = array<i64: 32, 96>}, {pipeline_mode = #tpu.pipeline_mode<synchronous>, transform_indices = @transform_1, window_bounds = array<i64: 96, 512>}, {pipeline_mode = #tpu.pipeline_mode<synchronous>, transform_indices = @transform_2, window_bounds = array<i64: 1, 512>}, {pipeline_mode = #tpu.pipeline_mode<synchronous>, transform_indices = @transform_3, window_bounds = array<i64: 3, 512, 512>}, {pipeline_mode = #tpu.pipeline_mode<synchronous>, transform_indices = @transform_4, window_bounds = array<i64: 1, 512>}, {pipeline_mode = #tpu.pipeline_mode<synchronous>, transform_indices = @transform_5, window_bounds = array<i64: 512, 128>}, {pipeline_mode = #tpu.pipeline_mode<synchronous>, transform_indices = @transform_6, window_bounds = array<i64: 1, 128>}, {transform_indices = @transform_7, window_bounds = array<i64: 32, 128>}]} {
    %c0 = arith.constant 0 : index
    %c0_0 = arith.constant 0 : index
    %0 = vector.load %arg1[%c0, %c0_0] : memref<32x96xbf16, #tpu.memory_space<vmem>>, vector<32x96xbf16>
    %c0_1 = arith.constant 0 : index
    %c0_2 = arith.constant 0 : index
    %1 = vector.load %arg2[%c0_1, %c0_2] : memref<96x512xbf16, #tpu.memory_space<vmem>>, vector<96x512xbf16>
    %cst = arith.constant dense<0.000000e+00> : vector<32x512xf32>
    %2 = tpu.matmul %0, %1, %cst {dimension_numbers = #tpu.dot_dimension_numbers<[1], [0], [0], [1], [0, 0, 1, 1], [], []>} : vector<32x96xbf16>, vector<96x512xbf16>, vector<32x512xf32> -> vector<32x512xf32>
    %c0_3 = arith.constant 0 : index
    %c0_4 = arith.constant 0 : index
    %3 = vector.load %arg3[%c0_3, %c0_4] : memref<1x512xf32, #tpu.memory_space<vmem>>, vector<1x512xf32>
    %4 = vector.broadcast %3 : vector<1x512xf32> to vector<32x512xf32>
    %5 = arith.addf %2, %4 : vector<32x512xf32>
    %cst_5 = arith.constant 0.000000e+00 : f32
    %6 = vector.broadcast %cst_5 : f32 to vector<32x512xf32>
    %7 = arith.maximumf %5, %6 : vector<32x512xf32>
    %8 = tpu.iota {dimensions = array<i32: 0>} : vector<32x1xi32>
    %c16_i32 = arith.constant 16 : i32
    %c0_i32 = arith.constant 0 : i32
    %9 = arith.cmpi eq, %c16_i32, %c0_i32 : i32
    %c1_i32 = arith.constant 1 : i32
    %10 = arith.select %9, %c1_i32, %c16_i32 : i32
    %11 = vector.broadcast %10 : i32 to vector<32x1xi32>
    %12 = arith.remsi %8, %11 : vector<32x1xi32>
    %c0_i32_6 = arith.constant 0 : i32
    %13 = vector.broadcast %c0_i32_6 : i32 to vector<32x1xi32>
    %14 = arith.cmpi ne, %12, %13 : vector<32x1xi32>
    %c0_i32_7 = arith.constant 0 : i32
    %15 = vector.broadcast %c0_i32_7 : i32 to vector<32x1xi32>
    %16 = arith.cmpi slt, %12, %15 : vector<32x1xi32>
    %c0_i32_8 = arith.constant 0 : i32
    %17 = arith.cmpi slt, %10, %c0_i32_8 : i32
    %18 = vector.broadcast %17 : i1 to vector<32x1xi1>
    %19 = vector.broadcast %18 : vector<32x1xi1> to vector<32x1xi1>
    %20 = arith.xori %16, %19 : vector<32x1xi1>
    %21 = arith.andi %20, %14 : vector<32x1xi1>
    %22 = vector.broadcast %10 : i32 to vector<32x1xi32>
    %23 = arith.addi %12, %22 : vector<32x1xi32>
    %24 = arith.select %21, %23, %12 : vector<32x1xi1>, vector<32x1xi32>
    %c0_i32_9 = arith.constant 0 : i32
    %25 = vector.broadcast %c0_i32_9 : i32 to vector<32x1xi32>
    %26 = arith.cmpi eq, %24, %25 : vector<32x1xi32>
    %c1_i32_10 = arith.constant 1 : i32
    %27 = tpu.dynamic_rotate %7 by %c1_i32_10 dim 0 : vector<32x512xf32>, i32 -> vector<32x512xf32>
    %cst_11 = arith.constant 0.000000e+00 : f32
    %28 = vector.shape_cast %26 : vector<32x1xi1> to vector<32x1xi1>
    %29 = vector.broadcast %28 : vector<32x1xi1> to vector<32x512xi1>
    %30 = vector.broadcast %cst_11 : f32 to vector<32x512xf32>
    %31 = arith.select %29, %30, %27 : vector<32x512xi1>, vector<32x512xf32>
    %32 = arith.truncf %31 : vector<32x512xf32> to vector<32x512xbf16>
    %c15_i32 = arith.constant 15 : i32
    %33 = vector.broadcast %c15_i32 : i32 to vector<32x1xi32>
    %34 = arith.cmpi eq, %24, %33 : vector<32x1xi32>
    %c31_i32 = arith.constant 31 : i32
    %35 = tpu.dynamic_rotate %7 by %c31_i32 dim 0 : vector<32x512xf32>, i32 -> vector<32x512xf32>
    %cst_12 = arith.constant 0.000000e+00 : f32
    %36 = vector.shape_cast %34 : vector<32x1xi1> to vector<32x1xi1>
    %37 = vector.broadcast %36 : vector<32x1xi1> to vector<32x512xi1>
    %38 = vector.broadcast %cst_12 : f32 to vector<32x512xf32>
    %39 = arith.select %37, %38, %35 : vector<32x512xi1>, vector<32x512xf32>
    %40 = arith.truncf %39 : vector<32x512xf32> to vector<32x512xbf16>
    %41 = arith.truncf %7 : vector<32x512xf32> to vector<32x512xbf16>
    %c0_13 = arith.constant 0 : index
    %c0_14 = arith.constant 0 : index
    %c0_15 = arith.constant 0 : index
    %42 = vector.load %arg4[%c0_13, %c0_14, %c0_15] : memref<3x512x512xbf16, #tpu.memory_space<vmem>>, vector<1x512x512xbf16>
    %43 = vector.shape_cast %42 : vector<1x512x512xbf16> to vector<512x512xbf16>
    %cst_16 = arith.constant dense<0.000000e+00> : vector<32x512xf32>
    %44 = tpu.matmul %32, %43, %cst_16 {dimension_numbers = #tpu.dot_dimension_numbers<[1], [0], [0], [1], [0, 0, 1, 1], [], []>} : vector<32x512xbf16>, vector<512x512xbf16>, vector<32x512xf32> -> vector<32x512xf32>
    %c1 = arith.constant 1 : index
    %c0_17 = arith.constant 0 : index
    %c0_18 = arith.constant 0 : index
    %45 = vector.load %arg4[%c1, %c0_17, %c0_18] : memref<3x512x512xbf16, #tpu.memory_space<vmem>>, vector<1x512x512xbf16>
    %46 = vector.shape_cast %45 : vector<1x512x512xbf16> to vector<512x512xbf16>
    %cst_19 = arith.constant dense<0.000000e+00> : vector<32x512xf32>
    %47 = tpu.matmul %41, %46, %cst_19 {dimension_numbers = #tpu.dot_dimension_numbers<[1], [0], [0], [1], [0, 0, 1, 1], [], []>} : vector<32x512xbf16>, vector<512x512xbf16>, vector<32x512xf32> -> vector<32x512xf32>
    %48 = arith.addf %44, %47 : vector<32x512xf32>
    %c2 = arith.constant 2 : index
    %c0_20 = arith.constant 0 : index
    %c0_21 = arith.constant 0 : index
    %49 = vector.load %arg4[%c2, %c0_20, %c0_21] : memref<3x512x512xbf16, #tpu.memory_space<vmem>>, vector<1x512x512xbf16>
    %50 = vector.shape_cast %49 : vector<1x512x512xbf16> to vector<512x512xbf16>
    %cst_22 = arith.constant dense<0.000000e+00> : vector<32x512xf32>
    %51 = tpu.matmul %40, %50, %cst_22 {dimension_numbers = #tpu.dot_dimension_numbers<[1], [0], [0], [1], [0, 0, 1, 1], [], []>} : vector<32x512xbf16>, vector<512x512xbf16>, vector<32x512xf32> -> vector<32x512xf32>
    %52 = arith.addf %48, %51 : vector<32x512xf32>
    %c0_23 = arith.constant 0 : index
    %c0_24 = arith.constant 0 : index
    %53 = vector.load %arg5[%c0_23, %c0_24] : memref<1x512xf32, #tpu.memory_space<vmem>>, vector<1x512xf32>
    %54 = vector.broadcast %53 : vector<1x512xf32> to vector<32x512xf32>
    %55 = arith.addf %52, %54 : vector<32x512xf32>
    %cst_25 = arith.constant 0.000000e+00 : f32
    %56 = vector.broadcast %cst_25 : f32 to vector<32x512xf32>
    %57 = arith.maximumf %55, %56 : vector<32x512xf32>
    %58 = arith.truncf %57 : vector<32x512xf32> to vector<32x512xbf16>
    %c0_26 = arith.constant 0 : index
    %c0_27 = arith.constant 0 : index
    %59 = vector.load %arg6[%c0_26, %c0_27] : memref<512x128xbf16, #tpu.memory_space<vmem>>, vector<512x128xbf16>
    %cst_28 = arith.constant dense<0.000000e+00> : vector<32x128xf32>
    %60 = tpu.matmul %58, %59, %cst_28 {dimension_numbers = #tpu.dot_dimension_numbers<[1], [0], [0], [1], [0, 0, 1, 1], [], []>} : vector<32x512xbf16>, vector<512x128xbf16>, vector<32x128xf32> -> vector<32x128xf32>
    %c0_29 = arith.constant 0 : index
    %c0_30 = arith.constant 0 : index
    %61 = vector.load %arg7[%c0_29, %c0_30] : memref<1x128xf32, #tpu.memory_space<vmem>>, vector<1x128xf32>
    %62 = vector.broadcast %61 : vector<1x128xf32> to vector<32x128xf32>
    %63 = arith.addf %60, %62 : vector<32x128xf32>
    %64 = arith.negf %63 : vector<32x128xf32>
    %65 = math.exp %64 : vector<32x128xf32>
    %cst_31 = arith.constant 1.000000e+00 : f32
    %66 = vector.broadcast %cst_31 : f32 to vector<32x128xf32>
    %67 = arith.addf %66, %65 : vector<32x128xf32>
    %68 = arith.divf %66, %67 : vector<32x128xf32>
    %69 = arith.truncf %68 : vector<32x128xf32> to vector<32x128xbf16>
    %c0_32 = arith.constant 0 : index
    %c0_33 = arith.constant 0 : index
    %70 = vector.load %arg8[%c0_32, %c0_33] : memref<32x128xbf16, #tpu.memory_space<vmem>>, vector<32x128xbf16>
    tpu.vector_store %arg8[%c0_32, %c0_33], %69 {strides = array<i32>} : memref<32x128xbf16, #tpu.memory_space<vmem>>, vector<32x128xbf16>,
    return
  }
  func.func @transform_0(%arg0: i32) -> (i32, i32) {
    %c0_i32 = arith.constant 0 : i32
    %c0_i32_0 = arith.constant 0 : i32
    return %arg0, %c0_i32 : i32, i32
  }
  func.func @transform_1(%arg0: i32) -> (i32, i32) {
    %c0_i32 = arith.constant 0 : i32
    %c0_i32_0 = arith.constant 0 : i32
    %c0_i32_1 = arith.constant 0 : i32
    return %c0_i32, %c0_i32_0 : i32, i32
  }
  func.func @transform_2(%arg0: i32) -> (i32, i32) {
    %c0_i32 = arith.constant 0 : i32
    %c0_i32_0 = arith.constant 0 : i32
    %c0_i32_1 = arith.constant 0 : i32
    return %c0_i32, %c0_i32_0 : i32, i32
  }
  func.func @transform_3(%arg0: i32) -> (i32, i32, i32) {
    %c0_i32 = arith.constant 0 : i32
    %c0_i32_0 = arith.constant 0 : i32
    %c0_i32_1 = arith.constant 0 : i32
    %c0_i32_2 = arith.constant 0 : i32
    return %c0_i32, %c0_i32_0, %c0_i32_1 : i32, i32, i32
  }
  func.func @transform_4(%arg0: i32) -> (i32, i32) {
    %c0_i32 = arith.constant 0 : i32
    %c0_i32_0 = arith.constant 0 : i32
    %c0_i32_1 = arith.constant 0 : i32
    return %c0_i32, %c0_i32_0 : i32, i32
  }
  func.func @transform_5(%arg0: i32) -> (i32, i32) {
    %c0_i32 = arith.constant 0 : i32
    %c0_i32_0 = arith.constant 0 : i32
    %c0_i32_1 = arith.constant 0 : i32
    return %c0_i32, %c0_i32_0 : i32, i32
  }
  func.func @transform_6(%arg0: i32) -> (i32, i32) {
    %c0_i32 = arith.constant 0 : i32
    %c0_i32_0 = arith.constant 0 : i32
    %c0_i32_1 = arith.constant 0 : i32
    return %c0_i32, %c0_i32_0 : i32, i32
  }
  func.func @transform_7(%arg0: i32) -> (i32, i32) {
    %c0_i32 = arith.constant 0 : i32
    %c0_i32_0 = arith.constant 0 : i32
    return %arg0, %c0_i32 : i32, i32
  }
}

</mosaic_0001>

<llo_original>
// kernel: tpu_custom_call.1
$region0: #{tpu_custom_call.1}
  #allocation0 [shape = 'u32[]', space=smem, size = 0x4, offset = 0x4, fixed_abs, tag = 'smem constant byte address 0x4 - core index']
  #allocation1 [shape = 'u32[72,128]{1,0:T(1,128)}', space=vmem, size = 0x9000, scoped, tag = 'internal scratch']
  %s0 = inlined_call_operand.hbm [shape: bf16[32,96], index: 0, kind: input, shape index: {}]
  %s1 = inlined_call_operand.hbm [shape: bf16[96,512], index: 1, kind: input, shape index: {}]
  %s2 = inlined_call_operand.hbm [shape: f32[1,512], index: 2, kind: input, shape index: {}]
  %s3 = inlined_call_operand.hbm [shape: bf16[3,512,512], index: 3, kind: input, shape index: {}]
  %s4 = inlined_call_operand.hbm [shape: f32[1,512], index: 4, kind: input, shape index: {}]
  %s5 = inlined_call_operand.hbm [shape: bf16[512,128], index: 5, kind: input, shape index: {}]
  %s6 = inlined_call_operand.hbm [shape: f32[1,128], index: 6, kind: input, shape index: {}]
  %s7 = inlined_call_operand.hbm [shape: bf16[32,128], index: 7, kind: output, shape index: {}]
  %s8 = sld [smem:[#allocation0]]
  $region66: #{tpu_custom_call.1} parent=0
    _
  %s10 = ssub.s32 1, %s8
  %s11 = scalar_select 0, %s10, %s8
  $region1: #{tpu_custom_call.1} parent=0
    #allocation2 [shape = 'u8[8192]{0}', space=vmem, size = 0x2000, scoped, tag = 'input window, operand 0, single buffered']
    #allocation3 [shape = 's32[1]{0}', space=sflag, size = 0x4, scoped, tag = 'scoped memory for tpu_custom_call.1']
    #allocation4 [shape = 's32[1]{0}', space=sflag, size = 0x4, scoped, tag = 'scoped memory for tpu_custom_call.1']
    #allocation5 [shape = 'u8[98304]{0}', space=vmem, size = 0x18000, scoped, tag = 'input window, operand 1, single buffered']
    #allocation6 [shape = 's32[1]{0}', space=sflag, size = 0x4, scoped, tag = 'scoped memory for tpu_custom_call.1']
    #allocation7 [shape = 'u8[2048]{0}', space=vmem, size = 0x800, scoped, tag = 'input window, operand 2, single buffered']
    #allocation8 [shape = 'u8[1572864]{0}', space=vmem, size = 0x180000, scoped, tag = 'input window, operand 3, single buffered']
    #allocation9 [shape = 's32[1]{0}', space=sflag, size = 0x4, scoped, tag = 'scoped memory for tpu_custom_call.1']
    #allocation10 [shape = 'u8[2048]{0}', space=vmem, size = 0x800, scoped, tag = 'input window, operand 4, single buffered']
    #allocation11 [shape = 'u8[131072]{0}', space=vmem, size = 0x20000, scoped, tag = 'input window, operand 5, single buffered']
    #allocation12 [shape = 's32[1]{0}', space=sflag, size = 0x4, scoped, tag = 'scoped memory for tpu_custom_call.1']
    #allocation13 [shape = 'u8[512]{0}', space=vmem, size = 0x400, scoped, tag = 'input window, operand 6, single buffered']
    #allocation14 [shape = 'u8[8192]{0}', space=vmem, size = 0x2000, scoped, tag = 'output window, operand 0, single buffered']
    %12 = vsyncpa [#allocation3], 0
    %13 = vsyncpa [#allocation6], 0
    %14 = vsyncpa [#allocation9], 0
    %15 = vsyncpa [#allocation12], 0
    %16 = vsyncpa [#allocation4], 0
    // Predicated region
    $region2: #{tpu_custom_call.1} parent=1 // pred_check
      _
    $region3: #{tpu_custom_call.1} parent=1 // pred_check_branch
      %18 = sbr.rel (0) target = $region5
    $region4: #{tpu_custom_call.1} parent=1 // pred_region
      %20 = vsyncadd [#allocation3], 0
      %s21 = sshll.u32 %s0, 4
      %s22 = int_to_ptr.hbm [resolvable:$true] %s21
      %s23 = sshll.u32 [#allocation2], 4
      %s24 = int_to_ptr.vmem [resolvable:$true] %s23
      %29 = dma.hbm_to_vmem [thread:$0]  %s22, 256, %s24, [#allocation3], 64, 64, 4
    $region5: #{tpu_custom_call.1} parent=1 // pred_fallthru
      _
    // Predicated region
    $region6: #{tpu_custom_call.1} parent=1 // pred_check
      _
    $region7: #{tpu_custom_call.1} parent=1 // pred_check_branch
      %31 = sbr.rel (0) target = $region9
    $region8: #{tpu_custom_call.1} parent=1 // pred_region
      %33 = vsyncadd [#allocation6], 0
      %s34 = sshll.u32 %s1, 4
      %s35 = int_to_ptr.hbm [resolvable:$true] %s34
      %s36 = sshll.u32 [#allocation5], 4
      %s37 = int_to_ptr.vmem [resolvable:$true] %s36
      %42 = dma.hbm_to_vmem [thread:$0]  %s35, 3072, %s37, [#allocation6], 256, 256, 16
    $region9: #{tpu_custom_call.1} parent=1 // pred_fallthru
      _
    // Predicated region
    $region10: #{tpu_custom_call.1} parent=1 // pred_check
      _
    $region11: #{tpu_custom_call.1} parent=1 // pred_check_branch
      %44 = sbr.rel (0) target = $region13
    $region12: #{tpu_custom_call.1} parent=1 // pred_region
      %46 = vsyncadd [#allocation6], 0
      %s48 = sshll.u32 %s2, 4
      %s49 = int_to_ptr.hbm [resolvable:$true] %s48
      %s50 = sshll.u32 [#allocation7], 4
      %s51 = int_to_ptr.vmem [resolvable:$true] %s50
      %53 = dma.hbm_to_vmem [thread:$0]  %s49, 64, %s51, [#allocation6]
    $region13: #{tpu_custom_call.1} parent=1 // pred_fallthru
      _
    // Predicated region
    $region14: #{tpu_custom_call.1} parent=1 // pred_check
      _
    $region15: #{tpu_custom_call.1} parent=1 // pred_check_branch
      %55 = sbr.rel (0) target = $region17
    $region16: #{tpu_custom_call.1} parent=1 // pred_region
      %57 = vsyncadd [#allocation9], 0
      %s58 = sshll.u32 %s3, 4
      %s59 = int_to_ptr.hbm [resolvable:$true] %s58
      %s60 = sshll.u32 [#allocation8], 4
      %s61 = int_to_ptr.vmem [resolvable:$true] %s60
      %66 = dma.hbm_to_vmem [thread:$0]  %s59, 49152, %s61, [#allocation9], 256, 256, 16
    $region17: #{tpu_custom_call.1} parent=1 // pred_fallthru
      _
    // Predicated region
    $region18: #{tpu_custom_call.1} parent=1 // pred_check
      _
    $region19: #{tpu_custom_call.1} parent=1 // pred_check_branch
      %68 = sbr.rel (0) target = $region21
    $region20: #{tpu_custom_call.1} parent=1 // pred_region
      %70 = vsyncadd [#allocation9], 0
      %s72 = sshll.u32 %s4, 4
      %s73 = int_to_ptr.hbm [resolvable:$true] %s72
      %s74 = sshll.u32 [#allocation10], 4
      %s75 = int_to_ptr.vmem [resolvable:$true] %s74
      %77 = dma.hbm_to_vmem [thread:$0]  %s73, 64, %s75, [#allocation9]
    $region21: #{tpu_custom_call.1} parent=1 // pred_fallthru
      _
    // Predicated region
    $region22: #{tpu_custom_call.1} parent=1 // pred_check
      _
    $region23: #{tpu_custom_call.1} parent=1 // pred_check_branch
      %79 = sbr.rel (0) target = $region25
    $region24: #{tpu_custom_call.1} parent=1 // pred_region
      %81 = vsyncadd [#allocation12], 0
      %s82 = sshll.u32 %s5, 4
      %s83 = int_to_ptr.hbm [resolvable:$true] %s82
      %s84 = sshll.u32 [#allocation11], 4
      %s85 = int_to_ptr.vmem [resolvable:$true] %s84
      %90 = dma.hbm_to_vmem [thread:$0]  %s83, 4096, %s85, [#allocation12], 64, 64, 4
    $region25: #{tpu_custom_call.1} parent=1 // pred_fallthru
      _
    // Predicated region
    $region26: #{tpu_custom_call.1} parent=1 // pred_check
      _
    $region27: #{tpu_custom_call.1} parent=1 // pred_check_branch
      %92 = sbr.rel (0) target = $region29
    $region28: #{tpu_custom_call.1} parent=1 // pred_region
      %94 = vsyncadd [#allocation12], 0
      %s96 = sshll.u32 %s6, 4
      %s97 = int_to_ptr.hbm [resolvable:$true] %s96
      %s98 = sshll.u32 [#allocation13], 4
      %s99 = int_to_ptr.vmem [resolvable:$true] %s98
      %101 = dma.hbm_to_vmem [thread:$0]  %s97, 16, %s99, [#allocation12]
    $region29: #{tpu_custom_call.1} parent=1 // pred_fallthru
      _
    // Predicated region
    $region30: #{tpu_custom_call.1} parent=1 // pred_check
      _
    $region31: #{tpu_custom_call.1} parent=1 // pred_check_branch
      %103 = sbr.rel (0) target = $region33
    $region32: #{tpu_custom_call.1} parent=1 // pred_region
      %105 = dma.done [#allocation3], 256
    $region33: #{tpu_custom_call.1} parent=1 // pred_fallthru
      _
    // Predicated region
    $region34: #{tpu_custom_call.1} parent=1 // pred_check
      _
    $region35: #{tpu_custom_call.1} parent=1 // pred_check_branch
      %107 = sbr.rel (0) target = $region37
    $region36: #{tpu_custom_call.1} parent=1 // pred_region
      %109 = dma.done [#allocation6], 3072
    $region37: #{tpu_custom_call.1} parent=1 // pred_fallthru
      _
    // Predicated region
    $region38: #{tpu_custom_call.1} parent=1 // pred_check
      _
    $region39: #{tpu_custom_call.1} parent=1 // pred_check_branch
      %111 = sbr.rel (0) target = $region41
    $region40: #{tpu_custom_call.1} parent=1 // pred_region
      %113 = dma.done [#allocation6], 64
    $region41: #{tpu_custom_call.1} parent=1 // pred_fallthru
      _
    // Predicated region
    $region42: #{tpu_custom_call.1} parent=1 // pred_check
      _
    $region43: #{tpu_custom_call.1} parent=1 // pred_check_branch
      %115 = sbr.rel (0) target = $region45
    $region44: #{tpu_custom_call.1} parent=1 // pred_region
      %117 = dma.done [#allocation9], 49152
    $region45: #{tpu_custom_call.1} parent=1 // pred_fallthru
      _
    // Predicated region
    $region46: #{tpu_custom_call.1} parent=1 // pred_check
      _
    $region47: #{tpu_custom_call.1} parent=1 // pred_check_branch
      %119 = sbr.rel (0) target = $region49
    $region48: #{tpu_custom_call.1} parent=1 // pred_region
      %121 = dma.done [#allocation9], 64
    $region49: #{tpu_custom_call.1} parent=1 // pred_fallthru
      _
    // Predicated region
    $region50: #{tpu_custom_call.1} parent=1 // pred_check
      _
    $region51: #{tpu_custom_call.1} parent=1 // pred_check_branch
      %123 = sbr.rel (0) target = $region53
    $region52: #{tpu_custom_call.1} parent=1 // pred_region
      %125 = dma.done [#allocation12], 4096
    $region53: #{tpu_custom_call.1} parent=1 // pred_fallthru
      _
    // Predicated region
    $region54: #{tpu_custom_call.1} parent=1 // pred_check
      _
    $region55: #{tpu_custom_call.1} parent=1 // pred_check_branch
      %127 = sbr.rel (0) target = $region57
    $region56: #{tpu_custom_call.1} parent=1 // pred_region
      %129 = dma.done [#allocation12], 16
    $region57: #{tpu_custom_call.1} parent=1 // pred_fallthru
      _
    %v131 = vld [vmem:[#allocation2] sm:$0xf]
    %v132 = vld [vmem:[#allocation2 + $0x4] sm:$0xf]
    %v133 = vld [vmem:[#allocation2 + $0x8] sm:$0xf]
    %v134 = vld [vmem:[#allocation2 + $0xc] sm:$0xf]
    %v135 = vld [vmem:[#allocation5] sm:$0xff]
    %v136 = vld [vmem:[#allocation5 + $0x8] sm:$0xff]
    %v137 = vld [vmem:[#allocation5 + $0x10] sm:$0xff]
    %v138 = vld [vmem:[#allocation5 + $0x18] sm:$0xff]
    %v139 = vld [vmem:[#allocation5 + $0x20] sm:$0xff]
    %v140 = vld [vmem:[#allocation5 + $0x28] sm:$0xff]
    %v141 = vld [vmem:[#allocation5 + $0x30] sm:$0xff]
    %v142 = vld [vmem:[#allocation5 + $0x38] sm:$0xff]
    %v143 = vld [vmem:[#allocation5 + $0x40] sm:$0xff]
    %v144 = vld [vmem:[#allocation5 + $0x48] sm:$0xff]
    %v145 = vld [vmem:[#allocation5 + $0x50] sm:$0xff]
    %v146 = vld [vmem:[#allocation5 + $0x58] sm:$0xff]
    %v147 = vld [vmem:[#allocation5 + $0x60] sm:$0xff]
    %v148 = vld [vmem:[#allocation5 + $0x68] sm:$0xff]
    %v149 = vld [vmem:[#allocation5 + $0x70] sm:$0xff]
    %v150 = vld [vmem:[#allocation5 + $0x78] sm:$0xff]
    %v151 = vld [vmem:[#allocation5 + $0x80] sm:$0xff]
    %v152 = vld [vmem:[#allocation5 + $0x88] sm:$0xff]
    %v153 = vld [vmem:[#allocation5 + $0x90] sm:$0xff]
    %v154 = vld [vmem:[#allocation5 + $0x98] sm:$0xff]
    %v155 = vld [vmem:[#allocation5 + $0xa0] sm:$0xff]
    %v156 = vld [vmem:[#allocation5 + $0xa8] sm:$0xff]
    %v157 = vld [vmem:[#allocation5 + $0xb0] sm:$0xff]
    %v158 = vld [vmem:[#allocation5 + $0xb8] sm:$0xff]
    %v159 = vld [vmem:[#allocation7] sm:$0xf]
    %v161 = vperm.slane %v159, 0
    %v162 = vperm.slane %v159, 1
    %v163 = vperm.slane %v159, 2
    %v164 = vperm.slane %v159, 3
    %v173 = vunpack.c.l.b16 %v131
    %v174 = vunpack.c.l.b16 %v132
    %v175 = vunpack.c.l.b16 %v133
    %v176 = vunpack.c.l.b16 %v134
    %v177 = vpack.c.b16 %v174, %v173
    %v178 = vpack.c.b16 %v176, %v175
    %v203 = vunpack.c.l.b16 %v135
    %v204 = vunpack.c.h.b16 %v135
    %v205 = vunpack.c.l.b16 %v136
    %v206 = vunpack.c.h.b16 %v136
    %v207 = vunpack.c.l.b16 %v137
    %v208 = vunpack.c.h.b16 %v137
    %v209 = vunpack.c.l.b16 %v138
    %v210 = vunpack.c.h.b16 %v138
    %v211 = vunpack.c.l.b16 %v139
    %v212 = vunpack.c.h.b16 %v139
    %v213 = vunpack.c.l.b16 %v140
    %v214 = vunpack.c.h.b16 %v140
    %v215 = vunpack.c.l.b16 %v141
    %v216 = vunpack.c.h.b16 %v141
    %v217 = vunpack.c.l.b16 %v142
    %v218 = vunpack.c.h.b16 %v142
    %v219 = vunpack.c.l.b16 %v143
    %v220 = vunpack.c.h.b16 %v143
    %v221 = vunpack.c.l.b16 %v144
    %v222 = vunpack.c.h.b16 %v144
    %v223 = vunpack.c.l.b16 %v145
    %v224 = vunpack.c.h.b16 %v145
    %v225 = vunpack.c.l.b16 %v146
    %v226 = vunpack.c.h.b16 %v146
    %v227 = vunpack.c.l.b16 %v147
    %v228 = vunpack.c.h.b16 %v147
    %v229 = vunpack.c.l.b16 %v148
    %v230 = vunpack.c.h.b16 %v148
    %v231 = vunpack.c.l.b16 %v149
    %v232 = vunpack.c.h.b16 %v149
    %v233 = vunpack.c.l.b16 %v150
    %v234 = vunpack.c.h.b16 %v150
    %v235 = vunpack.c.l.b16 %v151
    %v236 = vunpack.c.h.b16 %v151
    %v237 = vunpack.c.l.b16 %v152
    %v238 = vunpack.c.h.b16 %v152
    %v239 = vunpack.c.l.b16 %v153
    %v240 = vunpack.c.h.b16 %v153
    %v241 = vunpack.c.l.b16 %v154
    %v242 = vunpack.c.h.b16 %v154
    %v243 = vunpack.c.l.b16 %v155
    %v244 = vunpack.c.h.b16 %v155
    %v245 = vunpack.c.l.b16 %v156
    %v246 = vunpack.c.h.b16 %v156
    %v247 = vunpack.c.l.b16 %v157
    %v248 = vunpack.c.h.b16 %v157
    %v249 = vunpack.c.l.b16 %v158
    %v250 = vunpack.c.h.b16 %v158
    %v251 = vpack.c.b16 %v207, %v203
    %v252 = vpack.c.b16 %v208, %v204
    %v253 = vpack.c.b16 %v209, %v205
    %v254 = vpack.c.b16 %v210, %v206
    %v255 = vpack.c.b16 %v215, %v211
    %v256 = vpack.c.b16 %v216, %v212
    %v257 = vpack.c.b16 %v217, %v213
    %v258 = vpack.c.b16 %v218, %v214
    %v259 = vpack.c.b16 %v223, %v219
    %v260 = vpack.c.b16 %v224, %v220
    %v261 = vpack.c.b16 %v225, %v221
    %v262 = vpack.c.b16 %v226, %v222
    %v263 = vpack.c.b16 %v231, %v227
    %v264 = vpack.c.b16 %v232, %v228
    %v265 = vpack.c.b16 %v233, %v229
    %v266 = vpack.c.b16 %v234, %v230
    %v267 = vpack.c.b16 %v239, %v235
    %v268 = vpack.c.b16 %v240, %v236
    %v269 = vpack.c.b16 %v241, %v237
    %v270 = vpack.c.b16 %v242, %v238
    %v271 = vpack.c.b16 %v247, %v243
    %v272 = vpack.c.b16 %v248, %v244
    %v273 = vpack.c.b16 %v249, %v245
    %v274 = vpack.c.b16 %v250, %v246
    %vm299 = vcmask 785408
    %v301 = vsel %vm299, %v177, 0
    %v304 = vsel %vm299, %v178, 0
    %306 = vmatpush.bf16.msra.mxu0 0
    %307 = vmatpush.bf16.msra.mxu0 0
    %308 = vmatpush.bf16.msra.mxu0 %v271
    %309 = vmatpush.bf16.msra.mxu0 %v267
    %310 = vmatpush.bf16.msra.mxu0 %v263
    %311 = vmatpush.bf16.msra.mxu0 %v259
    %312 = vmatpush.bf16.msra.mxu0 %v255
    %313 = vmatpush.bf16.msra.mxu0 %v251
    %314 = vmatmul.bf16.gmra.mxu0 %v301
    %v315 = vpop.f32.mrf.mxu0
    %v316 = vadd.f32 %v161, %v315
    %v317 = vpop.f32.mrf.mxu0
    %v318 = vadd.f32 %v161, %v317
    %319 = vmatmul.bf16.gmra.mxu0 %v304
    %v320 = vpop.f32.mrf.mxu0
    %v321 = vadd.f32 %v161, %v320
    %v322 = vpop.f32.mrf.mxu0
    %v323 = vadd.f32 %v161, %v322
    %324 = vdwg.mxu0
    %325 = vmatpush.bf16.msra.mxu0 0
    %326 = vmatpush.bf16.msra.mxu0 0
    %327 = vmatpush.bf16.msra.mxu0 %v272
    %328 = vmatpush.bf16.msra.mxu0 %v268
    %329 = vmatpush.bf16.msra.mxu0 %v264
    %330 = vmatpush.bf16.msra.mxu0 %v260
    %331 = vmatpush.bf16.msra.mxu0 %v256
    %332 = vmatpush.bf16.msra.mxu0 %v252
    %333 = vmatmul.bf16.gmra.mxu0 %v301
    %v334 = vpop.f32.mrf.mxu0
    %v335 = vadd.f32 %v162, %v334
    %v336 = vpop.f32.mrf.mxu0
    %v337 = vadd.f32 %v162, %v336
    %338 = vmatmul.bf16.gmra.mxu0 %v304
    %v339 = vpop.f32.mrf.mxu0
    %v340 = vadd.f32 %v162, %v339
    %v341 = vpop.f32.mrf.mxu0
    %v342 = vadd.f32 %v162, %v341
    %343 = vdwg.mxu0
    %344 = vmatpush.bf16.msra.mxu0 0
    %345 = vmatpush.bf16.msra.mxu0 0
    %346 = vmatpush.bf16.msra.mxu0 %v273
    %347 = vmatpush.bf16.msra.mxu0 %v269
    %348 = vmatpush.bf16.msra.mxu0 %v265
    %349 = vmatpush.bf16.msra.mxu0 %v261
    %350 = vmatpush.bf16.msra.mxu0 %v257
    %351 = vmatpush.bf16.msra.mxu0 %v253
    %352 = vmatmul.bf16.gmra.mxu0 %v301
    %v353 = vpop.f32.mrf.mxu0
    %v354 = vadd.f32 %v163, %v353
    %v355 = vpop.f32.mrf.mxu0
    %v356 = vadd.f32 %v163, %v355
    %357 = vmatmul.bf16.gmra.mxu0 %v304
    %v358 = vpop.f32.mrf.mxu0
    %v359 = vadd.f32 %v163, %v358
    %v360 = vpop.f32.mrf.mxu0
    %v361 = vadd.f32 %v163, %v360
    %362 = vdwg.mxu0
    %363 = vmatpush.bf16.msra.mxu0 0
    %364 = vmatpush.bf16.msra.mxu0 0
    %365 = vmatpush.bf16.msra.mxu0 %v274
    %366 = vmatpush.bf16.msra.mxu0 %v270
    %367 = vmatpush.bf16.msra.mxu0 %v266
    %368 = vmatpush.bf16.msra.mxu0 %v262
    %369 = vmatpush.bf16.msra.mxu0 %v258
    %370 = vmatpush.bf16.msra.mxu0 %v254
    %371 = vmatmul.bf16.gmra.mxu0 %v301
    %v372 = vpop.f32.mrf.mxu0
    %v373 = vadd.f32 %v164, %v372
    %v374 = vpop.f32.mrf.mxu0
    %v375 = vadd.f32 %v164, %v374
    %376 = vmatmul.bf16.gmra.mxu0 %v304
    %v377 = vpop.f32.mrf.mxu0
    %v378 = vadd.f32 %v164, %v377
    %v379 = vpop.f32.mrf.mxu0
    %v380 = vadd.f32 %v164, %v379
    %381 = vdwg.mxu0
    %v382 = vmax.f32 %v316, 0.0
    %v383 = vmax.f32 %v335, 0.0
    %v384 = vmax.f32 %v354, 0.0
    %v385 = vmax.f32 %v373, 0.0
    %v386 = vmax.f32 %v318, 0.0
    %v387 = vmax.f32 %v337, 0.0
    %v388 = vmax.f32 %v356, 0.0
    %v389 = vmax.f32 %v375, 0.0
    %v390 = vmax.f32 %v321, 0.0
    %v391 = vmax.f32 %v340, 0.0
    %v392 = vmax.f32 %v359, 0.0
    %v393 = vmax.f32 %v378, 0.0
    %v394 = vmax.f32 %v323, 0.0
    %v395 = vmax.f32 %v342, 0.0
    %v396 = vmax.f32 %v361, 0.0
    %v397 = vmax.f32 %v380, 0.0
    %v398 = vlaneseq
    %v399 = vshrl.u32 %v398, 7
    %v400 = vadd.s32 %v399, 8
    %v401 = vadd.s32 %v399, 16
    %v402 = vadd.s32 %v399, 24
    %vm403 = vcmp.lt.s32.totalorder %v399, 0
    %v404 = vsub.s32 0, %v399
    %v405 = vsel %vm403, %v404, %v399
    %v406 = vshrl.u32 %v405, 4
    %v407 = vand.u32 %v405, 15
    %v408 = vsub.s32 0, %v407
    %v409 = vsel %vm403, %v408, %v407
    %vm410 = vcmp.lt.s32.totalorder %v400, 0
    %v411 = vsub.s32 0, %v400
    %v412 = vsel %vm410, %v411, %v400
    %v413 = vshrl.u32 %v412, 4
    %v414 = vand.u32 %v412, 15
    %v415 = vsub.s32 0, %v414
    %v416 = vsel %vm410, %v415, %v414
    %vm417 = vcmp.lt.s32.totalorder %v401, 0
    %v418 = vsub.s32 0, %v401
    %v419 = vsel %vm417, %v418, %v401
    %v420 = vshrl.u32 %v419, 4
    %v421 = vand.u32 %v419, 15
    %v422 = vsub.s32 0, %v421
    %v423 = vsel %vm417, %v422, %v421
    %vm424 = vcmp.lt.s32.totalorder %v402, 0
    %v425 = vsub.s32 0, %v402
    %v426 = vsel %vm424, %v425, %v402
    %v427 = vshrl.u32 %v426, 4
    %v428 = vand.u32 %v426, 15
    %v429 = vsub.s32 0, %v428
    %v430 = vsel %vm424, %v429, %v428
    %vm431 = vcmp.ne.s32.totalorder %v409, 0
    %vm432 = vcmp.ne.s32.totalorder %v416, 0
    %vm433 = vcmp.ne.s32.totalorder %v423, 0
    %vm434 = vcmp.ne.s32.totalorder %v430, 0
    %vm435 = vcmp.lt.s32.totalorder %v409, 0
    %vm436 = vcmp.lt.s32.totalorder %v416, 0
    %vm437 = vcmp.lt.s32.totalorder %v423, 0
    %vm438 = vcmp.lt.s32.totalorder %v430, 0
    %vm439 = vmand %vm435, %vm431
    %vm440 = vmand %vm436, %vm432
    %vm441 = vmand %vm437, %vm433
    %vm442 = vmand %vm438, %vm434
    %v443 = vadd.s32 %v409, 16
    %v444 = vadd.s32 %v416, 16
    %v445 = vadd.s32 %v423, 16
    %v446 = vadd.s32 %v430, 16
    %v447 = vsel %vm439, %v443, %v409
    %v448 = vsel %vm440, %v444, %v416
    %v449 = vsel %vm441, %v445, %v423
    %v450 = vsel %vm442, %v446, %v430
    %vm451 = vcmp.eq.s32.totalorder %v447, 0
    %vm452 = vcmp.eq.s32.totalorder %v448, 0
    %vm453 = vcmp.eq.s32.totalorder %v449, 0
    %vm454 = vcmp.eq.s32.totalorder %v450, 0
    %v455 = vrot.slane %v382, 7
    %v456 = vrot.slane %v383, 7
    %v457 = vrot.slane %v384, 7
    %v458 = vrot.slane %v385, 7
    %v459 = vrot.slane %v386, 7
    %v460 = vrot.slane %v387, 7
    %v461 = vrot.slane %v388, 7
    %v462 = vrot.slane %v389, 7
    %v463 = vrot.slane %v390, 7
    %v464 = vrot.slane %v391, 7
    %v465 = vrot.slane %v392, 7
    %v466 = vrot.slane %v393, 7
    %v467 = vrot.slane %v394, 7
    %v468 = vrot.slane %v395, 7
    %v469 = vrot.slane %v396, 7
    %v470 = vrot.slane %v397, 7
    %vm471 = vcmp.lt.s32.totalorder %v399, 1
    %v472 = vsel %vm471, %v463, %v467
    %v473 = vsel %vm471, %v464, %v468
    %v474 = vsel %vm471, %v465, %v469
    %v475 = vsel %vm471, %v466, %v470
    %v476 = vsel %vm471, %v459, %v463
    %v477 = vsel %vm471, %v460, %v464
    %v478 = vsel %vm471, %v461, %v465
    %v479 = vsel %vm471, %v462, %v466
    %v480 = vsel %vm471, %v455, %v459
    %v481 = vsel %vm471, %v456, %v460
    %v482 = vsel %vm471, %v457, %v461
    %v483 = vsel %vm471, %v458, %v462
    %v484 = vsel %vm471, %v467, %v455
    %v485 = vsel %vm471, %v468, %v456
    %v486 = vsel %vm471, %v469, %v457
    %v487 = vsel %vm471, %v470, %v458
    %v488 = vsel %vm451, 1, 0
    %v489 = vsel %vm452, 1, 0
    %v490 = vsel %vm453, 1, 0
    %v491 = vsel %vm454, 1, 0
    %vm492 = vcmp.eq.s32.totalorder %v488, 1
    %vm493 = vcmp.eq.s32.totalorder %v489, 1
    %vm494 = vcmp.eq.s32.totalorder %v490, 1
    %vm495 = vcmp.eq.s32.totalorder %v491, 1
    %v496 = vsel %vm492, 0.0, %v484
    %v497 = vsel %vm492, 0.0, %v485
    %v498 = vsel %vm492, 0.0, %v486
    %v499 = vsel %vm492, 0.0, %v487
    %v500 = vsel %vm493, 0.0, %v480
    %v501 = vsel %vm493, 0.0, %v481
    %v502 = vsel %vm493, 0.0, %v482
    %v503 = vsel %vm493, 0.0, %v483
    %v504 = vsel %vm494, 0.0, %v476
    %v505 = vsel %vm494, 0.0, %v477
    %v506 = vsel %vm494, 0.0, %v478
    %v507 = vsel %vm494, 0.0, %v479
    %v508 = vsel %vm495, 0.0, %v472
    %v509 = vsel %vm495, 0.0, %v473
    %v510 = vsel %vm495, 0.0, %v474
    %v511 = vsel %vm495, 0.0, %v475
    %v512 = vpack.c.bf16 %v500, %v496
    %v513 = vpack.c.bf16 %v501, %v497
    %v514 = vpack.c.bf16 %v502, %v498
    %v515 = vpack.c.bf16 %v503, %v499
    %v516 = vpack.c.bf16 %v508, %v504
    %v517 = vpack.c.bf16 %v509, %v505
    %v518 = vpack.c.bf16 %v510, %v506
    %v519 = vpack.c.bf16 %v511, %v507
    %vm520 = vcmp.eq.s32.totalorder %v447, 15
    %vm521 = vcmp.eq.s32.totalorder %v448, 15
    %vm522 = vcmp.eq.s32.totalorder %v449, 15
    %vm523 = vcmp.eq.s32.totalorder %v450, 15
    %v524 = vrot.slane %v382, 1
    %v525 = vrot.slane %v383, 1
    %v526 = vrot.slane %v384, 1
    %v527 = vrot.slane %v385, 1
    %v528 = vrot.slane %v386, 1
    %v529 = vrot.slane %v387, 1
    %v530 = vrot.slane %v388, 1
    %v531 = vrot.slane %v389, 1
    %v532 = vrot.slane %v390, 1
    %v533 = vrot.slane %v391, 1
    %v534 = vrot.slane %v392, 1
    %v535 = vrot.slane %v393, 1
    %v536 = vrot.slane %v394, 1
    %v537 = vrot.slane %v395, 1
    %v538 = vrot.slane %v396, 1
    %v539 = vrot.slane %v397, 1
    %vm540 = vcmp.lt.s32.totalorder %v399, 7
    %v541 = vsel %vm540, %v532, %v536
    %v542 = vsel %vm540, %v533, %v537
    %v543 = vsel %vm540, %v534, %v538
    %v544 = vsel %vm540, %v535, %v539
    %v545 = vsel %vm540, %v528, %v532
    %v546 = vsel %vm540, %v529, %v533
    %v547 = vsel %vm540, %v530, %v534
    %v548 = vsel %vm540, %v531, %v535
    %v549 = vsel %vm540, %v524, %v528
    %v550 = vsel %vm540, %v525, %v529
    %v551 = vsel %vm540, %v526, %v530
    %v552 = vsel %vm540, %v527, %v531
    %v553 = vsel %vm540, %v536, %v524
    %v554 = vsel %vm540, %v537, %v525
    %v555 = vsel %vm540, %v538, %v526
    %v556 = vsel %vm540, %v539, %v527
    %v557 = vsel %vm520, 1, 0
    %v558 = vsel %vm521, 1, 0
    %v559 = vsel %vm522, 1, 0
    %v560 = vsel %vm523, 1, 0
    %vm561 = vcmp.eq.s32.totalorder %v557, 1
    %vm562 = vcmp.eq.s32.totalorder %v558, 1
    %vm563 = vcmp.eq.s32.totalorder %v559, 1
    %vm564 = vcmp.eq.s32.totalorder %v560, 1
    %v565 = vsel %vm561, 0.0, %v549
    %v566 = vsel %vm561, 0.0, %v550
    %v567 = vsel %vm561, 0.0, %v551
    %v568 = vsel %vm561, 0.0, %v552
    %v569 = vsel %vm562, 0.0, %v545
    %v570 = vsel %vm562, 0.0, %v546
    %v571 = vsel %vm562, 0.0, %v547
    %v572 = vsel %vm562, 0.0, %v548
    %v573 = vsel %vm563, 0.0, %v541
    %v574 = vsel %vm563, 0.0, %v542
    %v575 = vsel %vm563, 0.0, %v543
    %v576 = vsel %vm563, 0.0, %v544
    %v577 = vsel %vm564, 0.0, %v553
    %v578 = vsel %vm564, 0.0, %v554
    %v579 = vsel %vm564, 0.0, %v555
    %v580 = vsel %vm564, 0.0, %v556
    %v581 = vpack.c.bf16 %v569, %v565
    %v582 = vpack.c.bf16 %v570, %v566
    %v583 = vpack.c.bf16 %v571, %v567
    %v584 = vpack.c.bf16 %v572, %v568
    %v585 = vpack.c.bf16 %v577, %v573
    %v586 = vpack.c.bf16 %v578, %v574
    %v587 = vpack.c.bf16 %v579, %v575
    %v588 = vpack.c.bf16 %v580, %v576
    %v589 = vpack.c.bf16 %v386, %v382
    %v590 = vpack.c.bf16 %v387, %v383
    %v591 = vpack.c.bf16 %v388, %v384
    %v592 = vpack.c.bf16 %v389, %v385
    %v593 = vpack.c.bf16 %v394, %v390
    %v594 = vpack.c.bf16 %v395, %v391
    %v595 = vpack.c.bf16 %v396, %v392
    %v596 = vpack.c.bf16 %v397, %v393
    %v597 = vld [vmem:[#allocation8] sm:$0xff]
    %v598 = vld [vmem:[#allocation8 + $0x8] sm:$0xff]
    %v599 = vld [vmem:[#allocation8 + $0x10] sm:$0xff]
    %v600 = vld [vmem:[#allocation8 + $0x18] sm:$0xff]
    %v601 = vld [vmem:[#allocation8 + $0x20] sm:$0xff]
    %v602 = vld [vmem:[#allocation8 + $0x28] sm:$0xff]
    %v603 = vld [vmem:[#allocation8 + $0x30] sm:$0xff]
    %v604 = vld [vmem:[#allocation8 + $0x38] sm:$0xff]
    %v605 = vld [vmem:[#allocation8 + $0x40] sm:$0xff]
    %v606 = vld [vmem:[#allocation8 + $0x48] sm:$0xff]
    %v607 = vld [vmem:[#allocation8 + $0x50] sm:$0xff]
    %v608 = vld [vmem:[#allocation8 + $0x58] sm:$0xff]
    %v609 = vld [vmem:[#allocation8 + $0x60] sm:$0xff]
    %v610 = vld [vmem:[#allocation8 + $0x68] sm:$0xff]
    %v611 = vld [vmem:[#allocation8 + $0x70] sm:$0xff]
    %v612 = vld [vmem:[#allocation8 + $0x78] sm:$0xff]
    %v613 = vld [vmem:[#allocation8 + $0x80] sm:$0xff]
    %v614 = vld [vmem:[#allocation8 + $0x88] sm:$0xff]
    %v615 = vld [vmem:[#allocation8 + $0x90] sm:$0xff]
    %v616 = vld [vmem:[#allocation8 + $0x98] sm:$0xff]
    %v617 = vld [vmem:[#allocation8 + $0xa0] sm:$0xff]
    %v618 = vld [vmem:[#allocation8 + $0xa8] sm:$0xff]
    %v619 = vld [vmem:[#allocation8 + $0xb0] sm:$0xff]
    %v620 = vld [vmem:[#allocation8 + $0xb8] sm:$0xff]
    %v621 = vld [vmem:[#allocation8 + $0xc0] sm:$0xff]
    %v622 = vld [vmem:[#allocation8 + $0xc8] sm:$0xff]
    %v623 = vld [vmem:[#allocation8 + $0xd0] sm:$0xff]
    %v624 = vld [vmem:[#allocation8 + $0xd8] sm:$0xff]
    %v625 = vld [vmem:[#allocation8 + $0xe0] sm:$0xff]
    %v626 = vld [vmem:[#allocation8 + $0xe8] sm:$0xff]
    %v627 = vld [vmem:[#allocation8 + $0xf0] sm:$0xff]
    %v628 = vld [vmem:[#allocation8 + $0xf8] sm:$0xff]
    %v629 = vld [vmem:[#allocation8 + $0x100] sm:$0xff]
    %v630 = vld [vmem:[#allocation8 + $0x108] sm:$0xff]
    %v631 = vld [vmem:[#allocation8 + $0x110] sm:$0xff]
    %v632 = vld [vmem:[#allocation8 + $0x118] sm:$0xff]
    %v633 = vld [vmem:[#allocation8 + $0x120] sm:$0xff]
    %v634 = vld [vmem:[#allocation8 + $0x128] sm:$0xff]
    %v635 = vld [vmem:[#allocation8 + $0x130] sm:$0xff]
    %v636 = vld [vmem:[#allocation8 + $0x138] sm:$0xff]
    %v637 = vld [vmem:[#allocation8 + $0x140] sm:$0xff]
    %v638 = vld [vmem:[#allocation8 + $0x148] sm:$0xff]
    %v639 = vld [vmem:[#allocation8 + $0x150] sm:$0xff]
    %v640 = vld [vmem:[#allocation8 + $0x158] sm:$0xff]
    %v641 = vld [vmem:[#allocation8 + $0x160] sm:$0xff]
    %v642 = vld [vmem:[#allocation8 + $0x168] sm:$0xff]
    %v643 = vld [vmem:[#allocation8 + $0x170] sm:$0xff]
    %v644 = vld [vmem:[#allocation8 + $0x178] sm:$0xff]
    %v645 = vld [vmem:[#allocation8 + $0x180] sm:$0xff]
    %v646 = vld [vmem:[#allocation8 + $0x188] sm:$0xff]
    %v647 = vld [vmem:[#allocation8 + $0x190] sm:$0xff]
    %v648 = vld [vmem:[#allocation8 + $0x198] sm:$0xff]
    %v649 = vld [vmem:[#allocation8 + $0x1a0] sm:$0xff]
    %v650 = vld [vmem:[#allocation8 + $0x1a8] sm:$0xff]
    %v651 = vld [vmem:[#allocation8 + $0x1b0] sm:$0xff]
    %v652 = vld [vmem:[#allocation8 + $0x1b8] sm:$0xff]
    %v653 = vld [vmem:[#allocation8 + $0x1c0] sm:$0xff]
    %v654 = vld [vmem:[#allocation8 + $0x1c8] sm:$0xff]
    %v655 = vld [vmem:[#allocation8 + $0x1d0] sm:$0xff]
    %v656 = vld [vmem:[#allocation8 + $0x1d8] sm:$0xff]
    %v657 = vld [vmem:[#allocation8 + $0x1e0] sm:$0xff]
    %v658 = vld [vmem:[#allocation8 + $0x1e8] sm:$0xff]
    %v659 = vld [vmem:[#allocation8 + $0x1f0] sm:$0xff]
    %v660 = vld [vmem:[#allocation8 + $0x1f8] sm:$0xff]
    %v661 = vld [vmem:[#allocation8 + $0x200] sm:$0xff]
    %v662 = vld [vmem:[#allocation8 + $0x208] sm:$0xff]
    %v663 = vld [vmem:[#allocation8 + $0x210] sm:$0xff]
    %v664 = vld [vmem:[#allocation8 + $0x218] sm:$0xff]
    %v665 = vld [vmem:[#allocation8 + $0x220] sm:$0xff]
    %v666 = vld [vmem:[#allocation8 + $0x228] sm:$0xff]
    %v667 = vld [vmem:[#allocation8 + $0x230] sm:$0xff]
    %v668 = vld [vmem:[#allocation8 + $0x238] sm:$0xff]
    %v669 = vld [vmem:[#allocation8 + $0x240] sm:$0xff]
    %v670 = vld [vmem:[#allocation8 + $0x248] sm:$0xff]
    %v671 = vld [vmem:[#allocation8 + $0x250] sm:$0xff]
    %v672 = vld [vmem:[#allocation8 + $0x258] sm:$0xff]
    %v673 = vld [vmem:[#allocation8 + $0x260] sm:$0xff]
    %v674 = vld [vmem:[#allocation8 + $0x268] sm:$0xff]
    %v675 = vld [vmem:[#allocation8 + $0x270] sm:$0xff]
    %v676 = vld [vmem:[#allocation8 + $0x278] sm:$0xff]
    %v677 = vld [vmem:[#allocation8 + $0x280] sm:$0xff]
    %v678 = vld [vmem:[#allocation8 + $0x288] sm:$0xff]
    %v679 = vld [vmem:[#allocation8 + $0x290] sm:$0xff]
    %v680 = vld [vmem:[#allocation8 + $0x298] sm:$0xff]
    %v681 = vld [vmem:[#allocation8 + $0x2a0] sm:$0xff]
    %v682 = vld [vmem:[#allocation8 + $0x2a8] sm:$0xff]
    %v683 = vld [vmem:[#allocation8 + $0x2b0] sm:$0xff]
    %v684 = vld [vmem:[#allocation8 + $0x2b8] sm:$0xff]
    %v685 = vld [vmem:[#allocation8 + $0x2c0] sm:$0xff]
    %v686 = vld [vmem:[#allocation8 + $0x2c8] sm:$0xff]
    %v687 = vld [vmem:[#allocation8 + $0x2d0] sm:$0xff]
    %v688 = vld [vmem:[#allocation8 + $0x2d8] sm:$0xff]
    %v689 = vld [vmem:[#allocation8 + $0x2e0] sm:$0xff]
    %v690 = vld [vmem:[#allocation8 + $0x2e8] sm:$0xff]
    %v691 = vld [vmem:[#allocation8 + $0x2f0] sm:$0xff]
    %v692 = vld [vmem:[#allocation8 + $0x2f8] sm:$0xff]
    %v693 = vld [vmem:[#allocation8 + $0x300] sm:$0xff]
    %v694 = vld [vmem:[#allocation8 + $0x308] sm:$0xff]
    %v695 = vld [vmem:[#allocation8 + $0x310] sm:$0xff]
    %v696 = vld [vmem:[#allocation8 + $0x318] sm:$0xff]
    %v697 = vld [vmem:[#allocation8 + $0x320] sm:$0xff]
    %v698 = vld [vmem:[#allocation8 + $0x328] sm:$0xff]
    %v699 = vld [vmem:[#allocation8 + $0x330] sm:$0xff]
    %v700 = vld [vmem:[#allocation8 + $0x338] sm:$0xff]
    %v701 = vld [vmem:[#allocation8 + $0x340] sm:$0xff]
    %v702 = vld [vmem:[#allocation8 + $0x348] sm:$0xff]
    %v703 = vld [vmem:[#allocation8 + $0x350] sm:$0xff]
    %v704 = vld [vmem:[#allocation8 + $0x358] sm:$0xff]
    %v705 = vld [vmem:[#allocation8 + $0x360] sm:$0xff]
    %v706 = vld [vmem:[#allocation8 + $0x368] sm:$0xff]
    %v707 = vld [vmem:[#allocation8 + $0x370] sm:$0xff]
    %v708 = vld [vmem:[#allocation8 + $0x378] sm:$0xff]
    %v709 = vld [vmem:[#allocation8 + $0x380] sm:$0xff]
    %v710 = vld [vmem:[#allocation8 + $0x388] sm:$0xff]
    %v711 = vld [vmem:[#allocation8 + $0x390] sm:$0xff]
    %v712 = vld [vmem:[#allocation8 + $0x398] sm:$0xff]
    %v713 = vld [vmem:[#allocation8 + $0x3a0] sm:$0xff]
    %v714 = vld [vmem:[#allocation8 + $0x3a8] sm:$0xff]
    %v715 = vld [vmem:[#allocation8 + $0x3b0] sm:$0xff]
    %v716 = vld [vmem:[#allocation8 + $0x3b8] sm:$0xff]
    %v717 = vld [vmem:[#allocation8 + $0x3c0] sm:$0xff]
    %v718 = vld [vmem:[#allocation8 + $0x3c8] sm:$0xff]
    %v719 = vld [vmem:[#allocation8 + $0x3d0] sm:$0xff]
    %v720 = vld [vmem:[#allocation8 + $0x3d8] sm:$0xff]
    %v721 = vld [vmem:[#allocation8 + $0x3e0] sm:$0xff]
    %v722 = vld [vmem:[#allocation8 + $0x3e8] sm:$0xff]
    %v723 = vld [vmem:[#allocation8 + $0x3f0] sm:$0xff]
    %v724 = vld [vmem:[#allocation8 + $0x3f8] sm:$0xff]
    %s725 = scalar_lea.vmem [#allocation8], 1024
    %v726 = vld [vmem:[%s725] sm:$0xff]
    %v727 = vld [vmem:[%s725 + $0x8] sm:$0xff]
    %v728 = vld [vmem:[%s725 + $0x10] sm:$0xff]
    %v729 = vld [vmem:[%s725 + $0x18] sm:$0xff]
    %v730 = vld [vmem:[%s725 + $0x20] sm:$0xff]
    %v731 = vld [vmem:[%s725 + $0x28] sm:$0xff]
    %v732 = vld [vmem:[%s725 + $0x30] sm:$0xff]
    %v733 = vld [vmem:[%s725 + $0x38] sm:$0xff]
    %v734 = vld [vmem:[%s725 + $0x40] sm:$0xff]
    %v735 = vld [vmem:[%s725 + $0x48] sm:$0xff]
    %v736 = vld [vmem:[%s725 + $0x50] sm:$0xff]
    %v737 = vld [vmem:[%s725 + $0x58] sm:$0xff]
    %v738 = vld [vmem:[%s725 + $0x60] sm:$0xff]
    %v739 = vld [vmem:[%s725 + $0x68] sm:$0xff]
    %v740 = vld [vmem:[%s725 + $0x70] sm:$0xff]
    %v741 = vld [vmem:[%s725 + $0x78] sm:$0xff]
    %v742 = vld [vmem:[%s725 + $0x80] sm:$0xff]
    %v743 = vld [vmem:[%s725 + $0x88] sm:$0xff]
    %v744 = vld [vmem:[%s725 + $0x90] sm:$0xff]
    %v745 = vld [vmem:[%s725 + $0x98] sm:$0xff]
    %v746 = vld [vmem:[%s725 + $0xa0] sm:$0xff]
    %v747 = vld [vmem:[%s725 + $0xa8] sm:$0xff]
    %v748 = vld [vmem:[%s725 + $0xb0] sm:$0xff]
    %v749 = vld [vmem:[%s725 + $0xb8] sm:$0xff]
    %v750 = vld [vmem:[%s725 + $0xc0] sm:$0xff]
    %v751 = vld [vmem:[%s725 + $0xc8] sm:$0xff]
    %v752 = vld [vmem:[%s725 + $0xd0] sm:$0xff]
    %v753 = vld [vmem:[%s725 + $0xd8] sm:$0xff]
    %v754 = vld [vmem:[%s725 + $0xe0] sm:$0xff]
    %v755 = vld [vmem:[%s725 + $0xe8] sm:$0xff]
    %v756 = vld [vmem:[%s725 + $0xf0] sm:$0xff]
    %v757 = vld [vmem:[%s725 + $0xf8] sm:$0xff]
    %v758 = vld [vmem:[%s725 + $0x100] sm:$0xff]
    %v759 = vld [vmem:[%s725 + $0x108] sm:$0xff]
    %v760 = vld [vmem:[%s725 + $0x110] sm:$0xff]
    %v761 = vld [vmem:[%s725 + $0x118] sm:$0xff]
    %v762 = vld [vmem:[%s725 + $0x120] sm:$0xff]
    %v763 = vld [vmem:[%s725 + $0x128] sm:$0xff]
    %v764 = vld [vmem:[%s725 + $0x130] sm:$0xff]
    %v765 = vld [vmem:[%s725 + $0x138] sm:$0xff]
    %v766 = vld [vmem:[%s725 + $0x140] sm:$0xff]
    %v767 = vld [vmem:[%s725 + $0x148] sm:$0xff]
    %v768 = vld [vmem:[%s725 + $0x150] sm:$0xff]
    %v769 = vld [vmem:[%s725 + $0x158] sm:$0xff]
    %v770 = vld [vmem:[%s725 + $0x160] sm:$0xff]
    %v771 = vld [vmem:[%s725 + $0x168] sm:$0xff]
    %v772 = vld [vmem:[%s725 + $0x170] sm:$0xff]
    %v773 = vld [vmem:[%s725 + $0x178] sm:$0xff]
    %v774 = vld [vmem:[%s725 + $0x180] sm:$0xff]
    %v775 = vld [vmem:[%s725 + $0x188] sm:$0xff]
    %v776 = vld [vmem:[%s725 + $0x190] sm:$0xff]
    %v777 = vld [vmem:[%s725 + $0x198] sm:$0xff]
    %v778 = vld [vmem:[%s725 + $0x1a0] sm:$0xff]
    %v779 = vld [vmem:[%s725 + $0x1a8] sm:$0xff]
    %v780 = vld [vmem:[%s725 + $0x1b0] sm:$0xff]
    %v781 = vld [vmem:[%s725 + $0x1b8] sm:$0xff]
    %v782 = vld [vmem:[%s725 + $0x1c0] sm:$0xff]
    %v783 = vld [vmem:[%s725 + $0x1c8] sm:$0xff]
    %v784 = vld [vmem:[%s725 + $0x1d0] sm:$0xff]
    %v785 = vld [vmem:[%s725 + $0x1d8] sm:$0xff]
    %v786 = vld [vmem:[%s725 + $0x1e0] sm:$0xff]
    %v787 = vld [vmem:[%s725 + $0x1e8] sm:$0xff]
    %v788 = vld [vmem:[%s725 + $0x1f0] sm:$0xff]
    %v789 = vld [vmem:[%s725 + $0x1f8] sm:$0xff]
    %v790 = vld [vmem:[%s725 + $0x200] sm:$0xff]
    %v791 = vld [vmem:[%s725 + $0x208] sm:$0xff]
    %v792 = vld [vmem:[%s725 + $0x210] sm:$0xff]
    %v793 = vld [vmem:[%s725 + $0x218] sm:$0xff]
    %v794 = vld [vmem:[%s725 + $0x220] sm:$0xff]
    %v795 = vld [vmem:[%s725 + $0x228] sm:$0xff]
    %v796 = vld [vmem:[%s725 + $0x230] sm:$0xff]
    %v797 = vld [vmem:[%s725 + $0x238] sm:$0xff]
    %v798 = vld [vmem:[%s725 + $0x240] sm:$0xff]
    %v799 = vld [vmem:[%s725 + $0x248] sm:$0xff]
    %v800 = vld [vmem:[%s725 + $0x250] sm:$0xff]
    %v801 = vld [vmem:[%s725 + $0x258] sm:$0xff]
    %v802 = vld [vmem:[%s725 + $0x260] sm:$0xff]
    %v803 = vld [vmem:[%s725 + $0x268] sm:$0xff]
    %v804 = vld [vmem:[%s725 + $0x270] sm:$0xff]
    %v805 = vld [vmem:[%s725 + $0x278] sm:$0xff]
    %v806 = vld [vmem:[%s725 + $0x280] sm:$0xff]
    %v807 = vld [vmem:[%s725 + $0x288] sm:$0xff]
    %v808 = vld [vmem:[%s725 + $0x290] sm:$0xff]
    %v809 = vld [vmem:[%s725 + $0x298] sm:$0xff]
    %v810 = vld [vmem:[%s725 + $0x2a0] sm:$0xff]
    %v811 = vld [vmem:[%s725 + $0x2a8] sm:$0xff]
    %v812 = vld [vmem:[%s725 + $0x2b0] sm:$0xff]
    %v813 = vld [vmem:[%s725 + $0x2b8] sm:$0xff]
    %v814 = vld [vmem:[%s725 + $0x2c0] sm:$0xff]
    %v815 = vld [vmem:[%s725 + $0x2c8] sm:$0xff]
    %v816 = vld [vmem:[%s725 + $0x2d0] sm:$0xff]
    %v817 = vld [vmem:[%s725 + $0x2d8] sm:$0xff]
    %v818 = vld [vmem:[%s725 + $0x2e0] sm:$0xff]
    %v819 = vld [vmem:[%s725 + $0x2e8] sm:$0xff]
    %v820 = vld [vmem:[%s725 + $0x2f0] sm:$0xff]
    %v821 = vld [vmem:[%s725 + $0x2f8] sm:$0xff]
    %v822 = vld [vmem:[%s725 + $0x300] sm:$0xff]
    %v823 = vld [vmem:[%s725 + $0x308] sm:$0xff]
    %v824 = vld [vmem:[%s725 + $0x310] sm:$0xff]
    %v825 = vld [vmem:[%s725 + $0x318] sm:$0xff]
    %v826 = vld [vmem:[%s725 + $0x320] sm:$0xff]
    %v827 = vld [vmem:[%s725 + $0x328] sm:$0xff]
    %v828 = vld [vmem:[%s725 + $0x330] sm:$0xff]
    %v829 = vld [vmem:[%s725 + $0x338] sm:$0xff]
    %v830 = vld [vmem:[%s725 + $0x340] sm:$0xff]
    %v831 = vld [vmem:[%s725 + $0x348] sm:$0xff]
    %v832 = vld [vmem:[%s725 + $0x350] sm:$0xff]
    %v833 = vld [vmem:[%s725 + $0x358] sm:$0xff]
    %v834 = vld [vmem:[%s725 + $0x360] sm:$0xff]
    %v835 = vld [vmem:[%s725 + $0x368] sm:$0xff]
    %v836 = vld [vmem:[%s725 + $0x370] sm:$0xff]
    %v837 = vld [vmem:[%s725 + $0x378] sm:$0xff]
    %v838 = vld [vmem:[%s725 + $0x380] sm:$0xff]
    %v839 = vld [vmem:[%s725 + $0x388] sm:$0xff]
    %v840 = vld [vmem:[%s725 + $0x390] sm:$0xff]
    %v841 = vld [vmem:[%s725 + $0x398] sm:$0xff]
    %v842 = vld [vmem:[%s725 + $0x3a0] sm:$0xff]
    %v843 = vld [vmem:[%s725 + $0x3a8] sm:$0xff]
    %v844 = vld [vmem:[%s725 + $0x3b0] sm:$0xff]
    %v845 = vld [vmem:[%s725 + $0x3b8] sm:$0xff]
    %v846 = vld [vmem:[%s725 + $0x3c0] sm:$0xff]
    %v847 = vld [vmem:[%s725 + $0x3c8] sm:$0xff]
    %v848 = vld [vmem:[%s725 + $0x3d0] sm:$0xff]
    %v849 = vld [vmem:[%s725 + $0x3d8] sm:$0xff]
    %v850 = vld [vmem:[%s725 + $0x3e0] sm:$0xff]
    %v851 = vld [vmem:[%s725 + $0x3e8] sm:$0xff]
    %v852 = vld [vmem:[%s725 + $0x3f0] sm:$0xff]
    %v853 = vld [vmem:[%s725 + $0x3f8] sm:$0xff]
    %v982 = vunpack.c.l.b16 %v726
    %v983 = vunpack.c.h.b16 %v726
    %v984 = vunpack.c.l.b16 %v727
    %v985 = vunpack.c.h.b16 %v727
    %v986 = vunpack.c.l.b16 %v728
    %v987 = vunpack.c.h.b16 %v728
    %v988 = vunpack.c.l.b16 %v729
    %v989 = vunpack.c.h.b16 %v729
    %v990 = vunpack.c.l.b16 %v730
    %v991 = vunpack.c.h.b16 %v730
    %v992 = vunpack.c.l.b16 %v731
    %v993 = vunpack.c.h.b16 %v731
    %v994 = vunpack.c.l.b16 %v732
    %v995 = vunpack.c.h.b16 %v732
    %v996 = vunpack.c.l.b16 %v733
    %v997 = vunpack.c.h.b16 %v733
    %v998 = vunpack.c.l.b16 %v734
    %v999 = vunpack.c.h.b16 %v734
    %v1000 = vunpack.c.l.b16 %v735
    %v1001 = vunpack.c.h.b16 %v735
    %v1002 = vunpack.c.l.b16 %v736
    %v1003 = vunpack.c.h.b16 %v736
    %v1004 = vunpack.c.l.b16 %v737
    %v1005 = vunpack.c.h.b16 %v737
    %v1006 = vunpack.c.l.b16 %v738
    %v1007 = vunpack.c.h.b16 %v738
    %v1008 = vunpack.c.l.b16 %v739
    %v1009 = vunpack.c.h.b16 %v739
    %v1010 = vunpack.c.l.b16 %v740
    %v1011 = vunpack.c.h.b16 %v740
    %v1012 = vunpack.c.l.b16 %v741
    %v1013 = vunpack.c.h.b16 %v741
    %v1014 = vunpack.c.l.b16 %v742
    %v1015 = vunpack.c.h.b16 %v742
    %v1016 = vunpack.c.l.b16 %v743
    %v1017 = vunpack.c.h.b16 %v743
    %v1018 = vunpack.c.l.b16 %v744
    %v1019 = vunpack.c.h.b16 %v744
    %v1020 = vunpack.c.l.b16 %v745
    %v1021 = vunpack.c.h.b16 %v745
    %v1022 = vunpack.c.l.b16 %v746
    %v1023 = vunpack.c.h.b16 %v746
    %v1024 = vunpack.c.l.b16 %v747
    %v1025 = vunpack.c.h.b16 %v747
    %v1026 = vunpack.c.l.b16 %v748
    %v1027 = vunpack.c.h.b16 %v748
    %v1028 = vunpack.c.l.b16 %v749
    %v1029 = vunpack.c.h.b16 %v749
    %v1030 = vunpack.c.l.b16 %v750
    %v1031 = vunpack.c.h.b16 %v750
    %v1032 = vunpack.c.l.b16 %v751
    %v1033 = vunpack.c.h.b16 %v751
    %v1034 = vunpack.c.l.b16 %v752
    %v1035 = vunpack.c.h.b16 %v752
    %v1036 = vunpack.c.l.b16 %v753
    %v1037 = vunpack.c.h.b16 %v753
    %v1038 = vunpack.c.l.b16 %v754
    %v1039 = vunpack.c.h.b16 %v754
    %v1040 = vunpack.c.l.b16 %v755
    %v1041 = vunpack.c.h.b16 %v755
    %v1042 = vunpack.c.l.b16 %v756
    %v1043 = vunpack.c.h.b16 %v756
    %v1044 = vunpack.c.l.b16 %v757
    %v1045 = vunpack.c.h.b16 %v757
    %v1046 = vunpack.c.l.b16 %v758
    %v1047 = vunpack.c.h.b16 %v758
    %v1048 = vunpack.c.l.b16 %v759
    %v1049 = vunpack.c.h.b16 %v759
    %v1050 = vunpack.c.l.b16 %v760
    %v1051 = vunpack.c.h.b16 %v760
    %v1052 = vunpack.c.l.b16 %v761
    %v1053 = vunpack.c.h.b16 %v761
    %v1054 = vunpack.c.l.b16 %v762
    %v1055 = vunpack.c.h.b16 %v762
    %v1056 = vunpack.c.l.b16 %v763
    %v1057 = vunpack.c.h.b16 %v763
    %v1058 = vunpack.c.l.b16 %v764
    %v1059 = vunpack.c.h.b16 %v764
    %v1060 = vunpack.c.l.b16 %v765
    %v1061 = vunpack.c.h.b16 %v765
    %v1062 = vunpack.c.l.b16 %v766
    %v1063 = vunpack.c.h.b16 %v766
    %v1064 = vunpack.c.l.b16 %v767
    %v1065 = vunpack.c.h.b16 %v767
    %v1066 = vunpack.c.l.b16 %v768
    %v1067 = vunpack.c.h.b16 %v768
    %v1068 = vunpack.c.l.b16 %v769
    %v1069 = vunpack.c.h.b16 %v769
    %v1070 = vunpack.c.l.b16 %v770
    %v1071 = vunpack.c.h.b16 %v770
    %v1072 = vunpack.c.l.b16 %v771
    %v1073 = vunpack.c.h.b16 %v771
    %v1074 = vunpack.c.l.b16 %v772
    %v1075 = vunpack.c.h.b16 %v772
    %v1076 = vunpack.c.l.b16 %v773
    %v1077 = vunpack.c.h.b16 %v773
    %v1078 = vunpack.c.l.b16 %v774
    %v1079 = vunpack.c.h.b16 %v774
    %v1080 = vunpack.c.l.b16 %v775
    %v1081 = vunpack.c.h.b16 %v775
    %v1082 = vunpack.c.l.b16 %v776
    %v1083 = vunpack.c.h.b16 %v776
    %v1084 = vunpack.c.l.b16 %v777
    %v1085 = vunpack.c.h.b16 %v777
    %v1086 = vunpack.c.l.b16 %v778
    %v1087 = vunpack.c.h.b16 %v778
    %v1088 = vunpack.c.l.b16 %v779
    %v1089 = vunpack.c.h.b16 %v779
    %v1090 = vunpack.c.l.b16 %v780
    %v1091 = vunpack.c.h.b16 %v780
    %v1092 = vunpack.c.l.b16 %v781
    %v1093 = vunpack.c.h.b16 %v781
    %v1094 = vunpack.c.l.b16 %v782
    %v1095 = vunpack.c.h.b16 %v782
    %v1096 = vunpack.c.l.b16 %v783
    %v1097 = vunpack.c.h.b16 %v783
    %v1098 = vunpack.c.l.b16 %v784
    %v1099 = vunpack.c.h.b16 %v784
    %v1100 = vunpack.c.l.b16 %v785
    %v1101 = vunpack.c.h.b16 %v785
    %v1102 = vunpack.c.l.b16 %v786
    %v1103 = vunpack.c.h.b16 %v786
    %v1104 = vunpack.c.l.b16 %v787
    %v1105 = vunpack.c.h.b16 %v787
    %v1106 = vunpack.c.l.b16 %v788
    %v1107 = vunpack.c.h.b16 %v788
    %v1108 = vunpack.c.l.b16 %v789
    %v1109 = vunpack.c.h.b16 %v789
    %v1110 = vunpack.c.l.b16 %v790
    %v1111 = vunpack.c.h.b16 %v790
    %v1112 = vunpack.c.l.b16 %v791
    %v1113 = vunpack.c.h.b16 %v791
    %v1114 = vunpack.c.l.b16 %v792
    %v1115 = vunpack.c.h.b16 %v792
    %v1116 = vunpack.c.l.b16 %v793
    %v1117 = vunpack.c.h.b16 %v793
    %v1118 = vunpack.c.l.b16 %v794
    %v1119 = vunpack.c.h.b16 %v794
    %v1120 = vunpack.c.l.b16 %v795
    %v1121 = vunpack.c.h.b16 %v795
    %v1122 = vunpack.c.l.b16 %v796
    %v1123 = vunpack.c.h.b16 %v796
    %v1124 = vunpack.c.l.b16 %v797
    %v1125 = vunpack.c.h.b16 %v797
    %v1126 = vunpack.c.l.b16 %v798
    %v1127 = vunpack.c.h.b16 %v798
    %v1128 = vunpack.c.l.b16 %v799
    %v1129 = vunpack.c.h.b16 %v799
    %v1130 = vunpack.c.l.b16 %v800
    %v1131 = vunpack.c.h.b16 %v800
    %v1132 = vunpack.c.l.b16 %v801
    %v1133 = vunpack.c.h.b16 %v801
    %v1134 = vunpack.c.l.b16 %v802
    %v1135 = vunpack.c.h.b16 %v802
    %v1136 = vunpack.c.l.b16 %v803
    %v1137 = vunpack.c.h.b16 %v803
    %v1138 = vunpack.c.l.b16 %v804
    %v1139 = vunpack.c.h.b16 %v804
    %v1140 = vunpack.c.l.b16 %v805
    %v1141 = vunpack.c.h.b16 %v805
    %v1142 = vunpack.c.l.b16 %v806
    %v1143 = vunpack.c.h.b16 %v806
    %v1144 = vunpack.c.l.b16 %v807
    %v1145 = vunpack.c.h.b16 %v807
    %v1146 = vunpack.c.l.b16 %v808
    %v1147 = vunpack.c.h.b16 %v808
    %v1148 = vunpack.c.l.b16 %v809
    %v1149 = vunpack.c.h.b16 %v809
    %v1150 = vunpack.c.l.b16 %v810
    %v1151 = vunpack.c.h.b16 %v810
    %v1152 = vunpack.c.l.b16 %v811
    %v1153 = vunpack.c.h.b16 %v811
    %v1154 = vunpack.c.l.b16 %v812
    %v1155 = vunpack.c.h.b16 %v812
    %v1156 = vunpack.c.l.b16 %v813
    %v1157 = vunpack.c.h.b16 %v813
    %v1158 = vunpack.c.l.b16 %v814
    %v1159 = vunpack.c.h.b16 %v814
    %v1160 = vunpack.c.l.b16 %v815
    %v1161 = vunpack.c.h.b16 %v815
    %v1162 = vunpack.c.l.b16 %v816
    %v1163 = vunpack.c.h.b16 %v816
    %v1164 = vunpack.c.l.b16 %v817
    %v1165 = vunpack.c.h.b16 %v817
    %v1166 = vunpack.c.l.b16 %v818
    %v1167 = vunpack.c.h.b16 %v818
    %v1168 = vunpack.c.l.b16 %v819
    %v1169 = vunpack.c.h.b16 %v819
    %v1170 = vunpack.c.l.b16 %v820
    %v1171 = vunpack.c.h.b16 %v820
    %v1172 = vunpack.c.l.b16 %v821
    %v1173 = vunpack.c.h.b16 %v821
    %v1174 = vunpack.c.l.b16 %v822
    %v1175 = vunpack.c.h.b16 %v822
    %v1176 = vunpack.c.l.b16 %v823
    %v1177 = vunpack.c.h.b16 %v823
    %v1178 = vunpack.c.l.b16 %v824
    %v1179 = vunpack.c.h.b16 %v824
    %v1180 = vunpack.c.l.b16 %v825
    %v1181 = vunpack.c.h.b16 %v825
    %v1182 = vunpack.c.l.b16 %v826
    %v1183 = vunpack.c.h.b16 %v826
    %v1184 = vunpack.c.l.b16 %v827
    %v1185 = vunpack.c.h.b16 %v827
    %v1186 = vunpack.c.l.b16 %v828
    %v1187 = vunpack.c.h.b16 %v828
    %v1188 = vunpack.c.l.b16 %v829
    %v1189 = vunpack.c.h.b16 %v829
    %v1190 = vunpack.c.l.b16 %v830
    %v1191 = vunpack.c.h.b16 %v830
    %v1192 = vunpack.c.l.b16 %v831
    %v1193 = vunpack.c.h.b16 %v831
    %v1194 = vunpack.c.l.b16 %v832
    %v1195 = vunpack.c.h.b16 %v832
    %v1196 = vunpack.c.l.b16 %v833
    %v1197 = vunpack.c.h.b16 %v833
    %v1198 = vunpack.c.l.b16 %v834
    %v1199 = vunpack.c.h.b16 %v834
    %v1200 = vunpack.c.l.b16 %v835
    %v1201 = vunpack.c.h.b16 %v835
    %v1202 = vunpack.c.l.b16 %v836
    %v1203 = vunpack.c.h.b16 %v836
    %v1204 = vunpack.c.l.b16 %v837
    %v1205 = vunpack.c.h.b16 %v837
    %v1206 = vunpack.c.l.b16 %v838
    %v1207 = vunpack.c.h.b16 %v838
    %v1208 = vunpack.c.l.b16 %v839
    %v1209 = vunpack.c.h.b16 %v839
    %v1210 = vunpack.c.l.b16 %v840
    %v1211 = vunpack.c.h.b16 %v840
    %v1212 = vunpack.c.l.b16 %v841
    %v1213 = vunpack.c.h.b16 %v841
    %v1214 = vunpack.c.l.b16 %v842
    %v1215 = vunpack.c.h.b16 %v842
    %v1216 = vunpack.c.l.b16 %v843
    %v1217 = vunpack.c.h.b16 %v843
    %v1218 = vunpack.c.l.b16 %v844
    %v1219 = vunpack.c.h.b16 %v844
    %v1220 = vunpack.c.l.b16 %v845
    %v1221 = vunpack.c.h.b16 %v845
    %v1222 = vunpack.c.l.b16 %v846
    %v1223 = vunpack.c.h.b16 %v846
    %v1224 = vunpack.c.l.b16 %v847
    %v1225 = vunpack.c.h.b16 %v847
    %v1226 = vunpack.c.l.b16 %v848
    %v1227 = vunpack.c.h.b16 %v848
    %v1228 = vunpack.c.l.b16 %v849
    %v1229 = vunpack.c.h.b16 %v849
    %v1230 = vunpack.c.l.b16 %v850
    %v1231 = vunpack.c.h.b16 %v850
    %v1232 = vunpack.c.l.b16 %v851
    %v1233 = vunpack.c.h.b16 %v851
    %v1234 = vunpack.c.l.b16 %v852
    %v1235 = vunpack.c.h.b16 %v852
    %v1236 = vunpack.c.l.b16 %v853
    %v1237 = vunpack.c.h.b16 %v853
    %v1238 = vpack.c.b16 %v986, %v982
    %v1239 = vpack.c.b16 %v987, %v983
    %v1240 = vpack.c.b16 %v988, %v984
    %v1241 = vpack.c.b16 %v989, %v985
    %v1242 = vpack.c.b16 %v994, %v990
    %v1243 = vpack.c.b16 %v995, %v991
    %v1244 = vpack.c.b16 %v996, %v992
    %v1245 = vpack.c.b16 %v997, %v993
    %v1246 = vpack.c.b16 %v1002, %v998
    %v1247 = vpack.c.b16 %v1003, %v999
    %v1248 = vpack.c.b16 %v1004, %v1000
    %v1249 = vpack.c.b16 %v1005, %v1001
    %v1250 = vpack.c.b16 %v1010, %v1006
    %v1251 = vpack.c.b16 %v1011, %v1007
    %v1252 = vpack.c.b16 %v1012, %v1008
    %v1253 = vpack.c.b16 %v1013, %v1009
    %v1254 = vpack.c.b16 %v1018, %v1014
    %v1255 = vpack.c.b16 %v1019, %v1015
    %v1256 = vpack.c.b16 %v1020, %v1016
    %v1257 = vpack.c.b16 %v1021, %v1017
    %v1258 = vpack.c.b16 %v1026, %v1022
    %v1259 = vpack.c.b16 %v1027, %v1023
    %v1260 = vpack.c.b16 %v1028, %v1024
    %v1261 = vpack.c.b16 %v1029, %v1025
    %v1262 = vpack.c.b16 %v1034, %v1030
    %v1263 = vpack.c.b16 %v1035, %v1031
    %v1264 = vpack.c.b16 %v1036, %v1032
    %v1265 = vpack.c.b16 %v1037, %v1033
    %v1266 = vpack.c.b16 %v1042, %v1038
    %v1267 = vpack.c.b16 %v1043, %v1039
    %v1268 = vpack.c.b16 %v1044, %v1040
    %v1269 = vpack.c.b16 %v1045, %v1041
    %v1270 = vpack.c.b16 %v1050, %v1046
    %v1271 = vpack.c.b16 %v1051, %v1047
    %v1272 = vpack.c.b16 %v1052, %v1048
    %v1273 = vpack.c.b16 %v1053, %v1049
    %v1274 = vpack.c.b16 %v1058, %v1054
    %v1275 = vpack.c.b16 %v1059, %v1055
    %v1276 = vpack.c.b16 %v1060, %v1056
    %v1277 = vpack.c.b16 %v1061, %v1057
    %v1278 = vpack.c.b16 %v1066, %v1062
    %v1279 = vpack.c.b16 %v1067, %v1063
    %v1280 = vpack.c.b16 %v1068, %v1064
    %v1281 = vpack.c.b16 %v1069, %v1065
    %v1282 = vpack.c.b16 %v1074, %v1070
    %v1283 = vpack.c.b16 %v1075, %v1071
    %v1284 = vpack.c.b16 %v1076, %v1072
    %v1285 = vpack.c.b16 %v1077, %v1073
    %v1286 = vpack.c.b16 %v1082, %v1078
    %v1287 = vpack.c.b16 %v1083, %v1079
    %v1288 = vpack.c.b16 %v1084, %v1080
    %v1289 = vpack.c.b16 %v1085, %v1081
    %v1290 = vpack.c.b16 %v1090, %v1086
    %v1291 = vpack.c.b16 %v1091, %v1087
    %v1292 = vpack.c.b16 %v1092, %v1088
    %v1293 = vpack.c.b16 %v1093, %v1089
    %v1294 = vpack.c.b16 %v1098, %v1094
    %v1295 = vpack.c.b16 %v1099, %v1095
    %v1296 = vpack.c.b16 %v1100, %v1096
    %v1297 = vpack.c.b16 %v1101, %v1097
    %v1298 = vpack.c.b16 %v1106, %v1102
    %v1299 = vpack.c.b16 %v1107, %v1103
    %v1300 = vpack.c.b16 %v1108, %v1104
    %v1301 = vpack.c.b16 %v1109, %v1105
    %v1302 = vpack.c.b16 %v1114, %v1110
    %v1303 = vpack.c.b16 %v1115, %v1111
    %v1304 = vpack.c.b16 %v1116, %v1112
    %v1305 = vpack.c.b16 %v1117, %v1113
    %v1306 = vpack.c.b16 %v1122, %v1118
    %v1307 = vpack.c.b16 %v1123, %v1119
    %v1308 = vpack.c.b16 %v1124, %v1120
    %v1309 = vpack.c.b16 %v1125, %v1121
    %v1310 = vpack.c.b16 %v1130, %v1126
    %v1311 = vpack.c.b16 %v1131, %v1127
    %v1312 = vpack.c.b16 %v1132, %v1128
    %v1313 = vpack.c.b16 %v1133, %v1129
    %v1314 = vpack.c.b16 %v1138, %v1134
    %v1315 = vpack.c.b16 %v1139, %v1135
    %v1316 = vpack.c.b16 %v1140, %v1136
    %v1317 = vpack.c.b16 %v1141, %v1137
    %v1318 = vpack.c.b16 %v1146, %v1142
    %v1319 = vpack.c.b16 %v1147, %v1143
    %v1320 = vpack.c.b16 %v1148, %v1144
    %v1321 = vpack.c.b16 %v1149, %v1145
    %v1322 = vpack.c.b16 %v1154, %v1150
    %v1323 = vpack.c.b16 %v1155, %v1151
    %v1324 = vpack.c.b16 %v1156, %v1152
    %v1325 = vpack.c.b16 %v1157, %v1153
    %v1326 = vpack.c.b16 %v1162, %v1158
    %v1327 = vpack.c.b16 %v1163, %v1159
    %v1328 = vpack.c.b16 %v1164, %v1160
    %v1329 = vpack.c.b16 %v1165, %v1161
    %v1330 = vpack.c.b16 %v1170, %v1166
    %v1331 = vpack.c.b16 %v1171, %v1167
    %v1332 = vpack.c.b16 %v1172, %v1168
    %v1333 = vpack.c.b16 %v1173, %v1169
    %v1334 = vpack.c.b16 %v1178, %v1174
    %v1335 = vpack.c.b16 %v1179, %v1175
    %v1336 = vpack.c.b16 %v1180, %v1176
    %v1337 = vpack.c.b16 %v1181, %v1177
    %v1338 = vpack.c.b16 %v1186, %v1182
    %v1339 = vpack.c.b16 %v1187, %v1183
    %v1340 = vpack.c.b16 %v1188, %v1184
    %v1341 = vpack.c.b16 %v1189, %v1185
    %v1342 = vpack.c.b16 %v1194, %v1190
    %v1343 = vpack.c.b16 %v1195, %v1191
    %v1344 = vpack.c.b16 %v1196, %v1192
    %v1345 = vpack.c.b16 %v1197, %v1193
    %v1346 = vpack.c.b16 %v1202, %v1198
    %v1347 = vpack.c.b16 %v1203, %v1199
    %v1348 = vpack.c.b16 %v1204, %v1200
    %v1349 = vpack.c.b16 %v1205, %v1201
    %v1350 = vpack.c.b16 %v1210, %v1206
    %v1351 = vpack.c.b16 %v1211, %v1207
    %v1352 = vpack.c.b16 %v1212, %v1208
    %v1353 = vpack.c.b16 %v1213, %v1209
    %v1354 = vpack.c.b16 %v1218, %v1214
    %v1355 = vpack.c.b16 %v1219, %v1215
    %v1356 = vpack.c.b16 %v1220, %v1216
    %v1357 = vpack.c.b16 %v1221, %v1217
    %v1358 = vpack.c.b16 %v1226, %v1222
    %v1359 = vpack.c.b16 %v1227, %v1223
    %v1360 = vpack.c.b16 %v1228, %v1224
    %v1361 = vpack.c.b16 %v1229, %v1225
    %v1362 = vpack.c.b16 %v1234, %v1230
    %v1363 = vpack.c.b16 %v1235, %v1231
    %v1364 = vpack.c.b16 %v1236, %v1232
    %v1365 = vpack.c.b16 %v1237, %v1233
    %1494 = vmatpush.bf16.msra.mxu0 %v1266
    %1495 = vmatpush.bf16.msra.mxu0 %v1262
    %1496 = vmatpush.bf16.msra.mxu0 %v1258
    %1497 = vmatpush.bf16.msra.mxu0 %v1254
    %1498 = vmatpush.bf16.msra.mxu0 %v1250
    %1499 = vmatpush.bf16.msra.mxu0 %v1246
    %1500 = vmatpush.bf16.msra.mxu0 %v1242
    %1501 = vmatpush.bf16.msra.mxu0 %v1238
    %1502 = vmatmul.bf16.gmra.mxu0 %v589
    %v1503 = vpop.f32.mrf.mxu0
    %v1504 = vadd.f32 0.0, %v1503
    %v1505 = vpop.f32.mrf.mxu0
    %v1506 = vadd.f32 0.0, %v1505
    %1507 = vmatmul.bf16.gmra.mxu0 %v593
    %v1508 = vpop.f32.mrf.mxu0
    %v1509 = vadd.f32 0.0, %v1508
    %v1510 = vpop.f32.mrf.mxu0
    %v1511 = vadd.f32 0.0, %v1510
    %1512 = vdwg.mxu0
    %1513 = vmatpush.bf16.msra.mxu0 %v1298
    %1514 = vmatpush.bf16.msra.mxu0 %v1294
    %1515 = vmatpush.bf16.msra.mxu0 %v1290
    %1516 = vmatpush.bf16.msra.mxu0 %v1286
    %1517 = vmatpush.bf16.msra.mxu0 %v1282
    %1518 = vmatpush.bf16.msra.mxu0 %v1278
    %1519 = vmatpush.bf16.msra.mxu0 %v1274
    %1520 = vmatpush.bf16.msra.mxu0 %v1270
    %1521 = vmatmul.bf16.gmra.mxu0 %v590
    %v1522 = vpop.f32.mrf.mxu0
    %v1523 = vadd.f32 %v1504, %v1522
    %v1524 = vpop.f32.mrf.mxu0
    %v1525 = vadd.f32 %v1506, %v1524
    %1526 = vmatmul.bf16.gmra.mxu0 %v594
    %v1527 = vpop.f32.mrf.mxu0
    %v1528 = vadd.f32 %v1509, %v1527
    %v1529 = vpop.f32.mrf.mxu0
    %v1530 = vadd.f32 %v1511, %v1529
    %1531 = vdwg.mxu0
    %1532 = vmatpush.bf16.msra.mxu0 %v1330
    %1533 = vmatpush.bf16.msra.mxu0 %v1326
    %1534 = vmatpush.bf16.msra.mxu0 %v1322
    %1535 = vmatpush.bf16.msra.mxu0 %v1318
    %1536 = vmatpush.bf16.msra.mxu0 %v1314
    %1537 = vmatpush.bf16.msra.mxu0 %v1310
    %1538 = vmatpush.bf16.msra.mxu0 %v1306
    %1539 = vmatpush.bf16.msra.mxu0 %v1302
    %1540 = vmatmul.bf16.gmra.mxu0 %v591
    %v1541 = vpop.f32.mrf.mxu0
    %v1542 = vadd.f32 %v1523, %v1541
    %v1543 = vpop.f32.mrf.mxu0
    %v1544 = vadd.f32 %v1525, %v1543
    %1545 = vmatmul.bf16.gmra.mxu0 %v595
    %v1546 = vpop.f32.mrf.mxu0
    %v1547 = vadd.f32 %v1528, %v1546
    %v1548 = vpop.f32.mrf.mxu0
    %v1549 = vadd.f32 %v1530, %v1548
    %1550 = vdwg.mxu0
    %1551 = vmatpush.bf16.msra.mxu0 %v1362
    %1552 = vmatpush.bf16.msra.mxu0 %v1358
    %1553 = vmatpush.bf16.msra.mxu0 %v1354
    %1554 = vmatpush.bf16.msra.mxu0 %v1350
    %1555 = vmatpush.bf16.msra.mxu0 %v1346
    %1556 = vmatpush.bf16.msra.mxu0 %v1342
    %1557 = vmatpush.bf16.msra.mxu0 %v1338
    %1558 = vmatpush.bf16.msra.mxu0 %v1334
    %1559 = vmatmul.bf16.gmra.mxu0 %v592
    %v1560 = vpop.f32.mrf.mxu0
    %v1561 = vadd.f32 %v1542, %v1560
    %v1562 = vpop.f32.mrf.mxu0
    %v1563 = vadd.f32 %v1544, %v1562
    %1564 = vmatmul.bf16.gmra.mxu0 %v596
    %v1565 = vpop.f32.mrf.mxu0
    %v1566 = vadd.f32 %v1547, %v1565
    %v1567 = vpop.f32.mrf.mxu0
    %v1568 = vadd.f32 %v1549, %v1567
    %1569 = vdwg.mxu0
    %1570 = vmatpush.bf16.msra.mxu0 %v1267
    %1571 = vmatpush.bf16.msra.mxu0 %v1263
    %1572 = vmatpush.bf16.msra.mxu0 %v1259
    %1573 = vmatpush.bf16.msra.mxu0 %v1255
    %1574 = vmatpush.bf16.msra.mxu0 %v1251
    %1575 = vmatpush.bf16.msra.mxu0 %v1247
    %1576 = vmatpush.bf16.msra.mxu0 %v1243
    %1577 = vmatpush.bf16.msra.mxu0 %v1239
    %1578 = vmatmul.bf16.gmra.mxu0 %v589
    %v1579 = vpop.f32.mrf.mxu0
    %v1580 = vadd.f32 0.0, %v1579
    %v1581 = vpop.f32.mrf.mxu0
    %v1582 = vadd.f32 0.0, %v1581
    %1583 = vmatmul.bf16.gmra.mxu0 %v593
    %v1584 = vpop.f32.mrf.mxu0
    %v1585 = vadd.f32 0.0, %v1584
    %v1586 = vpop.f32.mrf.mxu0
    %v1587 = vadd.f32 0.0, %v1586
    %1588 = vdwg.mxu0
    %1589 = vmatpush.bf16.msra.mxu0 %v1299
    %1590 = vmatpush.bf16.msra.mxu0 %v1295
    %1591 = vmatpush.bf16.msra.mxu0 %v1291
    %1592 = vmatpush.bf16.msra.mxu0 %v1287
    %1593 = vmatpush.bf16.msra.mxu0 %v1283
    %1594 = vmatpush.bf16.msra.mxu0 %v1279
    %1595 = vmatpush.bf16.msra.mxu0 %v1275
    %1596 = vmatpush.bf16.msra.mxu0 %v1271
    %1597 = vmatmul.bf16.gmra.mxu0 %v590
    %v1598 = vpop.f32.mrf.mxu0
    %v1599 = vadd.f32 %v1580, %v1598
    %v1600 = vpop.f32.mrf.mxu0
    %v1601 = vadd.f32 %v1582, %v1600
    %1602 = vmatmul.bf16.gmra.mxu0 %v594
    %v1603 = vpop.f32.mrf.mxu0
    %v1604 = vadd.f32 %v1585, %v1603
    %v1605 = vpop.f32.mrf.mxu0
    %v1606 = vadd.f32 %v1587, %v1605
    %1607 = vdwg.mxu0
    %1608 = vmatpush.bf16.msra.mxu0 %v1331
    %1609 = vmatpush.bf16.msra.mxu0 %v1327
    %1610 = vmatpush.bf16.msra.mxu0 %v1323
    %1611 = vmatpush.bf16.msra.mxu0 %v1319
    %1612 = vmatpush.bf16.msra.mxu0 %v1315
    %1613 = vmatpush.bf16.msra.mxu0 %v1311
    %1614 = vmatpush.bf16.msra.mxu0 %v1307
    %1615 = vmatpush.bf16.msra.mxu0 %v1303
    %1616 = vmatmul.bf16.gmra.mxu0 %v591
    %v1617 = vpop.f32.mrf.mxu0
    %v1618 = vadd.f32 %v1599, %v1617
    %v1619 = vpop.f32.mrf.mxu0
    %v1620 = vadd.f32 %v1601, %v1619
    %1621 = vmatmul.bf16.gmra.mxu0 %v595
    %v1622 = vpop.f32.mrf.mxu0
    %v1623 = vadd.f32 %v1604, %v1622
    %v1624 = vpop.f32.mrf.mxu0
    %v1625 = vadd.f32 %v1606, %v1624
    %1626 = vdwg.mxu0
    %1627 = vmatpush.bf16.msra.mxu0 %v1363
    %1628 = vmatpush.bf16.msra.mxu0 %v1359
    %1629 = vmatpush.bf16.msra.mxu0 %v1355
    %1630 = vmatpush.bf16.msra.mxu0 %v1351
    %1631 = vmatpush.bf16.msra.mxu0 %v1347
    %1632 = vmatpush.bf16.msra.mxu0 %v1343
    %1633 = vmatpush.bf16.msra.mxu0 %v1339
    %1634 = vmatpush.bf16.msra.mxu0 %v1335
    %1635 = vmatmul.bf16.gmra.mxu0 %v592
    %v1636 = vpop.f32.mrf.mxu0
    %v1637 = vadd.f32 %v1618, %v1636
    %v1638 = vpop.f32.mrf.mxu0
    %v1639 = vadd.f32 %v1620, %v1638
    %1640 = vmatmul.bf16.gmra.mxu0 %v596
    %v1641 = vpop.f32.mrf.mxu0
    %v1642 = vadd.f32 %v1623, %v1641
    %v1643 = vpop.f32.mrf.mxu0
    %v1644 = vadd.f32 %v1625, %v1643
    %1645 = vdwg.mxu0
    %1646 = vmatpush.bf16.msra.mxu0 %v1268
    %1647 = vmatpush.bf16.msra.mxu0 %v1264
    %1648 = vmatpush.bf16.msra.mxu0 %v1260
    %1649 = vmatpush.bf16.msra.mxu0 %v1256
    %1650 = vmatpush.bf16.msra.mxu0 %v1252
    %1651 = vmatpush.bf16.msra.mxu0 %v1248
    %1652 = vmatpush.bf16.msra.mxu0 %v1244
    %1653 = vmatpush.bf16.msra.mxu0 %v1240
    %1654 = vmatmul.bf16.gmra.mxu0 %v589
    %v1655 = vpop.f32.mrf.mxu0
    %v1656 = vadd.f32 0.0, %v1655
    %v1657 = vpop.f32.mrf.mxu0
    %v1658 = vadd.f32 0.0, %v1657
    %1659 = vmatmul.bf16.gmra.mxu0 %v593
    %v1660 = vpop.f32.mrf.mxu0
    %v1661 = vadd.f32 0.0, %v1660
    %v1662 = vpop.f32.mrf.mxu0
    %v1663 = vadd.f32 0.0, %v1662
    %1664 = vdwg.mxu0
    %1665 = vmatpush.bf16.msra.mxu0 %v1300
    %1666 = vmatpush.bf16.msra.mxu0 %v1296
    %1667 = vmatpush.bf16.msra.mxu0 %v1292
    %1668 = vmatpush.bf16.msra.mxu0 %v1288
    %1669 = vmatpush.bf16.msra.mxu0 %v1284
    %1670 = vmatpush.bf16.msra.mxu0 %v1280
    %1671 = vmatpush.bf16.msra.mxu0 %v1276
    %1672 = vmatpush.bf16.msra.mxu0 %v1272
    %1673 = vmatmul.bf16.gmra.mxu0 %v590
    %v1674 = vpop.f32.mrf.mxu0
    %v1675 = vadd.f32 %v1656, %v1674
    %v1676 = vpop.f32.mrf.mxu0
    %v1677 = vadd.f32 %v1658, %v1676
    %1678 = vmatmul.bf16.gmra.mxu0 %v594
    %v1679 = vpop.f32.mrf.mxu0
    %v1680 = vadd.f32 %v1661, %v1679
    %v1681 = vpop.f32.mrf.mxu0
    %v1682 = vadd.f32 %v1663, %v1681
    %1683 = vdwg.mxu0
    %1684 = vmatpush.bf16.msra.mxu0 %v1332
    %1685 = vmatpush.bf16.msra.mxu0 %v1328
    %1686 = vmatpush.bf16.msra.mxu0 %v1324
    %1687 = vmatpush.bf16.msra.mxu0 %v1320
    %1688 = vmatpush.bf16.msra.mxu0 %v1316
    %1689 = vmatpush.bf16.msra.mxu0 %v1312
    %1690 = vmatpush.bf16.msra.mxu0 %v1308
    %1691 = vmatpush.bf16.msra.mxu0 %v1304
    %1692 = vmatmul.bf16.gmra.mxu0 %v591
    %v1693 = vpop.f32.mrf.mxu0
    %v1694 = vadd.f32 %v1675, %v1693
    %v1695 = vpop.f32.mrf.mxu0
    %v1696 = vadd.f32 %v1677, %v1695
    %1697 = vmatmul.bf16.gmra.mxu0 %v595
    %v1698 = vpop.f32.mrf.mxu0
    %v1699 = vadd.f32 %v1680, %v1698
    %v1700 = vpop.f32.mrf.mxu0
    %v1701 = vadd.f32 %v1682, %v1700
    %1702 = vdwg.mxu0
    %1703 = vmatpush.bf16.msra.mxu0 %v1364
    %1704 = vmatpush.bf16.msra.mxu0 %v1360
    %1705 = vmatpush.bf16.msra.mxu0 %v1356
    %1706 = vmatpush.bf16.msra.mxu0 %v1352
    %1707 = vmatpush.bf16.msra.mxu0 %v1348
    %1708 = vmatpush.bf16.msra.mxu0 %v1344
    %1709 = vmatpush.bf16.msra.mxu0 %v1340
    %1710 = vmatpush.bf16.msra.mxu0 %v1336
    %1711 = vmatmul.bf16.gmra.mxu0 %v592
    %v1712 = vpop.f32.mrf.mxu0
    %v1713 = vadd.f32 %v1694, %v1712
    %v1714 = vpop.f32.mrf.mxu0
    %v1715 = vadd.f32 %v1696, %v1714
    %1716 = vmatmul.bf16.gmra.mxu0 %v596
    %v1717 = vpop.f32.mrf.mxu0
    %v1718 = vadd.f32 %v1699, %v1717
    %v1719 = vpop.f32.mrf.mxu0
    %v1720 = vadd.f32 %v1701, %v1719
    %1721 = vdwg.mxu0
    %1722 = vmatpush.bf16.msra.mxu0 %v1269
    %1723 = vmatpush.bf16.msra.mxu0 %v1265
    %1724 = vmatpush.bf16.msra.mxu0 %v1261
    %1725 = vmatpush.bf16.msra.mxu0 %v1257
    %1726 = vmatpush.bf16.msra.mxu0 %v1253
    %1727 = vmatpush.bf16.msra.mxu0 %v1249
    %1728 = vmatpush.bf16.msra.mxu0 %v1245
    %1729 = vmatpush.bf16.msra.mxu0 %v1241
    %1730 = vmatmul.bf16.gmra.mxu0 %v589
    %v1731 = vpop.f32.mrf.mxu0
    %v1732 = vadd.f32 0.0, %v1731
    %v1733 = vpop.f32.mrf.mxu0
    %v1734 = vadd.f32 0.0, %v1733
    %1735 = vmatmul.bf16.gmra.mxu0 %v593
    %v1736 = vpop.f32.mrf.mxu0
    %v1737 = vadd.f32 0.0, %v1736
    %v1738 = vpop.f32.mrf.mxu0
    %v1739 = vadd.f32 0.0, %v1738
    %1740 = vdwg.mxu0
    %1741 = vmatpush.bf16.msra.mxu0 %v1301
    %1742 = vmatpush.bf16.msra.mxu0 %v1297
    %1743 = vmatpush.bf16.msra.mxu0 %v1293
    %1744 = vmatpush.bf16.msra.mxu0 %v1289
    %1745 = vmatpush.bf16.msra.mxu0 %v1285
    %1746 = vmatpush.bf16.msra.mxu0 %v1281
    %1747 = vmatpush.bf16.msra.mxu0 %v1277
    %1748 = vmatpush.bf16.msra.mxu0 %v1273
    %1749 = vmatmul.bf16.gmra.mxu0 %v590
    %v1750 = vpop.f32.mrf.mxu0
    %v1751 = vadd.f32 %v1732, %v1750
    %v1752 = vpop.f32.mrf.mxu0
    %v1753 = vadd.f32 %v1734, %v1752
    %1754 = vmatmul.bf16.gmra.mxu0 %v594
    %v1755 = vpop.f32.mrf.mxu0
    %v1756 = vadd.f32 %v1737, %v1755
    %v1757 = vpop.f32.mrf.mxu0
    %v1758 = vadd.f32 %v1739, %v1757
    %1759 = vdwg.mxu0
    %1760 = vmatpush.bf16.msra.mxu0 %v1333
    %1761 = vmatpush.bf16.msra.mxu0 %v1329
    %1762 = vmatpush.bf16.msra.mxu0 %v1325
    %1763 = vmatpush.bf16.msra.mxu0 %v1321
    %1764 = vmatpush.bf16.msra.mxu0 %v1317
    %1765 = vmatpush.bf16.msra.mxu0 %v1313
    %1766 = vmatpush.bf16.msra.mxu0 %v1309
    %1767 = vmatpush.bf16.msra.mxu0 %v1305
    %1768 = vmatmul.bf16.gmra.mxu0 %v591
    %v1769 = vpop.f32.mrf.mxu0
    %v1770 = vadd.f32 %v1751, %v1769
    %v1771 = vpop.f32.mrf.mxu0
    %v1772 = vadd.f32 %v1753, %v1771
    %1773 = vmatmul.bf16.gmra.mxu0 %v595
    %v1774 = vpop.f32.mrf.mxu0
    %v1775 = vadd.f32 %v1756, %v1774
    %v1776 = vpop.f32.mrf.mxu0
    %v1777 = vadd.f32 %v1758, %v1776
    %1778 = vdwg.mxu0
    %1779 = vmatpush.bf16.msra.mxu0 %v1365
    %1780 = vmatpush.bf16.msra.mxu0 %v1361
    %1781 = vmatpush.bf16.msra.mxu0 %v1357
    %1782 = vmatpush.bf16.msra.mxu0 %v1353
    %1783 = vmatpush.bf16.msra.mxu0 %v1349
    %1784 = vmatpush.bf16.msra.mxu0 %v1345
    %1785 = vmatpush.bf16.msra.mxu0 %v1341
    %1786 = vmatpush.bf16.msra.mxu0 %v1337
    %1787 = vmatmul.bf16.gmra.mxu0 %v592
    %v1788 = vpop.f32.mrf.mxu0
    %v1789 = vadd.f32 %v1770, %v1788
    %v1790 = vpop.f32.mrf.mxu0
    %v1791 = vadd.f32 %v1772, %v1790
    %1792 = vmatmul.bf16.gmra.mxu0 %v596
    %v1793 = vpop.f32.mrf.mxu0
    %v1794 = vadd.f32 %v1775, %v1793
    %v1795 = vpop.f32.mrf.mxu0
    %v1796 = vadd.f32 %v1777, %v1795
    %1797 = vdwg.mxu0
    %v1926 = vunpack.c.l.b16 %v597
    %v1927 = vunpack.c.h.b16 %v597
    %v1928 = vunpack.c.l.b16 %v598
    %v1929 = vunpack.c.h.b16 %v598
    %v1930 = vunpack.c.l.b16 %v599
    %v1931 = vunpack.c.h.b16 %v599
    %v1932 = vunpack.c.l.b16 %v600
    %v1933 = vunpack.c.h.b16 %v600
    %v1934 = vunpack.c.l.b16 %v601
    %v1935 = vunpack.c.h.b16 %v601
    %v1936 = vunpack.c.l.b16 %v602
    %v1937 = vunpack.c.h.b16 %v602
    %v1938 = vunpack.c.l.b16 %v603
    %v1939 = vunpack.c.h.b16 %v603
    %v1940 = vunpack.c.l.b16 %v604
    %v1941 = vunpack.c.h.b16 %v604
    %v1942 = vunpack.c.l.b16 %v605
    %v1943 = vunpack.c.h.b16 %v605
    %v1944 = vunpack.c.l.b16 %v606
    %v1945 = vunpack.c.h.b16 %v606
    %v1946 = vunpack.c.l.b16 %v607
    %v1947 = vunpack.c.h.b16 %v607
    %v1948 = vunpack.c.l.b16 %v608
    %v1949 = vunpack.c.h.b16 %v608
    %v1950 = vunpack.c.l.b16 %v609
    %v1951 = vunpack.c.h.b16 %v609
    %v1952 = vunpack.c.l.b16 %v610
    %v1953 = vunpack.c.h.b16 %v610
    %v1954 = vunpack.c.l.b16 %v611
    %v1955 = vunpack.c.h.b16 %v611
    %v1956 = vunpack.c.l.b16 %v612
    %v1957 = vunpack.c.h.b16 %v612
    %v1958 = vunpack.c.l.b16 %v613
    %v1959 = vunpack.c.h.b16 %v613
    %v1960 = vunpack.c.l.b16 %v614
    %v1961 = vunpack.c.h.b16 %v614
    %v1962 = vunpack.c.l.b16 %v615
    %v1963 = vunpack.c.h.b16 %v615
    %v1964 = vunpack.c.l.b16 %v616
    %v1965 = vunpack.c.h.b16 %v616
    %v1966 = vunpack.c.l.b16 %v617
    %v1967 = vunpack.c.h.b16 %v617
    %v1968 = vunpack.c.l.b16 %v618
    %v1969 = vunpack.c.h.b16 %v618
    %v1970 = vunpack.c.l.b16 %v619
    %v1971 = vunpack.c.h.b16 %v619
    %v1972 = vunpack.c.l.b16 %v620
    %v1973 = vunpack.c.h.b16 %v620
    %v1974 = vunpack.c.l.b16 %v621
    %v1975 = vunpack.c.h.b16 %v621
    %v1976 = vunpack.c.l.b16 %v622
    %v1977 = vunpack.c.h.b16 %v622
    %v1978 = vunpack.c.l.b16 %v623
    %v1979 = vunpack.c.h.b16 %v623
    %v1980 = vunpack.c.l.b16 %v624
    %v1981 = vunpack.c.h.b16 %v624
    %v1982 = vunpack.c.l.b16 %v625
    %v1983 = vunpack.c.h.b16 %v625
    %v1984 = vunpack.c.l.b16 %v626
    %v1985 = vunpack.c.h.b16 %v626
    %v1986 = vunpack.c.l.b16 %v627
    %v1987 = vunpack.c.h.b16 %v627
    %v1988 = vunpack.c.l.b16 %v628
    %v1989 = vunpack.c.h.b16 %v628
    %v1990 = vunpack.c.l.b16 %v629
    %v1991 = vunpack.c.h.b16 %v629
    %v1992 = vunpack.c.l.b16 %v630
    %v1993 = vunpack.c.h.b16 %v630
    %v1994 = vunpack.c.l.b16 %v631
    %v1995 = vunpack.c.h.b16 %v631
    %v1996 = vunpack.c.l.b16 %v632
    %v1997 = vunpack.c.h.b16 %v632
    %v1998 = vunpack.c.l.b16 %v633
    %v1999 = vunpack.c.h.b16 %v633
    %v2000 = vunpack.c.l.b16 %v634
    %v2001 = vunpack.c.h.b16 %v634
    %v2002 = vunpack.c.l.b16 %v635
    %v2003 = vunpack.c.h.b16 %v635
    %v2004 = vunpack.c.l.b16 %v636
    %v2005 = vunpack.c.h.b16 %v636
    %v2006 = vunpack.c.l.b16 %v637
    %v2007 = vunpack.c.h.b16 %v637
    %v2008 = vunpack.c.l.b16 %v638
    %v2009 = vunpack.c.h.b16 %v638
    %v2010 = vunpack.c.l.b16 %v639
    %v2011 = vunpack.c.h.b16 %v639
    %v2012 = vunpack.c.l.b16 %v640
    %v2013 = vunpack.c.h.b16 %v640
    %v2014 = vunpack.c.l.b16 %v641
    %v2015 = vunpack.c.h.b16 %v641
    %v2016 = vunpack.c.l.b16 %v642
    %v2017 = vunpack.c.h.b16 %v642
    %v2018 = vunpack.c.l.b16 %v643
    %v2019 = vunpack.c.h.b16 %v643
    %v2020 = vunpack.c.l.b16 %v644
    %v2021 = vunpack.c.h.b16 %v644
    %v2022 = vunpack.c.l.b16 %v645
    %v2023 = vunpack.c.h.b16 %v645
    %v2024 = vunpack.c.l.b16 %v646
    %v2025 = vunpack.c.h.b16 %v646
    %v2026 = vunpack.c.l.b16 %v647
    %v2027 = vunpack.c.h.b16 %v647
    %v2028 = vunpack.c.l.b16 %v648
    %v2029 = vunpack.c.h.b16 %v648
    %v2030 = vunpack.c.l.b16 %v649
    %v2031 = vunpack.c.h.b16 %v649
    %v2032 = vunpack.c.l.b16 %v650
    %v2033 = vunpack.c.h.b16 %v650
    %v2034 = vunpack.c.l.b16 %v651
    %v2035 = vunpack.c.h.b16 %v651
    %v2036 = vunpack.c.l.b16 %v652
    %v2037 = vunpack.c.h.b16 %v652
    %v2038 = vunpack.c.l.b16 %v653
    %v2039 = vunpack.c.h.b16 %v653
    %v2040 = vunpack.c.l.b16 %v654
    %v2041 = vunpack.c.h.b16 %v654
    %v2042 = vunpack.c.l.b16 %v655
    %v2043 = vunpack.c.h.b16 %v655
    %v2044 = vunpack.c.l.b16 %v656
    %v2045 = vunpack.c.h.b16 %v656
    %v2046 = vunpack.c.l.b16 %v657
    %v2047 = vunpack.c.h.b16 %v657
    %v2048 = vunpack.c.l.b16 %v658
    %v2049 = vunpack.c.h.b16 %v658
    %v2050 = vunpack.c.l.b16 %v659
    %v2051 = vunpack.c.h.b16 %v659
    %v2052 = vunpack.c.l.b16 %v660
    %v2053 = vunpack.c.h.b16 %v660
    %v2054 = vunpack.c.l.b16 %v661
    %v2055 = vunpack.c.h.b16 %v661
    %v2056 = vunpack.c.l.b16 %v662
    %v2057 = vunpack.c.h.b16 %v662
    %v2058 = vunpack.c.l.b16 %v663
    %v2059 = vunpack.c.h.b16 %v663
    %v2060 = vunpack.c.l.b16 %v664
    %v2061 = vunpack.c.h.b16 %v664
    %v2062 = vunpack.c.l.b16 %v665
    %v2063 = vunpack.c.h.b16 %v665
    %v2064 = vunpack.c.l.b16 %v666
    %v2065 = vunpack.c.h.b16 %v666
    %v2066 = vunpack.c.l.b16 %v667
    %v2067 = vunpack.c.h.b16 %v667
    %v2068 = vunpack.c.l.b16 %v668
    %v2069 = vunpack.c.h.b16 %v668
    %v2070 = vunpack.c.l.b16 %v669
    %v2071 = vunpack.c.h.b16 %v669
    %v2072 = vunpack.c.l.b16 %v670
    %v2073 = vunpack.c.h.b16 %v670
    %v2074 = vunpack.c.l.b16 %v671
    %v2075 = vunpack.c.h.b16 %v671
    %v2076 = vunpack.c.l.b16 %v672
    %v2077 = vunpack.c.h.b16 %v672
    %v2078 = vunpack.c.l.b16 %v673
    %v2079 = vunpack.c.h.b16 %v673
    %v2080 = vunpack.c.l.b16 %v674
    %v2081 = vunpack.c.h.b16 %v674
    %v2082 = vunpack.c.l.b16 %v675
    %v2083 = vunpack.c.h.b16 %v675
    %v2084 = vunpack.c.l.b16 %v676
    %v2085 = vunpack.c.h.b16 %v676
    %v2086 = vunpack.c.l.b16 %v677
    %v2087 = vunpack.c.h.b16 %v677
    %v2088 = vunpack.c.l.b16 %v678
    %v2089 = vunpack.c.h.b16 %v678
    %v2090 = vunpack.c.l.b16 %v679
    %v2091 = vunpack.c.h.b16 %v679
    %v2092 = vunpack.c.l.b16 %v680
    %v2093 = vunpack.c.h.b16 %v680
    %v2094 = vunpack.c.l.b16 %v681
    %v2095 = vunpack.c.h.b16 %v681
    %v2096 = vunpack.c.l.b16 %v682
    %v2097 = vunpack.c.h.b16 %v682
    %v2098 = vunpack.c.l.b16 %v683
    %v2099 = vunpack.c.h.b16 %v683
    %v2100 = vunpack.c.l.b16 %v684
    %v2101 = vunpack.c.h.b16 %v684
    %v2102 = vunpack.c.l.b16 %v685
    %v2103 = vunpack.c.h.b16 %v685
    %v2104 = vunpack.c.l.b16 %v686
    %v2105 = vunpack.c.h.b16 %v686
    %v2106 = vunpack.c.l.b16 %v687
    %v2107 = vunpack.c.h.b16 %v687
    %v2108 = vunpack.c.l.b16 %v688
    %v2109 = vunpack.c.h.b16 %v688
    %v2110 = vunpack.c.l.b16 %v689
    %v2111 = vunpack.c.h.b16 %v689
    %v2112 = vunpack.c.l.b16 %v690
    %v2113 = vunpack.c.h.b16 %v690
    %v2114 = vunpack.c.l.b16 %v691
    %v2115 = vunpack.c.h.b16 %v691
    %v2116 = vunpack.c.l.b16 %v692
    %v2117 = vunpack.c.h.b16 %v692
    %v2118 = vunpack.c.l.b16 %v693
    %v2119 = vunpack.c.h.b16 %v693
    %v2120 = vunpack.c.l.b16 %v694
    %v2121 = vunpack.c.h.b16 %v694
    %v2122 = vunpack.c.l.b16 %v695
    %v2123 = vunpack.c.h.b16 %v695
    %v2124 = vunpack.c.l.b16 %v696
    %v2125 = vunpack.c.h.b16 %v696
    %v2126 = vunpack.c.l.b16 %v697
    %v2127 = vunpack.c.h.b16 %v697
    %v2128 = vunpack.c.l.b16 %v698
    %v2129 = vunpack.c.h.b16 %v698
    %v2130 = vunpack.c.l.b16 %v699
    %v2131 = vunpack.c.h.b16 %v699
    %v2132 = vunpack.c.l.b16 %v700
    %v2133 = vunpack.c.h.b16 %v700
    %v2134 = vunpack.c.l.b16 %v701
    %v2135 = vunpack.c.h.b16 %v701
    %v2136 = vunpack.c.l.b16 %v702
    %v2137 = vunpack.c.h.b16 %v702
    %v2138 = vunpack.c.l.b16 %v703
    %v2139 = vunpack.c.h.b16 %v703
    %v2140 = vunpack.c.l.b16 %v704
    %v2141 = vunpack.c.h.b16 %v704
    %v2142 = vunpack.c.l.b16 %v705
    %v2143 = vunpack.c.h.b16 %v705
    %v2144 = vunpack.c.l.b16 %v706
    %v2145 = vunpack.c.h.b16 %v706
    %v2146 = vunpack.c.l.b16 %v707
    %v2147 = vunpack.c.h.b16 %v707
    %v2148 = vunpack.c.l.b16 %v708
    %v2149 = vunpack.c.h.b16 %v708
    %v2150 = vunpack.c.l.b16 %v709
    %v2151 = vunpack.c.h.b16 %v709
    %v2152 = vunpack.c.l.b16 %v710
    %v2153 = vunpack.c.h.b16 %v710
    %v2154 = vunpack.c.l.b16 %v711
    %v2155 = vunpack.c.h.b16 %v711
    %v2156 = vunpack.c.l.b16 %v712
    %v2157 = vunpack.c.h.b16 %v712
    %v2158 = vunpack.c.l.b16 %v713
    %v2159 = vunpack.c.h.b16 %v713
    %v2160 = vunpack.c.l.b16 %v714
    %v2161 = vunpack.c.h.b16 %v714
    %v2162 = vunpack.c.l.b16 %v715
    %v2163 = vunpack.c.h.b16 %v715
    %v2164 = vunpack.c.l.b16 %v716
    %v2165 = vunpack.c.h.b16 %v716
    %v2166 = vunpack.c.l.b16 %v717
    %v2167 = vunpack.c.h.b16 %v717
    %v2168 = vunpack.c.l.b16 %v718
    %v2169 = vunpack.c.h.b16 %v718
    %v2170 = vunpack.c.l.b16 %v719
    %v2171 = vunpack.c.h.b16 %v719
    %v2172 = vunpack.c.l.b16 %v720
    %v2173 = vunpack.c.h.b16 %v720
    %v2174 = vunpack.c.l.b16 %v721
    %v2175 = vunpack.c.h.b16 %v721
    %v2176 = vunpack.c.l.b16 %v722
    %v2177 = vunpack.c.h.b16 %v722
    %v2178 = vunpack.c.l.b16 %v723
    %v2179 = vunpack.c.h.b16 %v723
    %v2180 = vunpack.c.l.b16 %v724
    %v2181 = vunpack.c.h.b16 %v724
    %v2182 = vpack.c.b16 %v1930, %v1926
    %v2183 = vpack.c.b16 %v1931, %v1927
    %v2184 = vpack.c.b16 %v1932, %v1928
    %v2185 = vpack.c.b16 %v1933, %v1929
    %v2186 = vpack.c.b16 %v1938, %v1934
    %v2187 = vpack.c.b16 %v1939, %v1935
    %v2188 = vpack.c.b16 %v1940, %v1936
    %v2189 = vpack.c.b16 %v1941, %v1937
    %v2190 = vpack.c.b16 %v1946, %v1942
    %v2191 = vpack.c.b16 %v1947, %v1943
    %v2192 = vpack.c.b16 %v1948, %v1944
    %v2193 = vpack.c.b16 %v1949, %v1945
    %v2194 = vpack.c.b16 %v1954, %v1950
    %v2195 = vpack.c.b16 %v1955, %v1951
    %v2196 = vpack.c.b16 %v1956, %v1952
    %v2197 = vpack.c.b16 %v1957, %v1953
    %v2198 = vpack.c.b16 %v1962, %v1958
    %v2199 = vpack.c.b16 %v1963, %v1959
    %v2200 = vpack.c.b16 %v1964, %v1960
    %v2201 = vpack.c.b16 %v1965, %v1961
    %v2202 = vpack.c.b16 %v1970, %v1966
    %v2203 = vpack.c.b16 %v1971, %v1967
    %v2204 = vpack.c.b16 %v1972, %v1968
    %v2205 = vpack.c.b16 %v1973, %v1969
    %v2206 = vpack.c.b16 %v1978, %v1974
    %v2207 = vpack.c.b16 %v1979, %v1975
    %v2208 = vpack.c.b16 %v1980, %v1976
    %v2209 = vpack.c.b16 %v1981, %v1977
    %v2210 = vpack.c.b16 %v1986, %v1982
    %v2211 = vpack.c.b16 %v1987, %v1983
    %v2212 = vpack.c.b16 %v1988, %v1984
    %v2213 = vpack.c.b16 %v1989, %v1985
    %v2214 = vpack.c.b16 %v1994, %v1990
    %v2215 = vpack.c.b16 %v1995, %v1991
    %v2216 = vpack.c.b16 %v1996, %v1992
    %v2217 = vpack.c.b16 %v1997, %v1993
    %v2218 = vpack.c.b16 %v2002, %v1998
    %v2219 = vpack.c.b16 %v2003, %v1999
    %v2220 = vpack.c.b16 %v2004, %v2000
    %v2221 = vpack.c.b16 %v2005, %v2001
    %v2222 = vpack.c.b16 %v2010, %v2006
    %v2223 = vpack.c.b16 %v2011, %v2007
    %v2224 = vpack.c.b16 %v2012, %v2008
    %v2225 = vpack.c.b16 %v2013, %v2009
    %v2226 = vpack.c.b16 %v2018, %v2014
    %v2227 = vpack.c.b16 %v2019, %v2015
    %v2228 = vpack.c.b16 %v2020, %v2016
    %v2229 = vpack.c.b16 %v2021, %v2017
    %v2230 = vpack.c.b16 %v2026, %v2022
    %v2231 = vpack.c.b16 %v2027, %v2023
    %v2232 = vpack.c.b16 %v2028, %v2024
    %v2233 = vpack.c.b16 %v2029, %v2025
    %v2234 = vpack.c.b16 %v2034, %v2030
    %v2235 = vpack.c.b16 %v2035, %v2031
    %v2236 = vpack.c.b16 %v2036, %v2032
    %v2237 = vpack.c.b16 %v2037, %v2033
    %v2238 = vpack.c.b16 %v2042, %v2038
    %v2239 = vpack.c.b16 %v2043, %v2039
    %v2240 = vpack.c.b16 %v2044, %v2040
    %v2241 = vpack.c.b16 %v2045, %v2041
    %v2242 = vpack.c.b16 %v2050, %v2046
    %v2243 = vpack.c.b16 %v2051, %v2047
    %v2244 = vpack.c.b16 %v2052, %v2048
    %v2245 = vpack.c.b16 %v2053, %v2049
    %v2246 = vpack.c.b16 %v2058, %v2054
    %v2247 = vpack.c.b16 %v2059, %v2055
    %v2248 = vpack.c.b16 %v2060, %v2056
    %v2249 = vpack.c.b16 %v2061, %v2057
    %v2250 = vpack.c.b16 %v2066, %v2062
    %v2251 = vpack.c.b16 %v2067, %v2063
    %v2252 = vpack.c.b16 %v2068, %v2064
    %v2253 = vpack.c.b16 %v2069, %v2065
    %v2254 = vpack.c.b16 %v2074, %v2070
    %v2255 = vpack.c.b16 %v2075, %v2071
    %v2256 = vpack.c.b16 %v2076, %v2072
    %v2257 = vpack.c.b16 %v2077, %v2073
    %v2258 = vpack.c.b16 %v2082, %v2078
    %v2259 = vpack.c.b16 %v2083, %v2079
    %v2260 = vpack.c.b16 %v2084, %v2080
    %v2261 = vpack.c.b16 %v2085, %v2081
    %v2262 = vpack.c.b16 %v2090, %v2086
    %v2263 = vpack.c.b16 %v2091, %v2087
    %v2264 = vpack.c.b16 %v2092, %v2088
    %v2265 = vpack.c.b16 %v2093, %v2089
    %v2266 = vpack.c.b16 %v2098, %v2094
    %v2267 = vpack.c.b16 %v2099, %v2095
    %v2268 = vpack.c.b16 %v2100, %v2096
    %v2269 = vpack.c.b16 %v2101, %v2097
    %v2270 = vpack.c.b16 %v2106, %v2102
    %v2271 = vpack.c.b16 %v2107, %v2103
    %v2272 = vpack.c.b16 %v2108, %v2104
    %v2273 = vpack.c.b16 %v2109, %v2105
    %v2274 = vpack.c.b16 %v2114, %v2110
    %v2275 = vpack.c.b16 %v2115, %v2111
    %v2276 = vpack.c.b16 %v2116, %v2112
    %v2277 = vpack.c.b16 %v2117, %v2113
    %v2278 = vpack.c.b16 %v2122, %v2118
    %v2279 = vpack.c.b16 %v2123, %v2119
    %v2280 = vpack.c.b16 %v2124, %v2120
    %v2281 = vpack.c.b16 %v2125, %v2121
    %v2282 = vpack.c.b16 %v2130, %v2126
    %v2283 = vpack.c.b16 %v2131, %v2127
    %v2284 = vpack.c.b16 %v2132, %v2128
    %v2285 = vpack.c.b16 %v2133, %v2129
    %v2286 = vpack.c.b16 %v2138, %v2134
    %v2287 = vpack.c.b16 %v2139, %v2135
    %v2288 = vpack.c.b16 %v2140, %v2136
    %v2289 = vpack.c.b16 %v2141, %v2137
    %v2290 = vpack.c.b16 %v2146, %v2142
    %v2291 = vpack.c.b16 %v2147, %v2143
    %v2292 = vpack.c.b16 %v2148, %v2144
    %v2293 = vpack.c.b16 %v2149, %v2145
    %v2294 = vpack.c.b16 %v2154, %v2150
    %v2295 = vpack.c.b16 %v2155, %v2151
    %v2296 = vpack.c.b16 %v2156, %v2152
    %v2297 = vpack.c.b16 %v2157, %v2153
    %v2298 = vpack.c.b16 %v2162, %v2158
    %v2299 = vpack.c.b16 %v2163, %v2159
    %v2300 = vpack.c.b16 %v2164, %v2160
    %v2301 = vpack.c.b16 %v2165, %v2161
    %v2302 = vpack.c.b16 %v2170, %v2166
    %v2303 = vpack.c.b16 %v2171, %v2167
    %v2304 = vpack.c.b16 %v2172, %v2168
    %v2305 = vpack.c.b16 %v2173, %v2169
    %v2306 = vpack.c.b16 %v2178, %v2174
    %v2307 = vpack.c.b16 %v2179, %v2175
    %v2308 = vpack.c.b16 %v2180, %v2176
    %v2309 = vpack.c.b16 %v2181, %v2177
    %2438 = vmatpush.bf16.msra.mxu0 %v2210
    %2439 = vmatpush.bf16.msra.mxu0 %v2206
    %2440 = vmatpush.bf16.msra.mxu0 %v2202
    %2441 = vmatpush.bf16.msra.mxu0 %v2198
    %2442 = vmatpush.bf16.msra.mxu0 %v2194
    %2443 = vmatpush.bf16.msra.mxu0 %v2190
    %2444 = vmatpush.bf16.msra.mxu0 %v2186
    %2445 = vmatpush.bf16.msra.mxu0 %v2182
    %2446 = vmatmul.bf16.gmra.mxu0 %v512
    %v2447 = vpop.f32.mrf.mxu0
    %v2448 = vadd.f32 %v1561, %v2447
    %v2449 = vpop.f32.mrf.mxu0
    %v2450 = vadd.f32 %v1563, %v2449
    %2451 = vmatmul.bf16.gmra.mxu0 %v516
    %v2452 = vpop.f32.mrf.mxu0
    %v2453 = vadd.f32 %v1566, %v2452
    %v2454 = vpop.f32.mrf.mxu0
    %v2455 = vadd.f32 %v1568, %v2454
    %2456 = vdwg.mxu0
    %2457 = vmatpush.bf16.msra.mxu0 %v2242
    %2458 = vmatpush.bf16.msra.mxu0 %v2238
    %2459 = vmatpush.bf16.msra.mxu0 %v2234
    %2460 = vmatpush.bf16.msra.mxu0 %v2230
    %2461 = vmatpush.bf16.msra.mxu0 %v2226
    %2462 = vmatpush.bf16.msra.mxu0 %v2222
    %2463 = vmatpush.bf16.msra.mxu0 %v2218
    %2464 = vmatpush.bf16.msra.mxu0 %v2214
    %2465 = vmatmul.bf16.gmra.mxu0 %v513
    %v2466 = vpop.f32.mrf.mxu0
    %v2467 = vadd.f32 %v2448, %v2466
    %v2468 = vpop.f32.mrf.mxu0
    %v2469 = vadd.f32 %v2450, %v2468
    %2470 = vmatmul.bf16.gmra.mxu0 %v517
    %v2471 = vpop.f32.mrf.mxu0
    %v2472 = vadd.f32 %v2453, %v2471
    %v2473 = vpop.f32.mrf.mxu0
    %v2474 = vadd.f32 %v2455, %v2473
    %2475 = vdwg.mxu0
    %2476 = vmatpush.bf16.msra.mxu0 %v2274
    %2477 = vmatpush.bf16.msra.mxu0 %v2270
    %2478 = vmatpush.bf16.msra.mxu0 %v2266
    %2479 = vmatpush.bf16.msra.mxu0 %v2262
    %2480 = vmatpush.bf16.msra.mxu0 %v2258
    %2481 = vmatpush.bf16.msra.mxu0 %v2254
    %2482 = vmatpush.bf16.msra.mxu0 %v2250
    %2483 = vmatpush.bf16.msra.mxu0 %v2246
    %2484 = vmatmul.bf16.gmra.mxu0 %v514
    %v2485 = vpop.f32.mrf.mxu0
    %v2486 = vadd.f32 %v2467, %v2485
    %v2487 = vpop.f32.mrf.mxu0
    %v2488 = vadd.f32 %v2469, %v2487
    %2489 = vmatmul.bf16.gmra.mxu0 %v518
    %v2490 = vpop.f32.mrf.mxu0
    %v2491 = vadd.f32 %v2472, %v2490
    %v2492 = vpop.f32.mrf.mxu0
    %v2493 = vadd.f32 %v2474, %v2492
    %2494 = vdwg.mxu0
    %2495 = vmatpush.bf16.msra.mxu0 %v2306
    %2496 = vmatpush.bf16.msra.mxu0 %v2302
    %2497 = vmatpush.bf16.msra.mxu0 %v2298
    %2498 = vmatpush.bf16.msra.mxu0 %v2294
    %2499 = vmatpush.bf16.msra.mxu0 %v2290
    %2500 = vmatpush.bf16.msra.mxu0 %v2286
    %2501 = vmatpush.bf16.msra.mxu0 %v2282
    %2502 = vmatpush.bf16.msra.mxu0 %v2278
    %2503 = vmatmul.bf16.gmra.mxu0 %v515
    %v2504 = vpop.f32.mrf.mxu0
    %v2505 = vadd.f32 %v2486, %v2504
    %v2506 = vpop.f32.mrf.mxu0
    %v2507 = vadd.f32 %v2488, %v2506
    %2508 = vmatmul.bf16.gmra.mxu0 %v519
    %v2509 = vpop.f32.mrf.mxu0
    %v2510 = vadd.f32 %v2491, %v2509
    %v2511 = vpop.f32.mrf.mxu0
    %v2512 = vadd.f32 %v2493, %v2511
    %2513 = vdwg.mxu0
    %2514 = vmatpush.bf16.msra.mxu0 %v2211
    %2515 = vmatpush.bf16.msra.mxu0 %v2207
    %2516 = vmatpush.bf16.msra.mxu0 %v2203
    %2517 = vmatpush.bf16.msra.mxu0 %v2199
    %2518 = vmatpush.bf16.msra.mxu0 %v2195
    %2519 = vmatpush.bf16.msra.mxu0 %v2191
    %2520 = vmatpush.bf16.msra.mxu0 %v2187
    %2521 = vmatpush.bf16.msra.mxu0 %v2183
    %2522 = vmatmul.bf16.gmra.mxu0 %v512
    %v2523 = vpop.f32.mrf.mxu0
    %v2524 = vadd.f32 %v1637, %v2523
    %v2525 = vpop.f32.mrf.mxu0
    %v2526 = vadd.f32 %v1639, %v2525
    %2527 = vmatmul.bf16.gmra.mxu0 %v516
    %v2528 = vpop.f32.mrf.mxu0
    %v2529 = vadd.f32 %v1642, %v2528
    %v2530 = vpop.f32.mrf.mxu0
    %v2531 = vadd.f32 %v1644, %v2530
    %2532 = vdwg.mxu0
    %2533 = vmatpush.bf16.msra.mxu0 %v2243
    %2534 = vmatpush.bf16.msra.mxu0 %v2239
    %2535 = vmatpush.bf16.msra.mxu0 %v2235
    %2536 = vmatpush.bf16.msra.mxu0 %v2231
    %2537 = vmatpush.bf16.msra.mxu0 %v2227
    %2538 = vmatpush.bf16.msra.mxu0 %v2223
    %2539 = vmatpush.bf16.msra.mxu0 %v2219
    %2540 = vmatpush.bf16.msra.mxu0 %v2215
    %2541 = vmatmul.bf16.gmra.mxu0 %v513
    %v2542 = vpop.f32.mrf.mxu0
    %v2543 = vadd.f32 %v2524, %v2542
    %v2544 = vpop.f32.mrf.mxu0
    %v2545 = vadd.f32 %v2526, %v2544
    %2546 = vmatmul.bf16.gmra.mxu0 %v517
    %v2547 = vpop.f32.mrf.mxu0
    %v2548 = vadd.f32 %v2529, %v2547
    %v2549 = vpop.f32.mrf.mxu0
    %v2550 = vadd.f32 %v2531, %v2549
    %2551 = vdwg.mxu0
    %2552 = vmatpush.bf16.msra.mxu0 %v2275
    %2553 = vmatpush.bf16.msra.mxu0 %v2271
    %2554 = vmatpush.bf16.msra.mxu0 %v2267
    %2555 = vmatpush.bf16.msra.mxu0 %v2263
    %2556 = vmatpush.bf16.msra.mxu0 %v2259
    %2557 = vmatpush.bf16.msra.mxu0 %v2255
    %2558 = vmatpush.bf16.msra.mxu0 %v2251
    %2559 = vmatpush.bf16.msra.mxu0 %v2247
    %2560 = vmatmul.bf16.gmra.mxu0 %v514
    %v2561 = vpop.f32.mrf.mxu0
    %v2562 = vadd.f32 %v2543, %v2561
    %v2563 = vpop.f32.mrf.mxu0
    %v2564 = vadd.f32 %v2545, %v2563
    %2565 = vmatmul.bf16.gmra.mxu0 %v518
    %v2566 = vpop.f32.mrf.mxu0
    %v2567 = vadd.f32 %v2548, %v2566
    %v2568 = vpop.f32.mrf.mxu0
    %v2569 = vadd.f32 %v2550, %v2568
    %2570 = vdwg.mxu0
    %2571 = vmatpush.bf16.msra.mxu0 %v2307
    %2572 = vmatpush.bf16.msra.mxu0 %v2303
    %2573 = vmatpush.bf16.msra.mxu0 %v2299
    %2574 = vmatpush.bf16.msra.mxu0 %v2295
    %2575 = vmatpush.bf16.msra.mxu0 %v2291
    %2576 = vmatpush.bf16.msra.mxu0 %v2287
    %2577 = vmatpush.bf16.msra.mxu0 %v2283
    %2578 = vmatpush.bf16.msra.mxu0 %v2279
    %2579 = vmatmul.bf16.gmra.mxu0 %v515
    %v2580 = vpop.f32.mrf.mxu0
    %v2581 = vadd.f32 %v2562, %v2580
    %v2582 = vpop.f32.mrf.mxu0
    %v2583 = vadd.f32 %v2564, %v2582
    %2584 = vmatmul.bf16.gmra.mxu0 %v519
    %v2585 = vpop.f32.mrf.mxu0
    %v2586 = vadd.f32 %v2567, %v2585
    %v2587 = vpop.f32.mrf.mxu0
    %v2588 = vadd.f32 %v2569, %v2587
    %2589 = vdwg.mxu0
    %2590 = vmatpush.bf16.msra.mxu0 %v2212
    %2591 = vmatpush.bf16.msra.mxu0 %v2208
    %2592 = vmatpush.bf16.msra.mxu0 %v2204
    %2593 = vmatpush.bf16.msra.mxu0 %v2200
    %2594 = vmatpush.bf16.msra.mxu0 %v2196
    %2595 = vmatpush.bf16.msra.mxu0 %v2192
    %2596 = vmatpush.bf16.msra.mxu0 %v2188
    %2597 = vmatpush.bf16.msra.mxu0 %v2184
    %2598 = vmatmul.bf16.gmra.mxu0 %v512
    %v2599 = vpop.f32.mrf.mxu0
    %v2600 = vadd.f32 %v1713, %v2599
    %v2601 = vpop.f32.mrf.mxu0
    %v2602 = vadd.f32 %v1715, %v2601
    %2603 = vmatmul.bf16.gmra.mxu0 %v516
    %v2604 = vpop.f32.mrf.mxu0
    %v2605 = vadd.f32 %v1718, %v2604
    %v2606 = vpop.f32.mrf.mxu0
    %v2607 = vadd.f32 %v1720, %v2606
    %2608 = vdwg.mxu0
    %2609 = vmatpush.bf16.msra.mxu0 %v2244
    %2610 = vmatpush.bf16.msra.mxu0 %v2240
    %2611 = vmatpush.bf16.msra.mxu0 %v2236
    %2612 = vmatpush.bf16.msra.mxu0 %v2232
    %2613 = vmatpush.bf16.msra.mxu0 %v2228
    %2614 = vmatpush.bf16.msra.mxu0 %v2224
    %2615 = vmatpush.bf16.msra.mxu0 %v2220
    %2616 = vmatpush.bf16.msra.mxu0 %v2216
    %2617 = vmatmul.bf16.gmra.mxu0 %v513
    %v2618 = vpop.f32.mrf.mxu0
    %v2619 = vadd.f32 %v2600, %v2618
    %v2620 = vpop.f32.mrf.mxu0
    %v2621 = vadd.f32 %v2602, %v2620
    %2622 = vmatmul.bf16.gmra.mxu0 %v517
    %v2623 = vpop.f32.mrf.mxu0
    %v2624 = vadd.f32 %v2605, %v2623
    %v2625 = vpop.f32.mrf.mxu0
    %v2626 = vadd.f32 %v2607, %v2625
    %2627 = vdwg.mxu0
    %2628 = vmatpush.bf16.msra.mxu0 %v2276
    %2629 = vmatpush.bf16.msra.mxu0 %v2272
    %2630 = vmatpush.bf16.msra.mxu0 %v2268
    %2631 = vmatpush.bf16.msra.mxu0 %v2264
    %2632 = vmatpush.bf16.msra.mxu0 %v2260
    %2633 = vmatpush.bf16.msra.mxu0 %v2256
    %2634 = vmatpush.bf16.msra.mxu0 %v2252
    %2635 = vmatpush.bf16.msra.mxu0 %v2248
    %2636 = vmatmul.bf16.gmra.mxu0 %v514
    %v2637 = vpop.f32.mrf.mxu0
    %v2638 = vadd.f32 %v2619, %v2637
    %v2639 = vpop.f32.mrf.mxu0
    %v2640 = vadd.f32 %v2621, %v2639
    %2641 = vmatmul.bf16.gmra.mxu0 %v518
    %v2642 = vpop.f32.mrf.mxu0
    %v2643 = vadd.f32 %v2624, %v2642
    %v2644 = vpop.f32.mrf.mxu0
    %v2645 = vadd.f32 %v2626, %v2644
    %2646 = vdwg.mxu0
    %2647 = vmatpush.bf16.msra.mxu0 %v2308
    %2648 = vmatpush.bf16.msra.mxu0 %v2304
    %2649 = vmatpush.bf16.msra.mxu0 %v2300
    %2650 = vmatpush.bf16.msra.mxu0 %v2296
    %2651 = vmatpush.bf16.msra.mxu0 %v2292
    %2652 = vmatpush.bf16.msra.mxu0 %v2288
    %2653 = vmatpush.bf16.msra.mxu0 %v2284
    %2654 = vmatpush.bf16.msra.mxu0 %v2280
    %2655 = vmatmul.bf16.gmra.mxu0 %v515
    %v2656 = vpop.f32.mrf.mxu0
    %v2657 = vadd.f32 %v2638, %v2656
    %v2658 = vpop.f32.mrf.mxu0
    %v2659 = vadd.f32 %v2640, %v2658
    %2660 = vmatmul.bf16.gmra.mxu0 %v519
    %v2661 = vpop.f32.mrf.mxu0
    %v2662 = vadd.f32 %v2643, %v2661
    %v2663 = vpop.f32.mrf.mxu0
    %v2664 = vadd.f32 %v2645, %v2663
    %2665 = vdwg.mxu0
    %2666 = vmatpush.bf16.msra.mxu0 %v2213
    %2667 = vmatpush.bf16.msra.mxu0 %v2209
    %2668 = vmatpush.bf16.msra.mxu0 %v2205
    %2669 = vmatpush.bf16.msra.mxu0 %v2201
    %2670 = vmatpush.bf16.msra.mxu0 %v2197
    %2671 = vmatpush.bf16.msra.mxu0 %v2193
    %2672 = vmatpush.bf16.msra.mxu0 %v2189
    %2673 = vmatpush.bf16.msra.mxu0 %v2185
    %2674 = vmatmul.bf16.gmra.mxu0 %v512
    %v2675 = vpop.f32.mrf.mxu0
    %v2676 = vadd.f32 %v1789, %v2675
    %v2677 = vpop.f32.mrf.mxu0
    %v2678 = vadd.f32 %v1791, %v2677
    %2679 = vmatmul.bf16.gmra.mxu0 %v516
    %v2680 = vpop.f32.mrf.mxu0
    %v2681 = vadd.f32 %v1794, %v2680
    %v2682 = vpop.f32.mrf.mxu0
    %v2683 = vadd.f32 %v1796, %v2682
    %2684 = vdwg.mxu0
    %2685 = vmatpush.bf16.msra.mxu0 %v2245
    %2686 = vmatpush.bf16.msra.mxu0 %v2241
    %2687 = vmatpush.bf16.msra.mxu0 %v2237
    %2688 = vmatpush.bf16.msra.mxu0 %v2233
    %2689 = vmatpush.bf16.msra.mxu0 %v2229
    %2690 = vmatpush.bf16.msra.mxu0 %v2225
    %2691 = vmatpush.bf16.msra.mxu0 %v2221
    %2692 = vmatpush.bf16.msra.mxu0 %v2217
    %2693 = vmatmul.bf16.gmra.mxu0 %v513
    %v2694 = vpop.f32.mrf.mxu0
    %v2695 = vadd.f32 %v2676, %v2694
    %v2696 = vpop.f32.mrf.mxu0
    %v2697 = vadd.f32 %v2678, %v2696
    %2698 = vmatmul.bf16.gmra.mxu0 %v517
    %v2699 = vpop.f32.mrf.mxu0
    %v2700 = vadd.f32 %v2681, %v2699
    %v2701 = vpop.f32.mrf.mxu0
    %v2702 = vadd.f32 %v2683, %v2701
    %2703 = vdwg.mxu0
    %2704 = vmatpush.bf16.msra.mxu0 %v2277
    %2705 = vmatpush.bf16.msra.mxu0 %v2273
    %2706 = vmatpush.bf16.msra.mxu0 %v2269
    %2707 = vmatpush.bf16.msra.mxu0 %v2265
    %2708 = vmatpush.bf16.msra.mxu0 %v2261
    %2709 = vmatpush.bf16.msra.mxu0 %v2257
    %2710 = vmatpush.bf16.msra.mxu0 %v2253
    %2711 = vmatpush.bf16.msra.mxu0 %v2249
    %2712 = vmatmul.bf16.gmra.mxu0 %v514
    %v2713 = vpop.f32.mrf.mxu0
    %v2714 = vadd.f32 %v2695, %v2713
    %v2715 = vpop.f32.mrf.mxu0
    %v2716 = vadd.f32 %v2697, %v2715
    %2717 = vmatmul.bf16.gmra.mxu0 %v518
    %v2718 = vpop.f32.mrf.mxu0
    %v2719 = vadd.f32 %v2700, %v2718
    %v2720 = vpop.f32.mrf.mxu0
    %v2721 = vadd.f32 %v2702, %v2720
    %2722 = vdwg.mxu0
    %2723 = vmatpush.bf16.msra.mxu0 %v2309
    %2724 = vmatpush.bf16.msra.mxu0 %v2305
    %2725 = vmatpush.bf16.msra.mxu0 %v2301
    %2726 = vmatpush.bf16.msra.mxu0 %v2297
    %2727 = vmatpush.bf16.msra.mxu0 %v2293
    %2728 = vmatpush.bf16.msra.mxu0 %v2289
    %2729 = vmatpush.bf16.msra.mxu0 %v2285
    %2730 = vmatpush.bf16.msra.mxu0 %v2281
    %2731 = vmatmul.bf16.gmra.mxu0 %v515
    %v2732 = vpop.f32.mrf.mxu0
    %v2733 = vadd.f32 %v2714, %v2732
    %v2734 = vpop.f32.mrf.mxu0
    %v2735 = vadd.f32 %v2716, %v2734
    %2736 = vmatmul.bf16.gmra.mxu0 %v519
    %v2737 = vpop.f32.mrf.mxu0
    %v2738 = vadd.f32 %v2719, %v2737
    %v2739 = vpop.f32.mrf.mxu0
    %v2740 = vadd.f32 %v2721, %v2739
    %2741 = vdwg.mxu0
    %s2742 = scalar_lea.vmem [#allocation8], 2048
    %v2743 = vld [vmem:[%s2742] sm:$0xff]
    %v2744 = vld [vmem:[%s2742 + $0x8] sm:$0xff]
    %v2745 = vld [vmem:[%s2742 + $0x10] sm:$0xff]
    %v2746 = vld [vmem:[%s2742 + $0x18] sm:$0xff]
    %v2747 = vld [vmem:[%s2742 + $0x20] sm:$0xff]
    %v2748 = vld [vmem:[%s2742 + $0x28] sm:$0xff]
    %v2749 = vld [vmem:[%s2742 + $0x30] sm:$0xff]
    %v2750 = vld [vmem:[%s2742 + $0x38] sm:$0xff]
    %v2751 = vld [vmem:[%s2742 + $0x40] sm:$0xff]
    %v2752 = vld [vmem:[%s2742 + $0x48] sm:$0xff]
    %v2753 = vld [vmem:[%s2742 + $0x50] sm:$0xff]
    %v2754 = vld [vmem:[%s2742 + $0x58] sm:$0xff]
    %v2755 = vld [vmem:[%s2742 + $0x60] sm:$0xff]
    %v2756 = vld [vmem:[%s2742 + $0x68] sm:$0xff]
    %v2757 = vld [vmem:[%s2742 + $0x70] sm:$0xff]
    %v2758 = vld [vmem:[%s2742 + $0x78] sm:$0xff]
    %v2759 = vld [vmem:[%s2742 + $0x80] sm:$0xff]
    %v2760 = vld [vmem:[%s2742 + $0x88] sm:$0xff]
    %v2761 = vld [vmem:[%s2742 + $0x90] sm:$0xff]
    %v2762 = vld [vmem:[%s2742 + $0x98] sm:$0xff]
    %v2763 = vld [vmem:[%s2742 + $0xa0] sm:$0xff]
    %v2764 = vld [vmem:[%s2742 + $0xa8] sm:$0xff]
    %v2765 = vld [vmem:[%s2742 + $0xb0] sm:$0xff]
    %v2766 = vld [vmem:[%s2742 + $0xb8] sm:$0xff]
    %v2767 = vld [vmem:[%s2742 + $0xc0] sm:$0xff]
    %v2768 = vld [vmem:[%s2742 + $0xc8] sm:$0xff]
    %v2769 = vld [vmem:[%s2742 + $0xd0] sm:$0xff]
    %v2770 = vld [vmem:[%s2742 + $0xd8] sm:$0xff]
    %v2771 = vld [vmem:[%s2742 + $0xe0] sm:$0xff]
    %v2772 = vld [vmem:[%s2742 + $0xe8] sm:$0xff]
    %v2773 = vld [vmem:[%s2742 + $0xf0] sm:$0xff]
    %v2774 = vld [vmem:[%s2742 + $0xf8] sm:$0xff]
    %v2775 = vld [vmem:[%s2742 + $0x100] sm:$0xff]
    %v2776 = vld [vmem:[%s2742 + $0x108] sm:$0xff]
    %v2777 = vld [vmem:[%s2742 + $0x110] sm:$0xff]
    %v2778 = vld [vmem:[%s2742 + $0x118] sm:$0xff]
    %v2779 = vld [vmem:[%s2742 + $0x120] sm:$0xff]
    %v2780 = vld [vmem:[%s2742 + $0x128] sm:$0xff]
    %v2781 = vld [vmem:[%s2742 + $0x130] sm:$0xff]
    %v2782 = vld [vmem:[%s2742 + $0x138] sm:$0xff]
    %v2783 = vld [vmem:[%s2742 + $0x140] sm:$0xff]
    %v2784 = vld [vmem:[%s2742 + $0x148] sm:$0xff]
    %v2785 = vld [vmem:[%s2742 + $0x150] sm:$0xff]
    %v2786 = vld [vmem:[%s2742 + $0x158] sm:$0xff]
    %v2787 = vld [vmem:[%s2742 + $0x160] sm:$0xff]
    %v2788 = vld [vmem:[%s2742 + $0x168] sm:$0xff]
    %v2789 = vld [vmem:[%s2742 + $0x170] sm:$0xff]
    %v2790 = vld [vmem:[%s2742 + $0x178] sm:$0xff]
    %v2791 = vld [vmem:[%s2742 + $0x180] sm:$0xff]
    %v2792 = vld [vmem:[%s2742 + $0x188] sm:$0xff]
    %v2793 = vld [vmem:[%s2742 + $0x190] sm:$0xff]
    %v2794 = vld [vmem:[%s2742 + $0x198] sm:$0xff]
    %v2795 = vld [vmem:[%s2742 + $0x1a0] sm:$0xff]
    %v2796 = vld [vmem:[%s2742 + $0x1a8] sm:$0xff]
    %v2797 = vld [vmem:[%s2742 + $0x1b0] sm:$0xff]
    %v2798 = vld [vmem:[%s2742 + $0x1b8] sm:$0xff]
    %v2799 = vld [vmem:[%s2742 + $0x1c0] sm:$0xff]
    %v2800 = vld [vmem:[%s2742 + $0x1c8] sm:$0xff]
    %v2801 = vld [vmem:[%s2742 + $0x1d0] sm:$0xff]
    %v2802 = vld [vmem:[%s2742 + $0x1d8] sm:$0xff]
    %v2803 = vld [vmem:[%s2742 + $0x1e0] sm:$0xff]
    %v2804 = vld [vmem:[%s2742 + $0x1e8] sm:$0xff]
    %v2805 = vld [vmem:[%s2742 + $0x1f0] sm:$0xff]
    %v2806 = vld [vmem:[%s2742 + $0x1f8] sm:$0xff]
    %v2807 = vld [vmem:[%s2742 + $0x200] sm:$0xff]
    %v2808 = vld [vmem:[%s2742 + $0x208] sm:$0xff]
    %v2809 = vld [vmem:[%s2742 + $0x210] sm:$0xff]
    %v2810 = vld [vmem:[%s2742 + $0x218] sm:$0xff]
    %v2811 = vld [vmem:[%s2742 + $0x220] sm:$0xff]
    %v2812 = vld [vmem:[%s2742 + $0x228] sm:$0xff]
    %v2813 = vld [vmem:[%s2742 + $0x230] sm:$0xff]
    %v2814 = vld [vmem:[%s2742 + $0x238] sm:$0xff]
    %v2815 = vld [vmem:[%s2742 + $0x240] sm:$0xff]
    %v2816 = vld [vmem:[%s2742 + $0x248] sm:$0xff]
    %v2817 = vld [vmem:[%s2742 + $0x250] sm:$0xff]
    %v2818 = vld [vmem:[%s2742 + $0x258] sm:$0xff]
    %v2819 = vld [vmem:[%s2742 + $0x260] sm:$0xff]
    %v2820 = vld [vmem:[%s2742 + $0x268] sm:$0xff]
    %v2821 = vld [vmem:[%s2742 + $0x270] sm:$0xff]
    %v2822 = vld [vmem:[%s2742 + $0x278] sm:$0xff]
    %v2823 = vld [vmem:[%s2742 + $0x280] sm:$0xff]
    %v2824 = vld [vmem:[%s2742 + $0x288] sm:$0xff]
    %v2825 = vld [vmem:[%s2742 + $0x290] sm:$0xff]
    %v2826 = vld [vmem:[%s2742 + $0x298] sm:$0xff]
    %v2827 = vld [vmem:[%s2742 + $0x2a0] sm:$0xff]
    %v2828 = vld [vmem:[%s2742 + $0x2a8] sm:$0xff]
    %v2829 = vld [vmem:[%s2742 + $0x2b0] sm:$0xff]
    %v2830 = vld [vmem:[%s2742 + $0x2b8] sm:$0xff]
    %v2831 = vld [vmem:[%s2742 + $0x2c0] sm:$0xff]
    %v2832 = vld [vmem:[%s2742 + $0x2c8] sm:$0xff]
    %v2833 = vld [vmem:[%s2742 + $0x2d0] sm:$0xff]
    %v2834 = vld [vmem:[%s2742 + $0x2d8] sm:$0xff]
    %v2835 = vld [vmem:[%s2742 + $0x2e0] sm:$0xff]
    %v2836 = vld [vmem:[%s2742 + $0x2e8] sm:$0xff]
    %v2837 = vld [vmem:[%s2742 + $0x2f0] sm:$0xff]
    %v2838 = vld [vmem:[%s2742 + $0x2f8] sm:$0xff]
    %v2839 = vld [vmem:[%s2742 + $0x300] sm:$0xff]
    %v2840 = vld [vmem:[%s2742 + $0x308] sm:$0xff]
    %v2841 = vld [vmem:[%s2742 + $0x310] sm:$0xff]
    %v2842 = vld [vmem:[%s2742 + $0x318] sm:$0xff]
    %v2843 = vld [vmem:[%s2742 + $0x320] sm:$0xff]
    %v2844 = vld [vmem:[%s2742 + $0x328] sm:$0xff]
    %v2845 = vld [vmem:[%s2742 + $0x330] sm:$0xff]
    %v2846 = vld [vmem:[%s2742 + $0x338] sm:$0xff]
    %v2847 = vld [vmem:[%s2742 + $0x340] sm:$0xff]
    %v2848 = vld [vmem:[%s2742 + $0x348] sm:$0xff]
    %v2849 = vld [vmem:[%s2742 + $0x350] sm:$0xff]
    %v2850 = vld [vmem:[%s2742 + $0x358] sm:$0xff]
    %v2851 = vld [vmem:[%s2742 + $0x360] sm:$0xff]
    %v2852 = vld [vmem:[%s2742 + $0x368] sm:$0xff]
    %v2853 = vld [vmem:[%s2742 + $0x370] sm:$0xff]
    %v2854 = vld [vmem:[%s2742 + $0x378] sm:$0xff]
    %v2855 = vld [vmem:[%s2742 + $0x380] sm:$0xff]
    %v2856 = vld [vmem:[%s2742 + $0x388] sm:$0xff]
    %v2857 = vld [vmem:[%s2742 + $0x390] sm:$0xff]
    %v2858 = vld [vmem:[%s2742 + $0x398] sm:$0xff]
    %v2859 = vld [vmem:[%s2742 + $0x3a0] sm:$0xff]
    %v2860 = vld [vmem:[%s2742 + $0x3a8] sm:$0xff]
    %v2861 = vld [vmem:[%s2742 + $0x3b0] sm:$0xff]
    %v2862 = vld [vmem:[%s2742 + $0x3b8] sm:$0xff]
    %v2863 = vld [vmem:[%s2742 + $0x3c0] sm:$0xff]
    %v2864 = vld [vmem:[%s2742 + $0x3c8] sm:$0xff]
    %v2865 = vld [vmem:[%s2742 + $0x3d0] sm:$0xff]
    %v2866 = vld [vmem:[%s2742 + $0x3d8] sm:$0xff]
    %v2867 = vld [vmem:[%s2742 + $0x3e0] sm:$0xff]
    %v2868 = vld [vmem:[%s2742 + $0x3e8] sm:$0xff]
    %v2869 = vld [vmem:[%s2742 + $0x3f0] sm:$0xff]
    %v2870 = vld [vmem:[%s2742 + $0x3f8] sm:$0xff]
    %v2999 = vunpack.c.l.b16 %v2743
    %v3000 = vunpack.c.h.b16 %v2743
    %v3001 = vunpack.c.l.b16 %v2744
    %v3002 = vunpack.c.h.b16 %v2744
    %v3003 = vunpack.c.l.b16 %v2745
    %v3004 = vunpack.c.h.b16 %v2745
    %v3005 = vunpack.c.l.b16 %v2746
    %v3006 = vunpack.c.h.b16 %v2746
    %v3007 = vunpack.c.l.b16 %v2747
    %v3008 = vunpack.c.h.b16 %v2747
    %v3009 = vunpack.c.l.b16 %v2748
    %v3010 = vunpack.c.h.b16 %v2748
    %v3011 = vunpack.c.l.b16 %v2749
    %v3012 = vunpack.c.h.b16 %v2749
    %v3013 = vunpack.c.l.b16 %v2750
    %v3014 = vunpack.c.h.b16 %v2750
    %v3015 = vunpack.c.l.b16 %v2751
    %v3016 = vunpack.c.h.b16 %v2751
    %v3017 = vunpack.c.l.b16 %v2752
    %v3018 = vunpack.c.h.b16 %v2752
    %v3019 = vunpack.c.l.b16 %v2753
    %v3020 = vunpack.c.h.b16 %v2753
    %v3021 = vunpack.c.l.b16 %v2754
    %v3022 = vunpack.c.h.b16 %v2754
    %v3023 = vunpack.c.l.b16 %v2755
    %v3024 = vunpack.c.h.b16 %v2755
    %v3025 = vunpack.c.l.b16 %v2756
    %v3026 = vunpack.c.h.b16 %v2756
    %v3027 = vunpack.c.l.b16 %v2757
    %v3028 = vunpack.c.h.b16 %v2757
    %v3029 = vunpack.c.l.b16 %v2758
    %v3030 = vunpack.c.h.b16 %v2758
    %v3031 = vunpack.c.l.b16 %v2759
    %v3032 = vunpack.c.h.b16 %v2759
    %v3033 = vunpack.c.l.b16 %v2760
    %v3034 = vunpack.c.h.b16 %v2760
    %v3035 = vunpack.c.l.b16 %v2761
    %v3036 = vunpack.c.h.b16 %v2761
    %v3037 = vunpack.c.l.b16 %v2762
    %v3038 = vunpack.c.h.b16 %v2762
    %v3039 = vunpack.c.l.b16 %v2763
    %v3040 = vunpack.c.h.b16 %v2763
    %v3041 = vunpack.c.l.b16 %v2764
    %v3042 = vunpack.c.h.b16 %v2764
    %v3043 = vunpack.c.l.b16 %v2765
    %v3044 = vunpack.c.h.b16 %v2765
    %v3045 = vunpack.c.l.b16 %v2766
    %v3046 = vunpack.c.h.b16 %v2766
    %v3047 = vunpack.c.l.b16 %v2767
    %v3048 = vunpack.c.h.b16 %v2767
    %v3049 = vunpack.c.l.b16 %v2768
    %v3050 = vunpack.c.h.b16 %v2768
    %v3051 = vunpack.c.l.b16 %v2769
    %v3052 = vunpack.c.h.b16 %v2769
    %v3053 = vunpack.c.l.b16 %v2770
    %v3054 = vunpack.c.h.b16 %v2770
    %v3055 = vunpack.c.l.b16 %v2771
    %v3056 = vunpack.c.h.b16 %v2771
    %v3057 = vunpack.c.l.b16 %v2772
    %v3058 = vunpack.c.h.b16 %v2772
    %v3059 = vunpack.c.l.b16 %v2773
    %v3060 = vunpack.c.h.b16 %v2773
    %v3061 = vunpack.c.l.b16 %v2774
    %v3062 = vunpack.c.h.b16 %v2774
    %v3063 = vunpack.c.l.b16 %v2775
    %v3064 = vunpack.c.h.b16 %v2775
    %v3065 = vunpack.c.l.b16 %v2776
    %v3066 = vunpack.c.h.b16 %v2776
    %v3067 = vunpack.c.l.b16 %v2777
    %v3068 = vunpack.c.h.b16 %v2777
    %v3069 = vunpack.c.l.b16 %v2778
    %v3070 = vunpack.c.h.b16 %v2778
    %v3071 = vunpack.c.l.b16 %v2779
    %v3072 = vunpack.c.h.b16 %v2779
    %v3073 = vunpack.c.l.b16 %v2780
    %v3074 = vunpack.c.h.b16 %v2780
    %v3075 = vunpack.c.l.b16 %v2781
    %v3076 = vunpack.c.h.b16 %v2781
    %v3077 = vunpack.c.l.b16 %v2782
    %v3078 = vunpack.c.h.b16 %v2782
    %v3079 = vunpack.c.l.b16 %v2783
    %v3080 = vunpack.c.h.b16 %v2783
    %v3081 = vunpack.c.l.b16 %v2784
    %v3082 = vunpack.c.h.b16 %v2784
    %v3083 = vunpack.c.l.b16 %v2785
    %v3084 = vunpack.c.h.b16 %v2785
    %v3085 = vunpack.c.l.b16 %v2786
    %v3086 = vunpack.c.h.b16 %v2786
    %v3087 = vunpack.c.l.b16 %v2787
    %v3088 = vunpack.c.h.b16 %v2787
    %v3089 = vunpack.c.l.b16 %v2788
    %v3090 = vunpack.c.h.b16 %v2788
    %v3091 = vunpack.c.l.b16 %v2789
    %v3092 = vunpack.c.h.b16 %v2789
    %v3093 = vunpack.c.l.b16 %v2790
    %v3094 = vunpack.c.h.b16 %v2790
    %v3095 = vunpack.c.l.b16 %v2791
    %v3096 = vunpack.c.h.b16 %v2791
    %v3097 = vunpack.c.l.b16 %v2792
    %v3098 = vunpack.c.h.b16 %v2792
    %v3099 = vunpack.c.l.b16 %v2793
    %v3100 = vunpack.c.h.b16 %v2793
    %v3101 = vunpack.c.l.b16 %v2794
    %v3102 = vunpack.c.h.b16 %v2794
    %v3103 = vunpack.c.l.b16 %v2795
    %v3104 = vunpack.c.h.b16 %v2795
    %v3105 = vunpack.c.l.b16 %v2796
    %v3106 = vunpack.c.h.b16 %v2796
    %v3107 = vunpack.c.l.b16 %v2797
    %v3108 = vunpack.c.h.b16 %v2797
    %v3109 = vunpack.c.l.b16 %v2798
    %v3110 = vunpack.c.h.b16 %v2798
    %v3111 = vunpack.c.l.b16 %v2799
    %v3112 = vunpack.c.h.b16 %v2799
    %v3113 = vunpack.c.l.b16 %v2800
    %v3114 = vunpack.c.h.b16 %v2800
    %v3115 = vunpack.c.l.b16 %v2801
    %v3116 = vunpack.c.h.b16 %v2801
    %v3117 = vunpack.c.l.b16 %v2802
    %v3118 = vunpack.c.h.b16 %v2802
    %v3119 = vunpack.c.l.b16 %v2803
    %v3120 = vunpack.c.h.b16 %v2803
    %v3121 = vunpack.c.l.b16 %v2804
    %v3122 = vunpack.c.h.b16 %v2804
    %v3123 = vunpack.c.l.b16 %v2805
    %v3124 = vunpack.c.h.b16 %v2805
    %v3125 = vunpack.c.l.b16 %v2806
    %v3126 = vunpack.c.h.b16 %v2806
    %v3127 = vunpack.c.l.b16 %v2807
    %v3128 = vunpack.c.h.b16 %v2807
    %v3129 = vunpack.c.l.b16 %v2808
    %v3130 = vunpack.c.h.b16 %v2808
    %v3131 = vunpack.c.l.b16 %v2809
    %v3132 = vunpack.c.h.b16 %v2809
    %v3133 = vunpack.c.l.b16 %v2810
    %v3134 = vunpack.c.h.b16 %v2810
    %v3135 = vunpack.c.l.b16 %v2811
    %v3136 = vunpack.c.h.b16 %v2811
    %v3137 = vunpack.c.l.b16 %v2812
    %v3138 = vunpack.c.h.b16 %v2812
    %v3139 = vunpack.c.l.b16 %v2813
    %v3140 = vunpack.c.h.b16 %v2813
    %v3141 = vunpack.c.l.b16 %v2814
    %v3142 = vunpack.c.h.b16 %v2814
    %v3143 = vunpack.c.l.b16 %v2815
    %v3144 = vunpack.c.h.b16 %v2815
    %v3145 = vunpack.c.l.b16 %v2816
    %v3146 = vunpack.c.h.b16 %v2816
    %v3147 = vunpack.c.l.b16 %v2817
    %v3148 = vunpack.c.h.b16 %v2817
    %v3149 = vunpack.c.l.b16 %v2818
    %v3150 = vunpack.c.h.b16 %v2818
    %v3151 = vunpack.c.l.b16 %v2819
    %v3152 = vunpack.c.h.b16 %v2819
    %v3153 = vunpack.c.l.b16 %v2820
    %v3154 = vunpack.c.h.b16 %v2820
    %v3155 = vunpack.c.l.b16 %v2821
    %v3156 = vunpack.c.h.b16 %v2821
    %v3157 = vunpack.c.l.b16 %v2822
    %v3158 = vunpack.c.h.b16 %v2822
    %v3159 = vunpack.c.l.b16 %v2823
    %v3160 = vunpack.c.h.b16 %v2823
    %v3161 = vunpack.c.l.b16 %v2824
    %v3162 = vunpack.c.h.b16 %v2824
    %v3163 = vunpack.c.l.b16 %v2825
    %v3164 = vunpack.c.h.b16 %v2825
    %v3165 = vunpack.c.l.b16 %v2826
    %v3166 = vunpack.c.h.b16 %v2826
    %v3167 = vunpack.c.l.b16 %v2827
    %v3168 = vunpack.c.h.b16 %v2827
    %v3169 = vunpack.c.l.b16 %v2828
    %v3170 = vunpack.c.h.b16 %v2828
    %v3171 = vunpack.c.l.b16 %v2829
    %v3172 = vunpack.c.h.b16 %v2829
    %v3173 = vunpack.c.l.b16 %v2830
    %v3174 = vunpack.c.h.b16 %v2830
    %v3175 = vunpack.c.l.b16 %v2831
    %v3176 = vunpack.c.h.b16 %v2831
    %v3177 = vunpack.c.l.b16 %v2832
    %v3178 = vunpack.c.h.b16 %v2832
    %v3179 = vunpack.c.l.b16 %v2833
    %v3180 = vunpack.c.h.b16 %v2833
    %v3181 = vunpack.c.l.b16 %v2834
    %v3182 = vunpack.c.h.b16 %v2834
    %v3183 = vunpack.c.l.b16 %v2835
    %v3184 = vunpack.c.h.b16 %v2835
    %v3185 = vunpack.c.l.b16 %v2836
    %v3186 = vunpack.c.h.b16 %v2836
    %v3187 = vunpack.c.l.b16 %v2837
    %v3188 = vunpack.c.h.b16 %v2837
    %v3189 = vunpack.c.l.b16 %v2838
    %v3190 = vunpack.c.h.b16 %v2838
    %v3191 = vunpack.c.l.b16 %v2839
    %v3192 = vunpack.c.h.b16 %v2839
    %v3193 = vunpack.c.l.b16 %v2840
    %v3194 = vunpack.c.h.b16 %v2840
    %v3195 = vunpack.c.l.b16 %v2841
    %v3196 = vunpack.c.h.b16 %v2841
    %v3197 = vunpack.c.l.b16 %v2842
    %v3198 = vunpack.c.h.b16 %v2842
    %v3199 = vunpack.c.l.b16 %v2843
    %v3200 = vunpack.c.h.b16 %v2843
    %v3201 = vunpack.c.l.b16 %v2844
    %v3202 = vunpack.c.h.b16 %v2844
    %v3203 = vunpack.c.l.b16 %v2845
    %v3204 = vunpack.c.h.b16 %v2845
    %v3205 = vunpack.c.l.b16 %v2846
    %v3206 = vunpack.c.h.b16 %v2846
    %v3207 = vunpack.c.l.b16 %v2847
    %v3208 = vunpack.c.h.b16 %v2847
    %v3209 = vunpack.c.l.b16 %v2848
    %v3210 = vunpack.c.h.b16 %v2848
    %v3211 = vunpack.c.l.b16 %v2849
    %v3212 = vunpack.c.h.b16 %v2849
    %v3213 = vunpack.c.l.b16 %v2850
    %v3214 = vunpack.c.h.b16 %v2850
    %v3215 = vunpack.c.l.b16 %v2851
    %v3216 = vunpack.c.h.b16 %v2851
    %v3217 = vunpack.c.l.b16 %v2852
    %v3218 = vunpack.c.h.b16 %v2852
    %v3219 = vunpack.c.l.b16 %v2853
    %v3220 = vunpack.c.h.b16 %v2853
    %v3221 = vunpack.c.l.b16 %v2854
    %v3222 = vunpack.c.h.b16 %v2854
    %v3223 = vunpack.c.l.b16 %v2855
    %v3224 = vunpack.c.h.b16 %v2855
    %v3225 = vunpack.c.l.b16 %v2856
    %v3226 = vunpack.c.h.b16 %v2856
    %v3227 = vunpack.c.l.b16 %v2857
    %v3228 = vunpack.c.h.b16 %v2857
    %v3229 = vunpack.c.l.b16 %v2858
    %v3230 = vunpack.c.h.b16 %v2858
    %v3231 = vunpack.c.l.b16 %v2859
    %v3232 = vunpack.c.h.b16 %v2859
    %v3233 = vunpack.c.l.b16 %v2860
    %v3234 = vunpack.c.h.b16 %v2860
    %v3235 = vunpack.c.l.b16 %v2861
    %v3236 = vunpack.c.h.b16 %v2861
    %v3237 = vunpack.c.l.b16 %v2862
    %v3238 = vunpack.c.h.b16 %v2862
    %v3239 = vunpack.c.l.b16 %v2863
    %v3240 = vunpack.c.h.b16 %v2863
    %v3241 = vunpack.c.l.b16 %v2864
    %v3242 = vunpack.c.h.b16 %v2864
    %v3243 = vunpack.c.l.b16 %v2865
    %v3244 = vunpack.c.h.b16 %v2865
    %v3245 = vunpack.c.l.b16 %v2866
    %v3246 = vunpack.c.h.b16 %v2866
    %v3247 = vunpack.c.l.b16 %v2867
    %v3248 = vunpack.c.h.b16 %v2867
    %v3249 = vunpack.c.l.b16 %v2868
    %v3250 = vunpack.c.h.b16 %v2868
    %v3251 = vunpack.c.l.b16 %v2869
    %v3252 = vunpack.c.h.b16 %v2869
    %v3253 = vunpack.c.l.b16 %v2870
    %v3254 = vunpack.c.h.b16 %v2870
    %v3255 = vpack.c.b16 %v3003, %v2999
    %v3256 = vpack.c.b16 %v3004, %v3000
    %v3257 = vpack.c.b16 %v3005, %v3001
    %v3258 = vpack.c.b16 %v3006, %v3002
    %v3259 = vpack.c.b16 %v3011, %v3007
    %v3260 = vpack.c.b16 %v3012, %v3008
    %v3261 = vpack.c.b16 %v3013, %v3009
    %v3262 = vpack.c.b16 %v3014, %v3010
    %v3263 = vpack.c.b16 %v3019, %v3015
    %v3264 = vpack.c.b16 %v3020, %v3016
    %v3265 = vpack.c.b16 %v3021, %v3017
    %v3266 = vpack.c.b16 %v3022, %v3018
    %v3267 = vpack.c.b16 %v3027, %v3023
    %v3268 = vpack.c.b16 %v3028, %v3024
    %v3269 = vpack.c.b16 %v3029, %v3025
    %v3270 = vpack.c.b16 %v3030, %v3026
    %v3271 = vpack.c.b16 %v3035, %v3031
    %v3272 = vpack.c.b16 %v3036, %v3032
    %v3273 = vpack.c.b16 %v3037, %v3033
    %v3274 = vpack.c.b16 %v3038, %v3034
    %v3275 = vpack.c.b16 %v3043, %v3039
    %v3276 = vpack.c.b16 %v3044, %v3040
    %v3277 = vpack.c.b16 %v3045, %v3041
    %v3278 = vpack.c.b16 %v3046, %v3042
    %v3279 = vpack.c.b16 %v3051, %v3047
    %v3280 = vpack.c.b16 %v3052, %v3048
    %v3281 = vpack.c.b16 %v3053, %v3049
    %v3282 = vpack.c.b16 %v3054, %v3050
    %v3283 = vpack.c.b16 %v3059, %v3055
    %v3284 = vpack.c.b16 %v3060, %v3056
    %v3285 = vpack.c.b16 %v3061, %v3057
    %v3286 = vpack.c.b16 %v3062, %v3058
    %v3287 = vpack.c.b16 %v3067, %v3063
    %v3288 = vpack.c.b16 %v3068, %v3064
    %v3289 = vpack.c.b16 %v3069, %v3065
    %v3290 = vpack.c.b16 %v3070, %v3066
    %v3291 = vpack.c.b16 %v3075, %v3071
    %v3292 = vpack.c.b16 %v3076, %v3072
    %v3293 = vpack.c.b16 %v3077, %v3073
    %v3294 = vpack.c.b16 %v3078, %v3074
    %v3295 = vpack.c.b16 %v3083, %v3079
    %v3296 = vpack.c.b16 %v3084, %v3080
    %v3297 = vpack.c.b16 %v3085, %v3081
    %v3298 = vpack.c.b16 %v3086, %v3082
    %v3299 = vpack.c.b16 %v3091, %v3087
    %v3300 = vpack.c.b16 %v3092, %v3088
    %v3301 = vpack.c.b16 %v3093, %v3089
    %v3302 = vpack.c.b16 %v3094, %v3090
    %v3303 = vpack.c.b16 %v3099, %v3095
    %v3304 = vpack.c.b16 %v3100, %v3096
    %v3305 = vpack.c.b16 %v3101, %v3097
    %v3306 = vpack.c.b16 %v3102, %v3098
    %v3307 = vpack.c.b16 %v3107, %v3103
    %v3308 = vpack.c.b16 %v3108, %v3104
    %v3309 = vpack.c.b16 %v3109, %v3105
    %v3310 = vpack.c.b16 %v3110, %v3106
    %v3311 = vpack.c.b16 %v3115, %v3111
    %v3312 = vpack.c.b16 %v3116, %v3112
    %v3313 = vpack.c.b16 %v3117, %v3113
    %v3314 = vpack.c.b16 %v3118, %v3114
    %v3315 = vpack.c.b16 %v3123, %v3119
    %v3316 = vpack.c.b16 %v3124, %v3120
    %v3317 = vpack.c.b16 %v3125, %v3121
    %v3318 = vpack.c.b16 %v3126, %v3122
    %v3319 = vpack.c.b16 %v3131, %v3127
    %v3320 = vpack.c.b16 %v3132, %v3128
    %v3321 = vpack.c.b16 %v3133, %v3129
    %v3322 = vpack.c.b16 %v3134, %v3130
    %v3323 = vpack.c.b16 %v3139, %v3135
    %v3324 = vpack.c.b16 %v3140, %v3136
    %v3325 = vpack.c.b16 %v3141, %v3137
    %v3326 = vpack.c.b16 %v3142, %v3138
    %v3327 = vpack.c.b16 %v3147, %v3143
    %v3328 = vpack.c.b16 %v3148, %v3144
    %v3329 = vpack.c.b16 %v3149, %v3145
    %v3330 = vpack.c.b16 %v3150, %v3146
    %v3331 = vpack.c.b16 %v3155, %v3151
    %v3332 = vpack.c.b16 %v3156, %v3152
    %v3333 = vpack.c.b16 %v3157, %v3153
    %v3334 = vpack.c.b16 %v3158, %v3154
    %v3335 = vpack.c.b16 %v3163, %v3159
    %v3336 = vpack.c.b16 %v3164, %v3160
    %v3337 = vpack.c.b16 %v3165, %v3161
    %v3338 = vpack.c.b16 %v3166, %v3162
    %v3339 = vpack.c.b16 %v3171, %v3167
    %v3340 = vpack.c.b16 %v3172, %v3168
    %v3341 = vpack.c.b16 %v3173, %v3169
    %v3342 = vpack.c.b16 %v3174, %v3170
    %v3343 = vpack.c.b16 %v3179, %v3175
    %v3344 = vpack.c.b16 %v3180, %v3176
    %v3345 = vpack.c.b16 %v3181, %v3177
    %v3346 = vpack.c.b16 %v3182, %v3178
    %v3347 = vpack.c.b16 %v3187, %v3183
    %v3348 = vpack.c.b16 %v3188, %v3184
    %v3349 = vpack.c.b16 %v3189, %v3185
    %v3350 = vpack.c.b16 %v3190, %v3186
    %v3351 = vpack.c.b16 %v3195, %v3191
    %v3352 = vpack.c.b16 %v3196, %v3192
    %v3353 = vpack.c.b16 %v3197, %v3193
    %v3354 = vpack.c.b16 %v3198, %v3194
    %v3355 = vpack.c.b16 %v3203, %v3199
    %v3356 = vpack.c.b16 %v3204, %v3200
    %v3357 = vpack.c.b16 %v3205, %v3201
    %v3358 = vpack.c.b16 %v3206, %v3202
    %v3359 = vpack.c.b16 %v3211, %v3207
    %v3360 = vpack.c.b16 %v3212, %v3208
    %v3361 = vpack.c.b16 %v3213, %v3209
    %v3362 = vpack.c.b16 %v3214, %v3210
    %v3363 = vpack.c.b16 %v3219, %v3215
    %v3364 = vpack.c.b16 %v3220, %v3216
    %v3365 = vpack.c.b16 %v3221, %v3217
    %v3366 = vpack.c.b16 %v3222, %v3218
    %v3367 = vpack.c.b16 %v3227, %v3223
    %v3368 = vpack.c.b16 %v3228, %v3224
    %v3369 = vpack.c.b16 %v3229, %v3225
    %v3370 = vpack.c.b16 %v3230, %v3226
    %v3371 = vpack.c.b16 %v3235, %v3231
    %v3372 = vpack.c.b16 %v3236, %v3232
    %v3373 = vpack.c.b16 %v3237, %v3233
    %v3374 = vpack.c.b16 %v3238, %v3234
    %v3375 = vpack.c.b16 %v3243, %v3239
    %v3376 = vpack.c.b16 %v3244, %v3240
    %v3377 = vpack.c.b16 %v3245, %v3241
    %v3378 = vpack.c.b16 %v3246, %v3242
    %v3379 = vpack.c.b16 %v3251, %v3247
    %v3380 = vpack.c.b16 %v3252, %v3248
    %v3381 = vpack.c.b16 %v3253, %v3249
    %v3382 = vpack.c.b16 %v3254, %v3250
    %3511 = vmatpush.bf16.msra.mxu0 %v3283
    %3512 = vmatpush.bf16.msra.mxu0 %v3279
    %3513 = vmatpush.bf16.msra.mxu0 %v3275
    %3514 = vmatpush.bf16.msra.mxu0 %v3271
    %3515 = vmatpush.bf16.msra.mxu0 %v3267
    %3516 = vmatpush.bf16.msra.mxu0 %v3263
    %3517 = vmatpush.bf16.msra.mxu0 %v3259
    %3518 = vmatpush.bf16.msra.mxu0 %v3255
    %3519 = vmatmul.bf16.gmra.mxu0 %v581
    %v3520 = vpop.f32.mrf.mxu0
    %v3521 = vadd.f32 0.0, %v3520
    %v3522 = vpop.f32.mrf.mxu0
    %v3523 = vadd.f32 0.0, %v3522
    %3524 = vmatmul.bf16.gmra.mxu0 %v585
    %v3525 = vpop.f32.mrf.mxu0
    %v3526 = vadd.f32 0.0, %v3525
    %v3527 = vpop.f32.mrf.mxu0
    %v3528 = vadd.f32 0.0, %v3527
    %3529 = vdwg.mxu0
    %3530 = vmatpush.bf16.msra.mxu0 %v3315
    %3531 = vmatpush.bf16.msra.mxu0 %v3311
    %3532 = vmatpush.bf16.msra.mxu0 %v3307
    %3533 = vmatpush.bf16.msra.mxu0 %v3303
    %3534 = vmatpush.bf16.msra.mxu0 %v3299
    %3535 = vmatpush.bf16.msra.mxu0 %v3295
    %3536 = vmatpush.bf16.msra.mxu0 %v3291
    %3537 = vmatpush.bf16.msra.mxu0 %v3287
    %3538 = vmatmul.bf16.gmra.mxu0 %v582
    %v3539 = vpop.f32.mrf.mxu0
    %v3540 = vadd.f32 %v3521, %v3539
    %v3541 = vpop.f32.mrf.mxu0
    %v3542 = vadd.f32 %v3523, %v3541
    %3543 = vmatmul.bf16.gmra.mxu0 %v586
    %v3544 = vpop.f32.mrf.mxu0
    %v3545 = vadd.f32 %v3526, %v3544
    %v3546 = vpop.f32.mrf.mxu0
    %v3547 = vadd.f32 %v3528, %v3546
    %3548 = vdwg.mxu0
    %3549 = vmatpush.bf16.msra.mxu0 %v3347
    %3550 = vmatpush.bf16.msra.mxu0 %v3343
    %3551 = vmatpush.bf16.msra.mxu0 %v3339
    %3552 = vmatpush.bf16.msra.mxu0 %v3335
    %3553 = vmatpush.bf16.msra.mxu0 %v3331
    %3554 = vmatpush.bf16.msra.mxu0 %v3327
    %3555 = vmatpush.bf16.msra.mxu0 %v3323
    %3556 = vmatpush.bf16.msra.mxu0 %v3319
    %3557 = vmatmul.bf16.gmra.mxu0 %v583
    %v3558 = vpop.f32.mrf.mxu0
    %v3559 = vadd.f32 %v3540, %v3558
    %v3560 = vpop.f32.mrf.mxu0
    %v3561 = vadd.f32 %v3542, %v3560
    %3562 = vmatmul.bf16.gmra.mxu0 %v587
    %v3563 = vpop.f32.mrf.mxu0
    %v3564 = vadd.f32 %v3545, %v3563
    %v3565 = vpop.f32.mrf.mxu0
    %v3566 = vadd.f32 %v3547, %v3565
    %3567 = vdwg.mxu0
    %3568 = vmatpush.bf16.msra.mxu0 %v3379
    %3569 = vmatpush.bf16.msra.mxu0 %v3375
    %3570 = vmatpush.bf16.msra.mxu0 %v3371
    %3571 = vmatpush.bf16.msra.mxu0 %v3367
    %3572 = vmatpush.bf16.msra.mxu0 %v3363
    %3573 = vmatpush.bf16.msra.mxu0 %v3359
    %3574 = vmatpush.bf16.msra.mxu0 %v3355
    %3575 = vmatpush.bf16.msra.mxu0 %v3351
    %3576 = vmatmul.bf16.gmra.mxu0 %v584
    %v3577 = vpop.f32.mrf.mxu0
    %v3578 = vadd.f32 %v3559, %v3577
    %v3579 = vpop.f32.mrf.mxu0
    %v3580 = vadd.f32 %v3561, %v3579
    %3581 = vmatmul.bf16.gmra.mxu0 %v588
    %v3582 = vpop.f32.mrf.mxu0
    %v3583 = vadd.f32 %v3564, %v3582
    %v3584 = vpop.f32.mrf.mxu0
    %v3585 = vadd.f32 %v3566, %v3584
    %3586 = vdwg.mxu0
    %3587 = vmatpush.bf16.msra.mxu0 %v3284
    %3588 = vmatpush.bf16.msra.mxu0 %v3280
    %3589 = vmatpush.bf16.msra.mxu0 %v3276
    %3590 = vmatpush.bf16.msra.mxu0 %v3272
    %3591 = vmatpush.bf16.msra.mxu0 %v3268
    %3592 = vmatpush.bf16.msra.mxu0 %v3264
    %3593 = vmatpush.bf16.msra.mxu0 %v3260
    %3594 = vmatpush.bf16.msra.mxu0 %v3256
    %3595 = vmatmul.bf16.gmra.mxu0 %v581
    %v3596 = vpop.f32.mrf.mxu0
    %v3597 = vadd.f32 0.0, %v3596
    %v3598 = vpop.f32.mrf.mxu0
    %v3599 = vadd.f32 0.0, %v3598
    %3600 = vmatmul.bf16.gmra.mxu0 %v585
    %v3601 = vpop.f32.mrf.mxu0
    %v3602 = vadd.f32 0.0, %v3601
    %v3603 = vpop.f32.mrf.mxu0
    %v3604 = vadd.f32 0.0, %v3603
    %3605 = vdwg.mxu0
    %3606 = vmatpush.bf16.msra.mxu0 %v3316
    %3607 = vmatpush.bf16.msra.mxu0 %v3312
    %3608 = vmatpush.bf16.msra.mxu0 %v3308
    %3609 = vmatpush.bf16.msra.mxu0 %v3304
    %3610 = vmatpush.bf16.msra.mxu0 %v3300
    %3611 = vmatpush.bf16.msra.mxu0 %v3296
    %3612 = vmatpush.bf16.msra.mxu0 %v3292
    %3613 = vmatpush.bf16.msra.mxu0 %v3288
    %3614 = vmatmul.bf16.gmra.mxu0 %v582
    %v3615 = vpop.f32.mrf.mxu0
    %v3616 = vadd.f32 %v3597, %v3615
    %v3617 = vpop.f32.mrf.mxu0
    %v3618 = vadd.f32 %v3599, %v3617
    %3619 = vmatmul.bf16.gmra.mxu0 %v586
    %v3620 = vpop.f32.mrf.mxu0
    %v3621 = vadd.f32 %v3602, %v3620
    %v3622 = vpop.f32.mrf.mxu0
    %v3623 = vadd.f32 %v3604, %v3622
    %3624 = vdwg.mxu0
    %3625 = vmatpush.bf16.msra.mxu0 %v3348
    %3626 = vmatpush.bf16.msra.mxu0 %v3344
    %3627 = vmatpush.bf16.msra.mxu0 %v3340
    %3628 = vmatpush.bf16.msra.mxu0 %v3336
    %3629 = vmatpush.bf16.msra.mxu0 %v3332
    %3630 = vmatpush.bf16.msra.mxu0 %v3328
    %3631 = vmatpush.bf16.msra.mxu0 %v3324
    %3632 = vmatpush.bf16.msra.mxu0 %v3320
    %3633 = vmatmul.bf16.gmra.mxu0 %v583
    %v3634 = vpop.f32.mrf.mxu0
    %v3635 = vadd.f32 %v3616, %v3634
    %v3636 = vpop.f32.mrf.mxu0
    %v3637 = vadd.f32 %v3618, %v3636
    %3638 = vmatmul.bf16.gmra.mxu0 %v587
    %v3639 = vpop.f32.mrf.mxu0
    %v3640 = vadd.f32 %v3621, %v3639
    %v3641 = vpop.f32.mrf.mxu0
    %v3642 = vadd.f32 %v3623, %v3641
    %3643 = vdwg.mxu0
    %3644 = vmatpush.bf16.msra.mxu0 %v3380
    %3645 = vmatpush.bf16.msra.mxu0 %v3376
    %3646 = vmatpush.bf16.msra.mxu0 %v3372
    %3647 = vmatpush.bf16.msra.mxu0 %v3368
    %3648 = vmatpush.bf16.msra.mxu0 %v3364
    %3649 = vmatpush.bf16.msra.mxu0 %v3360
    %3650 = vmatpush.bf16.msra.mxu0 %v3356
    %3651 = vmatpush.bf16.msra.mxu0 %v3352
    %3652 = vmatmul.bf16.gmra.mxu0 %v584
    %v3653 = vpop.f32.mrf.mxu0
    %v3654 = vadd.f32 %v3635, %v3653
    %v3655 = vpop.f32.mrf.mxu0
    %v3656 = vadd.f32 %v3637, %v3655
    %3657 = vmatmul.bf16.gmra.mxu0 %v588
    %v3658 = vpop.f32.mrf.mxu0
    %v3659 = vadd.f32 %v3640, %v3658
    %v3660 = vpop.f32.mrf.mxu0
    %v3661 = vadd.f32 %v3642, %v3660
    %3662 = vdwg.mxu0
    %3663 = vmatpush.bf16.msra.mxu0 %v3285
    %3664 = vmatpush.bf16.msra.mxu0 %v3281
    %3665 = vmatpush.bf16.msra.mxu0 %v3277
    %3666 = vmatpush.bf16.msra.mxu0 %v3273
    %3667 = vmatpush.bf16.msra.mxu0 %v3269
    %3668 = vmatpush.bf16.msra.mxu0 %v3265
    %3669 = vmatpush.bf16.msra.mxu0 %v3261
    %3670 = vmatpush.bf16.msra.mxu0 %v3257
    %3671 = vmatmul.bf16.gmra.mxu0 %v581
    %v3672 = vpop.f32.mrf.mxu0
    %v3673 = vadd.f32 0.0, %v3672
    %v3674 = vpop.f32.mrf.mxu0
    %v3675 = vadd.f32 0.0, %v3674
    %3676 = vmatmul.bf16.gmra.mxu0 %v585
    %v3677 = vpop.f32.mrf.mxu0
    %v3678 = vadd.f32 0.0, %v3677
    %v3679 = vpop.f32.mrf.mxu0
    %v3680 = vadd.f32 0.0, %v3679
    %3681 = vdwg.mxu0
    %3682 = vmatpush.bf16.msra.mxu0 %v3317
    %3683 = vmatpush.bf16.msra.mxu0 %v3313
    %3684 = vmatpush.bf16.msra.mxu0 %v3309
    %3685 = vmatpush.bf16.msra.mxu0 %v3305
    %3686 = vmatpush.bf16.msra.mxu0 %v3301
    %3687 = vmatpush.bf16.msra.mxu0 %v3297
    %3688 = vmatpush.bf16.msra.mxu0 %v3293
    %3689 = vmatpush.bf16.msra.mxu0 %v3289
    %3690 = vmatmul.bf16.gmra.mxu0 %v582
    %v3691 = vpop.f32.mrf.mxu0
    %v3692 = vadd.f32 %v3673, %v3691
    %v3693 = vpop.f32.mrf.mxu0
    %v3694 = vadd.f32 %v3675, %v3693
    %3695 = vmatmul.bf16.gmra.mxu0 %v586
    %v3696 = vpop.f32.mrf.mxu0
    %v3697 = vadd.f32 %v3678, %v3696
    %v3698 = vpop.f32.mrf.mxu0
    %v3699 = vadd.f32 %v3680, %v3698
    %3700 = vdwg.mxu0
    %3701 = vmatpush.bf16.msra.mxu0 %v3349
    %3702 = vmatpush.bf16.msra.mxu0 %v3345
    %3703 = vmatpush.bf16.msra.mxu0 %v3341
    %3704 = vmatpush.bf16.msra.mxu0 %v3337
    %3705 = vmatpush.bf16.msra.mxu0 %v3333
    %3706 = vmatpush.bf16.msra.mxu0 %v3329
    %3707 = vmatpush.bf16.msra.mxu0 %v3325
    %3708 = vmatpush.bf16.msra.mxu0 %v3321
    %3709 = vmatmul.bf16.gmra.mxu0 %v583
    %v3710 = vpop.f32.mrf.mxu0
    %v3711 = vadd.f32 %v3692, %v3710
    %v3712 = vpop.f32.mrf.mxu0
    %v3713 = vadd.f32 %v3694, %v3712
    %3714 = vmatmul.bf16.gmra.mxu0 %v587
    %v3715 = vpop.f32.mrf.mxu0
    %v3716 = vadd.f32 %v3697, %v3715
    %v3717 = vpop.f32.mrf.mxu0
    %v3718 = vadd.f32 %v3699, %v3717
    %3719 = vdwg.mxu0
    %3720 = vmatpush.bf16.msra.mxu0 %v3381
    %3721 = vmatpush.bf16.msra.mxu0 %v3377
    %3722 = vmatpush.bf16.msra.mxu0 %v3373
    %3723 = vmatpush.bf16.msra.mxu0 %v3369
    %3724 = vmatpush.bf16.msra.mxu0 %v3365
    %3725 = vmatpush.bf16.msra.mxu0 %v3361
    %3726 = vmatpush.bf16.msra.mxu0 %v3357
    %3727 = vmatpush.bf16.msra.mxu0 %v3353
    %3728 = vmatmul.bf16.gmra.mxu0 %v584
    %v3729 = vpop.f32.mrf.mxu0
    %v3730 = vadd.f32 %v3711, %v3729
    %v3731 = vpop.f32.mrf.mxu0
    %v3732 = vadd.f32 %v3713, %v3731
    %3733 = vmatmul.bf16.gmra.mxu0 %v588
    %v3734 = vpop.f32.mrf.mxu0
    %v3735 = vadd.f32 %v3716, %v3734
    %v3736 = vpop.f32.mrf.mxu0
    %v3737 = vadd.f32 %v3718, %v3736
    %3738 = vdwg.mxu0
    %3739 = vmatpush.bf16.msra.mxu0 %v3286
    %3740 = vmatpush.bf16.msra.mxu0 %v3282
    %3741 = vmatpush.bf16.msra.mxu0 %v3278
    %3742 = vmatpush.bf16.msra.mxu0 %v3274
    %3743 = vmatpush.bf16.msra.mxu0 %v3270
    %3744 = vmatpush.bf16.msra.mxu0 %v3266
    %3745 = vmatpush.bf16.msra.mxu0 %v3262
    %3746 = vmatpush.bf16.msra.mxu0 %v3258
    %3747 = vmatmul.bf16.gmra.mxu0 %v581
    %v3748 = vpop.f32.mrf.mxu0
    %v3749 = vadd.f32 0.0, %v3748
    %v3750 = vpop.f32.mrf.mxu0
    %v3751 = vadd.f32 0.0, %v3750
    %3752 = vmatmul.bf16.gmra.mxu0 %v585
    %v3753 = vpop.f32.mrf.mxu0
    %v3754 = vadd.f32 0.0, %v3753
    %v3755 = vpop.f32.mrf.mxu0
    %v3756 = vadd.f32 0.0, %v3755
    %3757 = vdwg.mxu0
    %3758 = vmatpush.bf16.msra.mxu0 %v3318
    %3759 = vmatpush.bf16.msra.mxu0 %v3314
    %3760 = vmatpush.bf16.msra.mxu0 %v3310
    %3761 = vmatpush.bf16.msra.mxu0 %v3306
    %3762 = vmatpush.bf16.msra.mxu0 %v3302
    %3763 = vmatpush.bf16.msra.mxu0 %v3298
    %3764 = vmatpush.bf16.msra.mxu0 %v3294
    %3765 = vmatpush.bf16.msra.mxu0 %v3290
    %3766 = vmatmul.bf16.gmra.mxu0 %v582
    %v3767 = vpop.f32.mrf.mxu0
    %v3768 = vadd.f32 %v3749, %v3767
    %v3769 = vpop.f32.mrf.mxu0
    %v3770 = vadd.f32 %v3751, %v3769
    %3771 = vmatmul.bf16.gmra.mxu0 %v586
    %v3772 = vpop.f32.mrf.mxu0
    %v3773 = vadd.f32 %v3754, %v3772
    %v3774 = vpop.f32.mrf.mxu0
    %v3775 = vadd.f32 %v3756, %v3774
    %3776 = vdwg.mxu0
    %3777 = vmatpush.bf16.msra.mxu0 %v3350
    %3778 = vmatpush.bf16.msra.mxu0 %v3346
    %3779 = vmatpush.bf16.msra.mxu0 %v3342
    %3780 = vmatpush.bf16.msra.mxu0 %v3338
    %3781 = vmatpush.bf16.msra.mxu0 %v3334
    %3782 = vmatpush.bf16.msra.mxu0 %v3330
    %3783 = vmatpush.bf16.msra.mxu0 %v3326
    %3784 = vmatpush.bf16.msra.mxu0 %v3322
    %3785 = vmatmul.bf16.gmra.mxu0 %v583
    %v3786 = vpop.f32.mrf.mxu0
    %v3787 = vadd.f32 %v3768, %v3786
    %v3788 = vpop.f32.mrf.mxu0
    %v3789 = vadd.f32 %v3770, %v3788
    %3790 = vmatmul.bf16.gmra.mxu0 %v587
    %v3791 = vpop.f32.mrf.mxu0
    %v3792 = vadd.f32 %v3773, %v3791
    %v3793 = vpop.f32.mrf.mxu0
    %v3794 = vadd.f32 %v3775, %v3793
    %3795 = vdwg.mxu0
    %3796 = vmatpush.bf16.msra.mxu0 %v3382
    %3797 = vmatpush.bf16.msra.mxu0 %v3378
    %3798 = vmatpush.bf16.msra.mxu0 %v3374
    %3799 = vmatpush.bf16.msra.mxu0 %v3370
    %3800 = vmatpush.bf16.msra.mxu0 %v3366
    %3801 = vmatpush.bf16.msra.mxu0 %v3362
    %3802 = vmatpush.bf16.msra.mxu0 %v3358
    %3803 = vmatpush.bf16.msra.mxu0 %v3354
    %3804 = vmatmul.bf16.gmra.mxu0 %v584
    %v3805 = vpop.f32.mrf.mxu0
    %v3806 = vadd.f32 %v3787, %v3805
    %v3807 = vpop.f32.mrf.mxu0
    %v3808 = vadd.f32 %v3789, %v3807
    %3809 = vmatmul.bf16.gmra.mxu0 %v588
    %v3810 = vpop.f32.mrf.mxu0
    %v3811 = vadd.f32 %v3792, %v3810
    %v3812 = vpop.f32.mrf.mxu0
    %v3813 = vadd.f32 %v3794, %v3812
    %3814 = vdwg.mxu0
    %v3815 = vadd.f32 %v2505, %v3578
    %v3816 = vadd.f32 %v2581, %v3654
    %v3817 = vadd.f32 %v2657, %v3730
    %v3818 = vadd.f32 %v2733, %v3806
    %v3819 = vadd.f32 %v2507, %v3580
    %v3820 = vadd.f32 %v2583, %v3656
    %v3821 = vadd.f32 %v2659, %v3732
    %v3822 = vadd.f32 %v2735, %v3808
    %v3823 = vadd.f32 %v2510, %v3583
    %v3824 = vadd.f32 %v2586, %v3659
    %v3825 = vadd.f32 %v2662, %v3735
    %v3826 = vadd.f32 %v2738, %v3811
    %v3827 = vadd.f32 %v2512, %v3585
    %v3828 = vadd.f32 %v2588, %v3661
    %v3829 = vadd.f32 %v2664, %v3737
    %v3830 = vadd.f32 %v2740, %v3813
    %v3831 = vld [vmem:[#allocation10] sm:$0xf]
    %v3833 = vperm.slane %v3831, 0
    %v3834 = vperm.slane %v3831, 1
    %v3835 = vperm.slane %v3831, 2
    %v3836 = vperm.slane %v3831, 3
    %v3841 = vadd.f32 %v3815, %v3833
    %v3842 = vadd.f32 %v3816, %v3834
    %v3843 = vadd.f32 %v3817, %v3835
    %v3844 = vadd.f32 %v3818, %v3836
    %v3845 = vadd.f32 %v3819, %v3833
    %v3846 = vadd.f32 %v3820, %v3834
    %v3847 = vadd.f32 %v3821, %v3835
    %v3848 = vadd.f32 %v3822, %v3836
    %v3849 = vadd.f32 %v3823, %v3833
    %v3850 = vadd.f32 %v3824, %v3834
    %v3851 = vadd.f32 %v3825, %v3835
    %v3852 = vadd.f32 %v3826, %v3836
    %v3853 = vadd.f32 %v3827, %v3833
    %v3854 = vadd.f32 %v3828, %v3834
    %v3855 = vadd.f32 %v3829, %v3835
    %v3856 = vadd.f32 %v3830, %v3836
    %v3857 = vmax.f32 %v3841, 0.0
    %v3858 = vmax.f32 %v3842, 0.0
    %v3859 = vmax.f32 %v3843, 0.0
    %v3860 = vmax.f32 %v3844, 0.0
    %v3861 = vmax.f32 %v3845, 0.0
    %v3862 = vmax.f32 %v3846, 0.0
    %v3863 = vmax.f32 %v3847, 0.0
    %v3864 = vmax.f32 %v3848, 0.0
    %v3865 = vmax.f32 %v3849, 0.0
    %v3866 = vmax.f32 %v3850, 0.0
    %v3867 = vmax.f32 %v3851, 0.0
    %v3868 = vmax.f32 %v3852, 0.0
    %v3869 = vmax.f32 %v3853, 0.0
    %v3870 = vmax.f32 %v3854, 0.0
    %v3871 = vmax.f32 %v3855, 0.0
    %v3872 = vmax.f32 %v3856, 0.0
    %v3873 = vpack.c.bf16 %v3861, %v3857
    %v3874 = vpack.c.bf16 %v3862, %v3858
    %v3875 = vpack.c.bf16 %v3863, %v3859
    %v3876 = vpack.c.bf16 %v3864, %v3860
    %v3877 = vpack.c.bf16 %v3869, %v3865
    %v3878 = vpack.c.bf16 %v3870, %v3866
    %v3879 = vpack.c.bf16 %v3871, %v3867
    %v3880 = vpack.c.bf16 %v3872, %v3868
    %v3881 = vld [vmem:[#allocation11] sm:$0xf]
    %v3882 = vld [vmem:[#allocation11 + $0x4] sm:$0xf]
    %v3883 = vld [vmem:[#allocation11 + $0x8] sm:$0xf]
    %v3884 = vld [vmem:[#allocation11 + $0xc] sm:$0xf]
    %v3885 = vld [vmem:[#allocation11 + $0x10] sm:$0xf]
    %v3886 = vld [vmem:[#allocation11 + $0x14] sm:$0xf]
    %v3887 = vld [vmem:[#allocation11 + $0x18] sm:$0xf]
    %v3888 = vld [vmem:[#allocation11 + $0x1c] sm:$0xf]
    %v3889 = vld [vmem:[#allocation11 + $0x20] sm:$0xf]
    %v3890 = vld [vmem:[#allocation11 + $0x24] sm:$0xf]
    %v3891 = vld [vmem:[#allocation11 + $0x28] sm:$0xf]
    %v3892 = vld [vmem:[#allocation11 + $0x2c] sm:$0xf]
    %v3893 = vld [vmem:[#allocation11 + $0x30] sm:$0xf]
    %v3894 = vld [vmem:[#allocation11 + $0x34] sm:$0xf]
    %v3895 = vld [vmem:[#allocation11 + $0x38] sm:$0xf]
    %v3896 = vld [vmem:[#allocation11 + $0x3c] sm:$0xf]
    %v3897 = vld [vmem:[#allocation11 + $0x40] sm:$0xf]
    %v3898 = vld [vmem:[#allocation11 + $0x44] sm:$0xf]
    %v3899 = vld [vmem:[#allocation11 + $0x48] sm:$0xf]
    %v3900 = vld [vmem:[#allocation11 + $0x4c] sm:$0xf]
    %v3901 = vld [vmem:[#allocation11 + $0x50] sm:$0xf]
    %v3902 = vld [vmem:[#allocation11 + $0x54] sm:$0xf]
    %v3903 = vld [vmem:[#allocation11 + $0x58] sm:$0xf]
    %v3904 = vld [vmem:[#allocation11 + $0x5c] sm:$0xf]
    %v3905 = vld [vmem:[#allocation11 + $0x60] sm:$0xf]
    %v3906 = vld [vmem:[#allocation11 + $0x64] sm:$0xf]
    %v3907 = vld [vmem:[#allocation11 + $0x68] sm:$0xf]
    %v3908 = vld [vmem:[#allocation11 + $0x6c] sm:$0xf]
    %v3909 = vld [vmem:[#allocation11 + $0x70] sm:$0xf]
    %v3910 = vld [vmem:[#allocation11 + $0x74] sm:$0xf]
    %v3911 = vld [vmem:[#allocation11 + $0x78] sm:$0xf]
    %v3912 = vld [vmem:[#allocation11 + $0x7c] sm:$0xf]
    %v3913 = vld [vmem:[#allocation11 + $0x80] sm:$0xf]
    %v3914 = vld [vmem:[#allocation11 + $0x84] sm:$0xf]
    %v3915 = vld [vmem:[#allocation11 + $0x88] sm:$0xf]
    %v3916 = vld [vmem:[#allocation11 + $0x8c] sm:$0xf]
    %v3917 = vld [vmem:[#allocation11 + $0x90] sm:$0xf]
    %v3918 = vld [vmem:[#allocation11 + $0x94] sm:$0xf]
    %v3919 = vld [vmem:[#allocation11 + $0x98] sm:$0xf]
    %v3920 = vld [vmem:[#allocation11 + $0x9c] sm:$0xf]
    %v3921 = vld [vmem:[#allocation11 + $0xa0] sm:$0xf]
    %v3922 = vld [vmem:[#allocation11 + $0xa4] sm:$0xf]
    %v3923 = vld [vmem:[#allocation11 + $0xa8] sm:$0xf]
    %v3924 = vld [vmem:[#allocation11 + $0xac] sm:$0xf]
    %v3925 = vld [vmem:[#allocation11 + $0xb0] sm:$0xf]
    %v3926 = vld [vmem:[#allocation11 + $0xb4] sm:$0xf]
    %v3927 = vld [vmem:[#allocation11 + $0xb8] sm:$0xf]
    %v3928 = vld [vmem:[#allocation11 + $0xbc] sm:$0xf]
    %v3929 = vld [vmem:[#allocation11 + $0xc0] sm:$0xf]
    %v3930 = vld [vmem:[#allocation11 + $0xc4] sm:$0xf]
    %v3931 = vld [vmem:[#allocation11 + $0xc8] sm:$0xf]
    %v3932 = vld [vmem:[#allocation11 + $0xcc] sm:$0xf]
    %v3933 = vld [vmem:[#allocation11 + $0xd0] sm:$0xf]
    %v3934 = vld [vmem:[#allocation11 + $0xd4] sm:$0xf]
    %v3935 = vld [vmem:[#allocation11 + $0xd8] sm:$0xf]
    %v3936 = vld [vmem:[#allocation11 + $0xdc] sm:$0xf]
    %v3937 = vld [vmem:[#allocation11 + $0xe0] sm:$0xf]
    %v3938 = vld [vmem:[#allocation11 + $0xe4] sm:$0xf]
    %v3939 = vld [vmem:[#allocation11 + $0xe8] sm:$0xf]
    %v3940 = vld [vmem:[#allocation11 + $0xec] sm:$0xf]
    %v3941 = vld [vmem:[#allocation11 + $0xf0] sm:$0xf]
    %v3942 = vld [vmem:[#allocation11 + $0xf4] sm:$0xf]
    %v3943 = vld [vmem:[#allocation11 + $0xf8] sm:$0xf]
    %v3944 = vld [vmem:[#allocation11 + $0xfc] sm:$0xf]
    %v3945 = vld [vmem:[#allocation13] sm:$0x1]
    %v3947 = vperm.slane %v3945, 0
    %v4013 = vunpack.c.l.b16 %v3881
    %v4014 = vunpack.c.l.b16 %v3882
    %v4015 = vunpack.c.l.b16 %v3883
    %v4016 = vunpack.c.l.b16 %v3884
    %v4017 = vunpack.c.l.b16 %v3885
    %v4018 = vunpack.c.l.b16 %v3886
    %v4019 = vunpack.c.l.b16 %v3887
    %v4020 = vunpack.c.l.b16 %v3888
    %v4021 = vunpack.c.l.b16 %v3889
    %v4022 = vunpack.c.l.b16 %v3890
    %v4023 = vunpack.c.l.b16 %v3891
    %v4024 = vunpack.c.l.b16 %v3892
    %v4025 = vunpack.c.l.b16 %v3893
    %v4026 = vunpack.c.l.b16 %v3894
    %v4027 = vunpack.c.l.b16 %v3895
    %v4028 = vunpack.c.l.b16 %v3896
    %v4029 = vunpack.c.l.b16 %v3897
    %v4030 = vunpack.c.l.b16 %v3898
    %v4031 = vunpack.c.l.b16 %v3899
    %v4032 = vunpack.c.l.b16 %v3900
    %v4033 = vunpack.c.l.b16 %v3901
    %v4034 = vunpack.c.l.b16 %v3902
    %v4035 = vunpack.c.l.b16 %v3903
    %v4036 = vunpack.c.l.b16 %v3904
    %v4037 = vunpack.c.l.b16 %v3905
    %v4038 = vunpack.c.l.b16 %v3906
    %v4039 = vunpack.c.l.b16 %v3907
    %v4040 = vunpack.c.l.b16 %v3908
    %v4041 = vunpack.c.l.b16 %v3909
    %v4042 = vunpack.c.l.b16 %v3910
    %v4043 = vunpack.c.l.b16 %v3911
    %v4044 = vunpack.c.l.b16 %v3912
    %v4045 = vunpack.c.l.b16 %v3913
    %v4046 = vunpack.c.l.b16 %v3914
    %v4047 = vunpack.c.l.b16 %v3915
    %v4048 = vunpack.c.l.b16 %v3916
    %v4049 = vunpack.c.l.b16 %v3917
    %v4050 = vunpack.c.l.b16 %v3918
    %v4051 = vunpack.c.l.b16 %v3919
    %v4052 = vunpack.c.l.b16 %v3920
    %v4053 = vunpack.c.l.b16 %v3921
    %v4054 = vunpack.c.l.b16 %v3922
    %v4055 = vunpack.c.l.b16 %v3923
    %v4056 = vunpack.c.l.b16 %v3924
    %v4057 = vunpack.c.l.b16 %v3925
    %v4058 = vunpack.c.l.b16 %v3926
    %v4059 = vunpack.c.l.b16 %v3927
    %v4060 = vunpack.c.l.b16 %v3928
    %v4061 = vunpack.c.l.b16 %v3929
    %v4062 = vunpack.c.l.b16 %v3930
    %v4063 = vunpack.c.l.b16 %v3931
    %v4064 = vunpack.c.l.b16 %v3932
    %v4065 = vunpack.c.l.b16 %v3933
    %v4066 = vunpack.c.l.b16 %v3934
    %v4067 = vunpack.c.l.b16 %v3935
    %v4068 = vunpack.c.l.b16 %v3936
    %v4069 = vunpack.c.l.b16 %v3937
    %v4070 = vunpack.c.l.b16 %v3938
    %v4071 = vunpack.c.l.b16 %v3939
    %v4072 = vunpack.c.l.b16 %v3940
    %v4073 = vunpack.c.l.b16 %v3941
    %v4074 = vunpack.c.l.b16 %v3942
    %v4075 = vunpack.c.l.b16 %v3943
    %v4076 = vunpack.c.l.b16 %v3944
    %v4077 = vpack.c.b16 %v4014, %v4013
    %v4078 = vpack.c.b16 %v4016, %v4015
    %v4079 = vpack.c.b16 %v4018, %v4017
    %v4080 = vpack.c.b16 %v4020, %v4019
    %v4081 = vpack.c.b16 %v4022, %v4021
    %v4082 = vpack.c.b16 %v4024, %v4023
    %v4083 = vpack.c.b16 %v4026, %v4025
    %v4084 = vpack.c.b16 %v4028, %v4027
    %v4085 = vpack.c.b16 %v4030, %v4029
    %v4086 = vpack.c.b16 %v4032, %v4031
    %v4087 = vpack.c.b16 %v4034, %v4033
    %v4088 = vpack.c.b16 %v4036, %v4035
    %v4089 = vpack.c.b16 %v4038, %v4037
    %v4090 = vpack.c.b16 %v4040, %v4039
    %v4091 = vpack.c.b16 %v4042, %v4041
    %v4092 = vpack.c.b16 %v4044, %v4043
    %v4093 = vpack.c.b16 %v4046, %v4045
    %v4094 = vpack.c.b16 %v4048, %v4047
    %v4095 = vpack.c.b16 %v4050, %v4049
    %v4096 = vpack.c.b16 %v4052, %v4051
    %v4097 = vpack.c.b16 %v4054, %v4053
    %v4098 = vpack.c.b16 %v4056, %v4055
    %v4099 = vpack.c.b16 %v4058, %v4057
    %v4100 = vpack.c.b16 %v4060, %v4059
    %v4101 = vpack.c.b16 %v4062, %v4061
    %v4102 = vpack.c.b16 %v4064, %v4063
    %v4103 = vpack.c.b16 %v4066, %v4065
    %v4104 = vpack.c.b16 %v4068, %v4067
    %v4105 = vpack.c.b16 %v4070, %v4069
    %v4106 = vpack.c.b16 %v4072, %v4071
    %v4107 = vpack.c.b16 %v4074, %v4073
    %v4108 = vpack.c.b16 %v4076, %v4075
    %4141 = vmatpush.bf16.msra.mxu0 %v4084
    %4142 = vmatpush.bf16.msra.mxu0 %v4083
    %4143 = vmatpush.bf16.msra.mxu0 %v4082
    %4144 = vmatpush.bf16.msra.mxu0 %v4081
    %4145 = vmatpush.bf16.msra.mxu0 %v4080
    %4146 = vmatpush.bf16.msra.mxu0 %v4079
    %4147 = vmatpush.bf16.msra.mxu0 %v4078
    %4148 = vmatpush.bf16.msra.mxu0 %v4077
    %4149 = vmatmul.bf16.gmra.mxu0 %v3873
    %v4150 = vpop.f32.mrf.mxu0
    %v4151 = vadd.f32 %v3947, %v4150
    %v4152 = vpop.f32.mrf.mxu0
    %v4153 = vadd.f32 %v3947, %v4152
    %4154 = vmatmul.bf16.gmra.mxu0 %v3877
    %v4155 = vpop.f32.mrf.mxu0
    %v4156 = vadd.f32 %v3947, %v4155
    %v4157 = vpop.f32.mrf.mxu0
    %v4158 = vadd.f32 %v3947, %v4157
    %4159 = vdwg.mxu0
    %4160 = vmatpush.bf16.msra.mxu0 %v4092
    %4161 = vmatpush.bf16.msra.mxu0 %v4091
    %4162 = vmatpush.bf16.msra.mxu0 %v4090
    %4163 = vmatpush.bf16.msra.mxu0 %v4089
    %4164 = vmatpush.bf16.msra.mxu0 %v4088
    %4165 = vmatpush.bf16.msra.mxu0 %v4087
    %4166 = vmatpush.bf16.msra.mxu0 %v4086
    %4167 = vmatpush.bf16.msra.mxu0 %v4085
    %4168 = vmatmul.bf16.gmra.mxu0 %v3874
    %v4169 = vpop.f32.mrf.mxu0
    %v4170 = vadd.f32 %v4151, %v4169
    %v4171 = vpop.f32.mrf.mxu0
    %v4172 = vadd.f32 %v4153, %v4171
    %4173 = vmatmul.bf16.gmra.mxu0 %v3878
    %v4174 = vpop.f32.mrf.mxu0
    %v4175 = vadd.f32 %v4156, %v4174
    %v4176 = vpop.f32.mrf.mxu0
    %v4177 = vadd.f32 %v4158, %v4176
    %4178 = vdwg.mxu0
    %4179 = vmatpush.bf16.msra.mxu0 %v4100
    %4180 = vmatpush.bf16.msra.mxu0 %v4099
    %4181 = vmatpush.bf16.msra.mxu0 %v4098
    %4182 = vmatpush.bf16.msra.mxu0 %v4097
    %4183 = vmatpush.bf16.msra.mxu0 %v4096
    %4184 = vmatpush.bf16.msra.mxu0 %v4095
    %4185 = vmatpush.bf16.msra.mxu0 %v4094
    %4186 = vmatpush.bf16.msra.mxu0 %v4093
    %4187 = vmatmul.bf16.gmra.mxu0 %v3875
    %v4188 = vpop.f32.mrf.mxu0
    %v4189 = vadd.f32 %v4170, %v4188
    %v4190 = vpop.f32.mrf.mxu0
    %v4191 = vadd.f32 %v4172, %v4190
    %4192 = vmatmul.bf16.gmra.mxu0 %v3879
    %v4193 = vpop.f32.mrf.mxu0
    %v4194 = vadd.f32 %v4175, %v4193
    %v4195 = vpop.f32.mrf.mxu0
    %v4196 = vadd.f32 %v4177, %v4195
    %4197 = vdwg.mxu0
    %4198 = vmatpush.bf16.msra.mxu0 %v4108
    %4199 = vmatpush.bf16.msra.mxu0 %v4107
    %4200 = vmatpush.bf16.msra.mxu0 %v4106
    %4201 = vmatpush.bf16.msra.mxu0 %v4105
    %4202 = vmatpush.bf16.msra.mxu0 %v4104
    %4203 = vmatpush.bf16.msra.mxu0 %v4103
    %4204 = vmatpush.bf16.msra.mxu0 %v4102
    %4205 = vmatpush.bf16.msra.mxu0 %v4101
    %4206 = vmatmul.bf16.gmra.mxu0 %v3876
    %v4207 = vpop.f32.mrf.mxu0
    %v4208 = vadd.f32 %v4189, %v4207
    %v4209 = vpop.f32.mrf.mxu0
    %v4210 = vadd.f32 %v4191, %v4209
    %4211 = vmatmul.bf16.gmra.mxu0 %v3880
    %v4212 = vpop.f32.mrf.mxu0
    %v4213 = vadd.f32 %v4194, %v4212
    %v4214 = vpop.f32.mrf.mxu0
    %v4215 = vadd.f32 %v4196, %v4214
    %4216 = vdwg.mxu0
    %v4217 = vxor.u32 %v4208, 2147483648
    %v4218 = vxor.u32 %v4210, 2147483648
    %v4219 = vxor.u32 %v4213, 2147483648
    %v4220 = vxor.u32 %v4215, 2147483648
    %v4221 = vmul.f32 %v4217, 1.442695
    %v4222 = vpow.pop %v4221
    %v4223 = vmul.f32 %v4218, 1.442695
    %v4224 = vpow.pop %v4223
    %v4225 = vmul.f32 %v4219, 1.442695
    %v4226 = vpow.pop %v4225
    %v4227 = vmul.f32 %v4220, 1.442695
    %v4228 = vpow.pop %v4227
    %v4229 = vadd.f32 %v4222, 1.0
    %v4230 = vadd.f32 %v4224, 1.0
    %v4231 = vadd.f32 %v4226, 1.0
    %v4232 = vadd.f32 %v4228, 1.0
    %v4233 = vrcp.pop %v4229
    %v4234 = vmul.f32 %v4229, %v4233
    %v4235 = vsub.f32 1.0, %v4234
    %v4236 = vmul.f32 %v4233, %v4235
    %v4237 = vadd.f32 %v4233, %v4236
    %vm4238 = vweird.f32 %v4229
    %vm4239 = vweird.f32 %v4233
    %vm4240 = vmor %vm4238, %vm4239
    %v4241 = vsel %vm4240, %v4233, %v4237
    %v4242 = vand.u32 2147483647, %v4229
    %vm4243 = vcmp.eq.f32.partialorder %v4242, 8.507059e+37
    %v4244 = vand.u32 %v4229, 2147483648
    %v4245 = vor.u32 1.1754944e-38, %v4244
    %v4246 = vsel %vm4243, %v4245, %v4241
    %v4247 = vmul.f32 1.0, %v4246
    %v4248 = vrcp.pop %v4230
    %v4249 = vmul.f32 %v4230, %v4248
    %v4250 = vsub.f32 1.0, %v4249
    %v4251 = vmul.f32 %v4248, %v4250
    %v4252 = vadd.f32 %v4248, %v4251
    %vm4253 = vweird.f32 %v4230
    %vm4254 = vweird.f32 %v4248
    %vm4255 = vmor %vm4253, %vm4254
    %v4256 = vsel %vm4255, %v4248, %v4252
    %v4257 = vand.u32 2147483647, %v4230
    %vm4258 = vcmp.eq.f32.partialorder %v4257, 8.507059e+37
    %v4259 = vand.u32 %v4230, 2147483648
    %v4260 = vor.u32 1.1754944e-38, %v4259
    %v4261 = vsel %vm4258, %v4260, %v4256
    %v4262 = vmul.f32 1.0, %v4261
    %v4263 = vrcp.pop %v4231
    %v4264 = vmul.f32 %v4231, %v4263
    %v4265 = vsub.f32 1.0, %v4264
    %v4266 = vmul.f32 %v4263, %v4265
    %v4267 = vadd.f32 %v4263, %v4266
    %vm4268 = vweird.f32 %v4231
    %vm4269 = vweird.f32 %v4263
    %vm4270 = vmor %vm4268, %vm4269
    %v4271 = vsel %vm4270, %v4263, %v4267
    %v4272 = vand.u32 2147483647, %v4231
    %vm4273 = vcmp.eq.f32.partialorder %v4272, 8.507059e+37
    %v4274 = vand.u32 %v4231, 2147483648
    %v4275 = vor.u32 1.1754944e-38, %v4274
    %v4276 = vsel %vm4273, %v4275, %v4271
    %v4277 = vmul.f32 1.0, %v4276
    %v4278 = vrcp.pop %v4232
    %v4279 = vmul.f32 %v4232, %v4278
    %v4280 = vsub.f32 1.0, %v4279
    %v4281 = vmul.f32 %v4278, %v4280
    %v4282 = vadd.f32 %v4278, %v4281
    %vm4283 = vweird.f32 %v4232
    %vm4284 = vweird.f32 %v4278
    %vm4285 = vmor %vm4283, %vm4284
    %v4286 = vsel %vm4285, %v4278, %v4282
    %v4287 = vand.u32 2147483647, %v4232
    %vm4288 = vcmp.eq.f32.partialorder %v4287, 8.507059e+37
    %v4289 = vand.u32 %v4232, 2147483648
    %v4290 = vor.u32 1.1754944e-38, %v4289
    %v4291 = vsel %vm4288, %v4290, %v4286
    %v4292 = vmul.f32 1.0, %v4291
    %v4293 = vpack.c.bf16 %v4247, %v4247
    %v4294 = vpack.c.bf16 %v4262, %v4262
    %v4295 = vpack.c.bf16 %v4277, %v4277
    %v4296 = vpack.c.bf16 %v4292, %v4292
    %4297 = vst [vmem:[#allocation14] sm:$0xf] %v4293
    %4298 = vst [vmem:[#allocation14 + $0x4] sm:$0xf] %v4294
    %4299 = vst [vmem:[#allocation14 + $0x8] sm:$0xf] %v4295
    %4300 = vst [vmem:[#allocation14 + $0xc] sm:$0xf] %v4296
    // Predicated region
    $region58: #{tpu_custom_call.1} parent=1 // pred_check
      _
    $region59: #{tpu_custom_call.1} parent=1 // pred_check_branch
      %4302 = sbr.rel (0) target = $region61
    $region60: #{tpu_custom_call.1} parent=1 // pred_region
      %4304 = vsyncadd [#allocation4], 0
      %s4305 = sshll.u32 [#allocation14], 4
      %s4306 = int_to_ptr.vmem [resolvable:$true] %s4305
      %s4307 = sshll.u32 %s7, 4
      %s4308 = int_to_ptr.hbm [resolvable:$true] %s4307
      %4313 = dma.vmem_to_hbm [thread:$0]  %s4306, 256, %s4308, [#allocation4], 64, 64, 4
    $region61: #{tpu_custom_call.1} parent=1 // pred_fallthru
      _
    // Predicated region
    $region62: #{tpu_custom_call.1} parent=1 // pred_check
      _
    $region63: #{tpu_custom_call.1} parent=1 // pred_check_branch
      %4315 = sbr.rel (0) target = $region65
    $region64: #{tpu_custom_call.1} parent=1 // pred_region
      %4317 = dma.done [#allocation4], 256
    $region65: #{tpu_custom_call.1} parent=1 // pred_fallthru
      _
    %4318 = vsyncpa [#allocation3], 1
    %4319 = vsyncpa [#allocation6], 1
    %4320 = vsyncpa [#allocation9], 1
    %4321 = vsyncpa [#allocation12], 1
    %4322 = vsyncpa [#allocation4], 1

</llo_original>
